<compile_context>
chip_gen: v7x
topology: tpu7x:2x2x1
jax: 0.10.0
libtpu: 0.0.40
codegen_flags: <defaults>
</compile_context>

<pallas_src>
import functools
import math

import jax
import jax.numpy as jnp
import numpy as np
from jax.experimental import pallas as pl
from jax.experimental.pallas import tpu as pltpu

_C = 16  # channel count fixed by the module (16 -> 16 -> 16 -> 16)

# (kernel, stride_h, pad_h, pad_w); stride_w == 1 for every conv.
_STAGES = (
    dict(k=3, sh=2, ph=2, pw=1),
    dict(k=5, sh=2, ph=1, pw=2),
    dict(k=7, sh=1, ph=0, pw=0),
)


def _round_up(x, m):
    return (x + m - 1) // m * m


def _plan(h, w):
    """Static geometry for the fused kernel.

    Buffer column j of stage-i activation holds true column j - ms[i]; columns
    outside that range are zero and double as the W zero-padding of the next
    conv.  Margins grow (ms[i+1] = ms[i] + k_i - 1 - pw_i) so taps read input
    buffer columns j-(k-1)..j and the kw recombination only needs +1 shifts.
    """
    ks = [s["k"] for s in _STAGES]
    shs = [s["sh"] for s in _STAGES]
    phs = [s["ph"] for s in _STAGES]
    pws = [s["pw"] for s in _STAGES]

    th, tw = [h], [w]
    for k, sh, ph, pw in zip(ks, shs, phs, pws):
        th.append((th[-1] + 2 * ph - k) // sh + 1)
        tw.append(tw[-1] + 2 * pw - k + 1)
    assert all(v > 0 for v in th + tw), "input too small for this conv stack"

    # Smallest initial left margin so every stage's left-side reads stay >= 0.
    m0, pref = 0, 0
    for k, pw in zip(ks, pws):
        m0 = max(m0, pw - pref)
        pref += k - 1 - pw
    ms = [m0]
    for k, pw in zip(ks, pws):
        ms.append(ms[-1] + k - 1 - pw)

    ww = _round_up(max(m + t for m, t in zip(ms, tw)), 8)
    return dict(th=th, tw=tw, ms=ms, ww=ww)


# ------------------------------ kernel --------------------------------------
def _shift_down_1(v):
    """out[i] = v[i-1] along axis 0 (flattened rows), out[0] = 0."""
    zero = jnp.zeros((1, v.shape[1]), v.dtype)
    return jnp.concatenate([zero, v[:-1, :]], axis=0)


def _combine_kw(z, k, b_row):
    """Fold the kw groups of the matmul result back onto the W axis.

    y[m] = sum_kw z[m - (k-1-kw), kw-group] + b  (zeros shifted in at the top;
    the only cross-row mixing lands in margin columns that are masked/cropped).
    """
    acc = z[:, 0:_C]
    for kw in range(1, k):
        acc = _shift_down_1(acc) + z[:, kw * _C:(kw + 1) * _C]
    return acc + b_row


def _patch(taps):
    """kh-only im2col: list of (rows, WW, C) slabs -> (rows*WW, k*C)."""
    rows, ww, c = taps[0].shape
    return jnp.concatenate([t.reshape(rows * ww, c) for t in taps], axis=1)


def _fused_kernel(x_ref, w1_ref, b1_ref, w2_ref, b2_ref, w3_ref, b3_ref,
                  mask_ref, o_ref, *, plan):
    h1, h2, h3 = plan["th"][1], plan["th"][2], plan["th"][3]
    ww = plan["ww"]

    # ---- stage 1: 3x3, stride (2,1), pad (2,1) ------------------------------
    # x_ref[0] = H/W pre-padded input split by row parity:
    #   plane p, row t  ==  padded input row 2t + p.
    taps = [x_ref[0, kh % 2, kh // 2: kh // 2 + h1] for kh in range(3)]
    z1 = jnp.dot(_patch(taps), w1_ref[...], preferred_element_type=jnp.float32)
    y1 = _combine_kw(z1, 3, b1_ref[...])
    a1 = jax.nn.sigmoid(y1).reshape(h1, ww, _C) * mask_ref[0]

    # ---- stage 2: 5x5, stride (2,1), pad (1,2) ------------------------------
    # Parity planes of the H-padded a1 (pad_h = 1):
    #   even plane E[j] = a1_pad[2j]   = [0, a1[1], a1[3], ...]
    #   odd  plane O[j] = a1_pad[2j+1] = [a1[0], a1[2], ...]
    if h1 % 2:
        a1 = jnp.concatenate([a1, jnp.zeros((1, ww, _C), a1.dtype)], axis=0)
    g = a1.reshape(-1, 2, ww, _C)
    plane_o = g[:, 0]                                             # a1 rows 0,2,...
    plane_e = jnp.concatenate(
        [jnp.zeros((1, ww, _C), a1.dtype), g[:, 1]], axis=0)      # 0, a1 rows 1,3,...
    taps = []
    for kh in range(5):
        src = plane_e if kh % 2 == 0 else plane_o
        taps.append(jax.lax.slice_in_dim(src, kh // 2, kh // 2 + h2, axis=0))
    z2 = jnp.dot(_patch(taps), w2_ref[...], preferred_element_type=jnp.float32)
    y2 = _combine_kw(z2, 5, b2_ref[...])
    a2 = jax.nn.sigmoid(y2).reshape(h2, ww, _C) * mask_ref[1]

    # ---- stage 3: 7x7, stride (1,1), no pad ---------------------------------
    taps = [jax.lax.slice_in_dim(a2, kh, kh + h3, axis=0) for kh in range(7)]
    z3 = jnp.dot(_patch(taps), w3_ref[...], preferred_element_type=jnp.float32)
    y3 = _combine_kw(z3, 7, b3_ref[...])                          # (h3*WW, 16)

    o_ref[0] = y3.astype(o_ref.dtype)


# ------------------------------ wrapper --------------------------------------
def model_forward(x_nchw, params):
    """NCHW -> NCHW forward pass of the PyTorch Model as one fused Pallas kernel."""
    n, cin, h, w = x_nchw.shape
    assert cin == _C
    plan = _plan(h, w)
    th, tw, ms, ww = plan["th"], plan["tw"], plan["ms"], plan["ww"]
    h3 = th[3]
    ph0 = _STAGES[0]["ph"]
    dtype = x_nchw.dtype

    # NCHW -> NHWC; one cheap wrapper-side pad: ms[0] zero cols left + fill to
    # WW, ph0 zero rows top/bottom (+1 row to an even height).  All other
    # padding is handled in-kernel via margins / masks.
    x = jnp.transpose(x_nchw, (0, 2, 3, 1))
    x = jnp.pad(x, ((0, 0), (0, 0), (ms[0], ww - w - ms[0]), (0, 0)))
    hp = h + 2 * ph0
    hpe = hp + (hp % 2)
    x = jnp.pad(x, ((0, 0), (ph0, hpe - h - ph0), (0, 0), (0, 0)))
    # Split by row parity so conv1's stride-2 row taps are contiguous slices.
    x4 = x.reshape(n, hpe // 2, 2, ww, _C).transpose(0, 2, 1, 3, 4)
    pe = hpe // 2

    # HWIO weights -> (kh*Cin, kw*Cout) matmul operands (kh in K, kw in N).
    def wmat(name):
        wgt = params[name]
        k = wgt.shape[0]
        return jnp.transpose(wgt, (0, 2, 1, 3)).reshape(k * _C, k * _C)

    w1m, w2m, w3m = wmat("w1"), wmat("w2"), wmat("w3")
    b1r = params["b1"].reshape(1, _C)
    b2r = params["b2"].reshape(1, _C)
    b3r = params["b3"].reshape(1, _C)

    # Column-validity masks for the two sigmoid activations (their zero
    # columns double as the W zero-padding of conv2 / conv3).
    masks_np = np.zeros((2, ww, _C), np.float32)
    masks_np[0, ms[1]:ms[1] + tw[1], :] = 1.0
    masks_np[1, ms[2]:ms[2] + tw[2], :] = 1.0
    masks = jnp.asarray(masks_np)

    out_flat = pl.pallas_call(
        functools.partial(_fused_kernel, plan=plan),
        out_shape=jax.ShapeDtypeStruct((n, h3 * ww, _C), dtype),
        grid=(n,),
        in_specs=[
            pl.BlockSpec((1, 2, pe, ww, _C), lambda i: (i, 0, 0, 0, 0)),
            pl.BlockSpec(w1m.shape, lambda i: (0, 0)),
            pl.BlockSpec((1, _C), lambda i: (0, 0)),
            pl.BlockSpec(w2m.shape, lambda i: (0, 0)),
            pl.BlockSpec((1, _C), lambda i: (0, 0)),
            pl.BlockSpec(w3m.shape, lambda i: (0, 0)),
            pl.BlockSpec((1, _C), lambda i: (0, 0)),
            pl.BlockSpec((2, ww, _C), lambda i: (0, 0, 0)),
        ],
        out_specs=pl.BlockSpec((1, h3 * ww, _C), lambda i: (i, 0, 0)),
        compiler_params=pltpu.CompilerParams(
            dimension_semantics=("parallel",)),
    )(x4, w1m, b1r, w2m, b2r, w3m, b3r, masks)

    # (N, h3*WW, C) -> crop working width -> NCHW.
    out = out_flat.reshape(n, h3, ww, _C)[:, :, ms[3]:ms[3] + tw[3], :]
    return jnp.transpose(out, (0, 3, 1, 2))


# ---------------- reference (pure JAX) for the correctness check -------------
def _conv_ref(x_nhwc, w_hwio, b, stride, padding):
    y = jax.lax.conv_general_dilated(
        x_nhwc, w_hwio, window_strides=stride,
        padding=[(padding[0], padding[0]), (padding[1], padding[1])],
        dimension_numbers=("NHWC", "HWIO", "NHWC"),
        precision=jax.lax.Precision.HIGHEST)
    return y + b


def model_ref(x_nchw, params):
    x = jnp.transpose(x_nchw, (0, 2, 3, 1))
    x = jax.nn.sigmoid(_conv_ref(x, params["w1"], params["b1"], (2, 1), (2, 1)))
    x = jax.nn.sigmoid(_conv_ref(x, params["w2"], params["b2"], (2, 1), (1, 2)))
    x = _conv_ref(x, params["w3"], params["b3"], (1, 1), (0, 0))
    return jnp.transpose(x, (0, 3, 1, 2))


def init_params(key):
    def one(kw_key, kb_key, k):
        fan_in = _C * k * k
        bound = 1.0 / math.sqrt(fan_in)
        wgt = jax.random.uniform(kw_key, (k, k, _C, _C), jnp.float32, -bound, bound)
        b = jax.random.uniform(kb_key, (_C,), jnp.float32, -bound, bound)
        return wgt, b

    keys = jax.random.split(key, 6)
    w1, b1 = one(keys[0], keys[1], 3)
    w2, b2 = one(keys[2], keys[3], 5)
    w3, b3 = one(keys[4], keys[5], 7)
    return {"w1": w1, "b1": b1, "w2": w2, "b2": b2, "w3": w3, "b3": b3}


if __name__ == "__main__":
    key = jax.random.PRNGKey(0)
    pkey, k1, k2 = jax.random.split(key, 3)
    params = init_params(pkey)

    fwd = jax.jit(model_forward)

    # Small-shape analogues of the original (53, 16, 50, 66) NCHW input; the
    # two shapes exercise both row-parity / odd-height paths of the kernel.
    for xkey, shape in ((k1, (2, 16, 32, 24)), (k2, (2, 16, 33, 27))):
        x = jax.random.normal(xkey, shape, jnp.float32)
        out = jax.block_until_ready(fwd(x, params))
        ref = jax.block_until_ready(model_ref(x, params))
        assert out.shape == ref.shape, (out.shape, ref.shape)
        assert jnp.allclose(out, ref, atol=5e-3, rtol=5e-3), (
            float(jnp.max(jnp.abs(out - ref))))

    print("KERNEL_OK")
</pallas_src>

<mosaic_0001>
module attributes {stable_mosaic.version = 11 : i64} {
  func.func @_fused_kernel(%arg0: i32, %arg1: memref<1x2x18x32x16xf32, #tpu.memory_space<vmem>>, %arg2: memref<48x48xf32, #tpu.memory_space<vmem>>, %arg3: memref<1x16xf32, #tpu.memory_space<vmem>>, %arg4: memref<80x80xf32, #tpu.memory_space<vmem>>, %arg5: memref<1x16xf32, #tpu.memory_space<vmem>>, %arg6: memref<112x112xf32, #tpu.memory_space<vmem>>, %arg7: memref<1x16xf32, #tpu.memory_space<vmem>>, %arg8: memref<2x32x16xf32, #tpu.memory_space<vmem>>, %arg9: memref<1x64x16xf32, #tpu.memory_space<vmem>>) attributes {dimension_semantics = [#tpu.dimension_semantics<parallel>], iteration_bounds = array<i64: 2>, scalar_prefetch = 0 : i64, scratch_operands = 0 : i64, tpu.core_type = #tpu.core_type<tc>, window_params = [{transform_indices = @transform_0, window_bounds = array<i64: 1, 2, 18, 32, 16>}, {pipeline_mode = #tpu.pipeline_mode<synchronous>, transform_indices = @transform_1, window_bounds = array<i64: 48, 48>}, {pipeline_mode = #tpu.pipeline_mode<synchronous>, transform_indices = @transform_2, window_bounds = array<i64: 1, 16>}, {pipeline_mode = #tpu.pipeline_mode<synchronous>, transform_indices = @transform_3, window_bounds = array<i64: 80, 80>}, {pipeline_mode = #tpu.pipeline_mode<synchronous>, transform_indices = @transform_4, window_bounds = array<i64: 1, 16>}, {pipeline_mode = #tpu.pipeline_mode<synchronous>, transform_indices = @transform_5, window_bounds = array<i64: 112, 112>}, {pipeline_mode = #tpu.pipeline_mode<synchronous>, transform_indices = @transform_6, window_bounds = array<i64: 1, 16>}, {pipeline_mode = #tpu.pipeline_mode<synchronous>, transform_indices = @transform_7, window_bounds = array<i64: 2, 32, 16>}, {transform_indices = @transform_8, window_bounds = array<i64: 1, 64, 16>}]} {
    %c0 = arith.constant 0 : index
    %c0_0 = arith.constant 0 : index
    %c0_1 = arith.constant 0 : index
    %c0_2 = arith.constant 0 : index
    %c0_3 = arith.constant 0 : index
    %0 = vector.load %arg1[%c0, %c0_0, %c0_1, %c0_2, %c0_3] : memref<1x2x18x32x16xf32, #tpu.memory_space<vmem>>, vector<1x1x17x32x16xf32>
    %1 = vector.shape_cast %0 : vector<1x1x17x32x16xf32> to vector<17x32x16xf32>
    %c0_4 = arith.constant 0 : index
    %c1 = arith.constant 1 : index
    %c0_5 = arith.constant 0 : index
    %c0_6 = arith.constant 0 : index
    %c0_7 = arith.constant 0 : index
    %2 = vector.load %arg1[%c0_4, %c1, %c0_5, %c0_6, %c0_7] : memref<1x2x18x32x16xf32, #tpu.memory_space<vmem>>, vector<1x1x17x32x16xf32>
    %3 = vector.shape_cast %2 : vector<1x1x17x32x16xf32> to vector<17x32x16xf32>
    %c0_8 = arith.constant 0 : index
    %c0_9 = arith.constant 0 : index
    %c1_10 = arith.constant 1 : index
    %c0_11 = arith.constant 0 : index
    %c0_12 = arith.constant 0 : index
    %4 = vector.load %arg1[%c0_8, %c0_9, %c1_10, %c0_11, %c0_12] : memref<1x2x18x32x16xf32, #tpu.memory_space<vmem>>, vector<1x1x17x32x16xf32>
    %5 = vector.shape_cast %4 : vector<1x1x17x32x16xf32> to vector<17x32x16xf32>
    %6 = vector.shape_cast %1 : vector<17x32x16xf32> to vector<544x16xf32>
    %7 = vector.shape_cast %3 : vector<17x32x16xf32> to vector<544x16xf32>
    %8 = vector.shape_cast %5 : vector<17x32x16xf32> to vector<544x16xf32>
    %9 = tpu.concatenate %6, %7, %8 in 1 : vector<544x16xf32>, vector<544x16xf32>, vector<544x16xf32> -> vector<544x48xf32>
    %c0_13 = arith.constant 0 : index
    %c0_14 = arith.constant 0 : index
    %10 = vector.load %arg2[%c0_13, %c0_14] : memref<48x48xf32, #tpu.memory_space<vmem>>, vector<48x48xf32>
    %cst = arith.constant dense<0.000000e+00> : vector<544x48xf32>
    %11 = tpu.matmul %9, %10, %cst {dimension_numbers = #tpu.dot_dimension_numbers<[1], [0], [0], [1], [0, 0, 1, 1], [], []>} : vector<544x48xf32>, vector<48x48xf32>, vector<544x48xf32> -> vector<544x48xf32>
    %c0_15 = arith.constant 0 : index
    %c0_16 = arith.constant 0 : index
    %12 = vector.load %arg3[%c0_15, %c0_16] : memref<1x16xf32, #tpu.memory_space<vmem>>, vector<1x16xf32>
    %13 = vector.extract_strided_slice %11 {offsets = [0, 0], sizes = [544, 16], strides = [1, 1]} : vector<544x48xf32> to vector<544x16xf32>
    %cst_17 = arith.constant 0.000000e+00 : f32
    %14 = vector.broadcast %cst_17 : f32 to vector<1x16xf32>
    %15 = vector.extract_strided_slice %13 {offsets = [0, 0], sizes = [543, 16], strides = [1, 1]} : vector<544x16xf32> to vector<543x16xf32>
    %16 = tpu.concatenate %14, %15 in 0 : vector<1x16xf32>, vector<543x16xf32> -> vector<544x16xf32>
    %17 = vector.extract_strided_slice %11 {offsets = [0, 16], sizes = [544, 16], strides = [1, 1]} : vector<544x48xf32> to vector<544x16xf32>
    %18 = arith.addf %16, %17 : vector<544x16xf32>
    %cst_18 = arith.constant 0.000000e+00 : f32
    %19 = vector.broadcast %cst_18 : f32 to vector<1x16xf32>
    %20 = vector.extract_strided_slice %18 {offsets = [0, 0], sizes = [543, 16], strides = [1, 1]} : vector<544x16xf32> to vector<543x16xf32>
    %21 = tpu.concatenate %19, %20 in 0 : vector<1x16xf32>, vector<543x16xf32> -> vector<544x16xf32>
    %22 = vector.extract_strided_slice %11 {offsets = [0, 32], sizes = [544, 16], strides = [1, 1]} : vector<544x48xf32> to vector<544x16xf32>
    %23 = arith.addf %21, %22 : vector<544x16xf32>
    %24 = vector.broadcast %12 : vector<1x16xf32> to vector<544x16xf32>
    %25 = arith.addf %23, %24 : vector<544x16xf32>
    %26 = arith.negf %25 : vector<544x16xf32>
    %27 = math.exp %26 : vector<544x16xf32>
    %cst_19 = arith.constant 1.000000e+00 : f32
    %28 = vector.broadcast %cst_19 : f32 to vector<544x16xf32>
    %29 = arith.addf %28, %27 : vector<544x16xf32>
    %30 = arith.divf %28, %29 : vector<544x16xf32>
    %31 = vector.shape_cast %30 : vector<544x16xf32> to vector<17x32x16xf32>
    %c0_20 = arith.constant 0 : index
    %c0_21 = arith.constant 0 : index
    %c0_22 = arith.constant 0 : index
    %32 = vector.load %arg8[%c0_20, %c0_21, %c0_22] : memref<2x32x16xf32, #tpu.memory_space<vmem>>, vector<1x32x16xf32>
    %33 = vector.shape_cast %32 : vector<1x32x16xf32> to vector<32x16xf32>
    %34 = vector.shape_cast %33 : vector<32x16xf32> to vector<1x32x16xf32>
    %35 = vector.broadcast %34 : vector<1x32x16xf32> to vector<17x32x16xf32>
    %36 = arith.mulf %31, %35 : vector<17x32x16xf32>
    %cst_23 = arith.constant 0.000000e+00 : f32
    %37 = vector.broadcast %cst_23 : f32 to vector<1x32x16xf32>
    %38 = tpu.concatenate %36, %37 in 0 : vector<17x32x16xf32>, vector<1x32x16xf32> -> vector<18x32x16xf32>
    %39 = vector.shape_cast %38 : vector<18x32x16xf32> to vector<9x2x32x16xf32>
    %40 = vector.extract_strided_slice %39 {offsets = [0, 0, 0, 0], sizes = [9, 1, 32, 16], strides = [1, 1, 1, 1]} : vector<9x2x32x16xf32> to vector<9x1x32x16xf32>
    %41 = vector.shape_cast %40 : vector<9x1x32x16xf32> to vector<9x32x16xf32>
    %cst_24 = arith.constant 0.000000e+00 : f32
    %42 = vector.broadcast %cst_24 : f32 to vector<1x32x16xf32>
    %43 = vector.extract_strided_slice %39 {offsets = [0, 1, 0, 0], sizes = [9, 1, 32, 16], strides = [1, 1, 1, 1]} : vector<9x2x32x16xf32> to vector<9x1x32x16xf32>
    %44 = vector.shape_cast %43 : vector<9x1x32x16xf32> to vector<9x32x16xf32>
    %45 = tpu.concatenate %42, %44 in 0 : vector<1x32x16xf32>, vector<9x32x16xf32> -> vector<10x32x16xf32>
    %46 = vector.extract_strided_slice %45 {offsets = [0, 0, 0], sizes = [8, 32, 16], strides = [1, 1, 1]} : vector<10x32x16xf32> to vector<8x32x16xf32>
    %47 = vector.extract_strided_slice %41 {offsets = [0, 0, 0], sizes = [8, 32, 16], strides = [1, 1, 1]} : vector<9x32x16xf32> to vector<8x32x16xf32>
    %48 = vector.extract_strided_slice %45 {offsets = [1, 0, 0], sizes = [8, 32, 16], strides = [1, 1, 1]} : vector<10x32x16xf32> to vector<8x32x16xf32>
    %49 = vector.extract_strided_slice %41 {offsets = [1, 0, 0], sizes = [8, 32, 16], strides = [1, 1, 1]} : vector<9x32x16xf32> to vector<8x32x16xf32>
    %50 = vector.extract_strided_slice %45 {offsets = [2, 0, 0], sizes = [8, 32, 16], strides = [1, 1, 1]} : vector<10x32x16xf32> to vector<8x32x16xf32>
    %51 = vector.shape_cast %46 : vector<8x32x16xf32> to vector<256x16xf32>
    %52 = vector.shape_cast %47 : vector<8x32x16xf32> to vector<256x16xf32>
    %53 = vector.shape_cast %48 : vector<8x32x16xf32> to vector<256x16xf32>
    %54 = vector.shape_cast %49 : vector<8x32x16xf32> to vector<256x16xf32>
    %55 = vector.shape_cast %50 : vector<8x32x16xf32> to vector<256x16xf32>
    %56 = tpu.concatenate %51, %52, %53, %54, %55 in 1 : vector<256x16xf32>, vector<256x16xf32>, vector<256x16xf32>, vector<256x16xf32>, vector<256x16xf32> -> vector<256x80xf32>
    %c0_25 = arith.constant 0 : index
    %c0_26 = arith.constant 0 : index
    %57 = vector.load %arg4[%c0_25, %c0_26] : memref<80x80xf32, #tpu.memory_space<vmem>>, vector<80x80xf32>
    %cst_27 = arith.constant dense<0.000000e+00> : vector<256x80xf32>
    %58 = tpu.matmul %56, %57, %cst_27 {dimension_numbers = #tpu.dot_dimension_numbers<[1], [0], [0], [1], [0, 0, 1, 1], [], []>} : vector<256x80xf32>, vector<80x80xf32>, vector<256x80xf32> -> vector<256x80xf32>
    %c0_28 = arith.constant 0 : index
    %c0_29 = arith.constant 0 : index
    %59 = vector.load %arg5[%c0_28, %c0_29] : memref<1x16xf32, #tpu.memory_space<vmem>>, vector<1x16xf32>
    %60 = vector.extract_strided_slice %58 {offsets = [0, 0], sizes = [256, 16], strides = [1, 1]} : vector<256x80xf32> to vector<256x16xf32>
    %cst_30 = arith.constant 0.000000e+00 : f32
    %61 = vector.broadcast %cst_30 : f32 to vector<1x16xf32>
    %62 = vector.extract_strided_slice %60 {offsets = [0, 0], sizes = [255, 16], strides = [1, 1]} : vector<256x16xf32> to vector<255x16xf32>
    %63 = tpu.concatenate %61, %62 in 0 : vector<1x16xf32>, vector<255x16xf32> -> vector<256x16xf32>
    %64 = vector.extract_strided_slice %58 {offsets = [0, 16], sizes = [256, 16], strides = [1, 1]} : vector<256x80xf32> to vector<256x16xf32>
    %65 = arith.addf %63, %64 : vector<256x16xf32>
    %cst_31 = arith.constant 0.000000e+00 : f32
    %66 = vector.broadcast %cst_31 : f32 to vector<1x16xf32>
    %67 = vector.extract_strided_slice %65 {offsets = [0, 0], sizes = [255, 16], strides = [1, 1]} : vector<256x16xf32> to vector<255x16xf32>
    %68 = tpu.concatenate %66, %67 in 0 : vector<1x16xf32>, vector<255x16xf32> -> vector<256x16xf32>
    %69 = vector.extract_strided_slice %58 {offsets = [0, 32], sizes = [256, 16], strides = [1, 1]} : vector<256x80xf32> to vector<256x16xf32>
    %70 = arith.addf %68, %69 : vector<256x16xf32>
    %cst_32 = arith.constant 0.000000e+00 : f32
    %71 = vector.broadcast %cst_32 : f32 to vector<1x16xf32>
    %72 = vector.extract_strided_slice %70 {offsets = [0, 0], sizes = [255, 16], strides = [1, 1]} : vector<256x16xf32> to vector<255x16xf32>
    %73 = tpu.concatenate %71, %72 in 0 : vector<1x16xf32>, vector<255x16xf32> -> vector<256x16xf32>
    %74 = vector.extract_strided_slice %58 {offsets = [0, 48], sizes = [256, 16], strides = [1, 1]} : vector<256x80xf32> to vector<256x16xf32>
    %75 = arith.addf %73, %74 : vector<256x16xf32>
    %cst_33 = arith.constant 0.000000e+00 : f32
    %76 = vector.broadcast %cst_33 : f32 to vector<1x16xf32>
    %77 = vector.extract_strided_slice %75 {offsets = [0, 0], sizes = [255, 16], strides = [1, 1]} : vector<256x16xf32> to vector<255x16xf32>
    %78 = tpu.concatenate %76, %77 in 0 : vector<1x16xf32>, vector<255x16xf32> -> vector<256x16xf32>
    %79 = vector.extract_strided_slice %58 {offsets = [0, 64], sizes = [256, 16], strides = [1, 1]} : vector<256x80xf32> to vector<256x16xf32>
    %80 = arith.addf %78, %79 : vector<256x16xf32>
    %81 = vector.broadcast %59 : vector<1x16xf32> to vector<256x16xf32>
    %82 = arith.addf %80, %81 : vector<256x16xf32>
    %83 = arith.negf %82 : vector<256x16xf32>
    %84 = math.exp %83 : vector<256x16xf32>
    %cst_34 = arith.constant 1.000000e+00 : f32
    %85 = vector.broadcast %cst_34 : f32 to vector<256x16xf32>
    %86 = arith.addf %85, %84 : vector<256x16xf32>
    %87 = arith.divf %85, %86 : vector<256x16xf32>
    %88 = vector.shape_cast %87 : vector<256x16xf32> to vector<8x32x16xf32>
    %c1_35 = arith.constant 1 : index
    %c0_36 = arith.constant 0 : index
    %c0_37 = arith.constant 0 : index
    %89 = vector.load %arg8[%c1_35, %c0_36, %c0_37] : memref<2x32x16xf32, #tpu.memory_space<vmem>>, vector<1x32x16xf32>
    %90 = vector.shape_cast %89 : vector<1x32x16xf32> to vector<32x16xf32>
    %91 = vector.shape_cast %90 : vector<32x16xf32> to vector<1x32x16xf32>
    %92 = vector.broadcast %91 : vector<1x32x16xf32> to vector<8x32x16xf32>
    %93 = arith.mulf %88, %92 : vector<8x32x16xf32>
    %94 = vector.extract_strided_slice %93 {offsets = [0, 0, 0], sizes = [2, 32, 16], strides = [1, 1, 1]} : vector<8x32x16xf32> to vector<2x32x16xf32>
    %95 = vector.extract_strided_slice %93 {offsets = [1, 0, 0], sizes = [2, 32, 16], strides = [1, 1, 1]} : vector<8x32x16xf32> to vector<2x32x16xf32>
    %96 = vector.extract_strided_slice %93 {offsets = [2, 0, 0], sizes = [2, 32, 16], strides = [1, 1, 1]} : vector<8x32x16xf32> to vector<2x32x16xf32>
    %97 = vector.extract_strided_slice %93 {offsets = [3, 0, 0], sizes = [2, 32, 16], strides = [1, 1, 1]} : vector<8x32x16xf32> to vector<2x32x16xf32>
    %98 = vector.extract_strided_slice %93 {offsets = [4, 0, 0], sizes = [2, 32, 16], strides = [1, 1, 1]} : vector<8x32x16xf32> to vector<2x32x16xf32>
    %99 = vector.extract_strided_slice %93 {offsets = [5, 0, 0], sizes = [2, 32, 16], strides = [1, 1, 1]} : vector<8x32x16xf32> to vector<2x32x16xf32>
    %100 = vector.extract_strided_slice %93 {offsets = [6, 0, 0], sizes = [2, 32, 16], strides = [1, 1, 1]} : vector<8x32x16xf32> to vector<2x32x16xf32>
    %101 = vector.shape_cast %94 : vector<2x32x16xf32> to vector<64x16xf32>
    %102 = vector.shape_cast %95 : vector<2x32x16xf32> to vector<64x16xf32>
    %103 = vector.shape_cast %96 : vector<2x32x16xf32> to vector<64x16xf32>
    %104 = vector.shape_cast %97 : vector<2x32x16xf32> to vector<64x16xf32>
    %105 = vector.shape_cast %98 : vector<2x32x16xf32> to vector<64x16xf32>
    %106 = vector.shape_cast %99 : vector<2x32x16xf32> to vector<64x16xf32>
    %107 = vector.shape_cast %100 : vector<2x32x16xf32> to vector<64x16xf32>
    %108 = tpu.concatenate %101, %102, %103, %104, %105, %106, %107 in 1 : vector<64x16xf32>, vector<64x16xf32>, vector<64x16xf32>, vector<64x16xf32>, vector<64x16xf32>, vector<64x16xf32>, vector<64x16xf32> -> vector<64x112xf32>
    %c0_38 = arith.constant 0 : index
    %c0_39 = arith.constant 0 : index
    %109 = vector.load %arg6[%c0_38, %c0_39] : memref<112x112xf32, #tpu.memory_space<vmem>>, vector<112x112xf32>
    %cst_40 = arith.constant dense<0.000000e+00> : vector<64x112xf32>
    %110 = tpu.matmul %108, %109, %cst_40 {dimension_numbers = #tpu.dot_dimension_numbers<[1], [0], [0], [1], [0, 0, 1, 1], [], []>} : vector<64x112xf32>, vector<112x112xf32>, vector<64x112xf32> -> vector<64x112xf32>
    %c0_41 = arith.constant 0 : index
    %c0_42 = arith.constant 0 : index
    %111 = vector.load %arg7[%c0_41, %c0_42] : memref<1x16xf32, #tpu.memory_space<vmem>>, vector<1x16xf32>
    %112 = vector.extract_strided_slice %110 {offsets = [0, 0], sizes = [64, 16], strides = [1, 1]} : vector<64x112xf32> to vector<64x16xf32>
    %cst_43 = arith.constant 0.000000e+00 : f32
    %113 = vector.broadcast %cst_43 : f32 to vector<1x16xf32>
    %114 = vector.extract_strided_slice %112 {offsets = [0, 0], sizes = [63, 16], strides = [1, 1]} : vector<64x16xf32> to vector<63x16xf32>
    %115 = tpu.concatenate %113, %114 in 0 : vector<1x16xf32>, vector<63x16xf32> -> vector<64x16xf32>
    %116 = vector.extract_strided_slice %110 {offsets = [0, 16], sizes = [64, 16], strides = [1, 1]} : vector<64x112xf32> to vector<64x16xf32>
    %117 = arith.addf %115, %116 : vector<64x16xf32>
    %cst_44 = arith.constant 0.000000e+00 : f32
    %118 = vector.broadcast %cst_44 : f32 to vector<1x16xf32>
    %119 = vector.extract_strided_slice %117 {offsets = [0, 0], sizes = [63, 16], strides = [1, 1]} : vector<64x16xf32> to vector<63x16xf32>
    %120 = tpu.concatenate %118, %119 in 0 : vector<1x16xf32>, vector<63x16xf32> -> vector<64x16xf32>
    %121 = vector.extract_strided_slice %110 {offsets = [0, 32], sizes = [64, 16], strides = [1, 1]} : vector<64x112xf32> to vector<64x16xf32>
    %122 = arith.addf %120, %121 : vector<64x16xf32>
    %cst_45 = arith.constant 0.000000e+00 : f32
    %123 = vector.broadcast %cst_45 : f32 to vector<1x16xf32>
    %124 = vector.extract_strided_slice %122 {offsets = [0, 0], sizes = [63, 16], strides = [1, 1]} : vector<64x16xf32> to vector<63x16xf32>
    %125 = tpu.concatenate %123, %124 in 0 : vector<1x16xf32>, vector<63x16xf32> -> vector<64x16xf32>
    %126 = vector.extract_strided_slice %110 {offsets = [0, 48], sizes = [64, 16], strides = [1, 1]} : vector<64x112xf32> to vector<64x16xf32>
    %127 = arith.addf %125, %126 : vector<64x16xf32>
    %cst_46 = arith.constant 0.000000e+00 : f32
    %128 = vector.broadcast %cst_46 : f32 to vector<1x16xf32>
    %129 = vector.extract_strided_slice %127 {offsets = [0, 0], sizes = [63, 16], strides = [1, 1]} : vector<64x16xf32> to vector<63x16xf32>
    %130 = tpu.concatenate %128, %129 in 0 : vector<1x16xf32>, vector<63x16xf32> -> vector<64x16xf32>
    %131 = vector.extract_strided_slice %110 {offsets = [0, 64], sizes = [64, 16], strides = [1, 1]} : vector<64x112xf32> to vector<64x16xf32>
    %132 = arith.addf %130, %131 : vector<64x16xf32>
    %cst_47 = arith.constant 0.000000e+00 : f32
    %133 = vector.broadcast %cst_47 : f32 to vector<1x16xf32>
    %134 = vector.extract_strided_slice %132 {offsets = [0, 0], sizes = [63, 16], strides = [1, 1]} : vector<64x16xf32> to vector<63x16xf32>
    %135 = tpu.concatenate %133, %134 in 0 : vector<1x16xf32>, vector<63x16xf32> -> vector<64x16xf32>
    %136 = vector.extract_strided_slice %110 {offsets = [0, 80], sizes = [64, 16], strides = [1, 1]} : vector<64x112xf32> to vector<64x16xf32>
    %137 = arith.addf %135, %136 : vector<64x16xf32>
    %cst_48 = arith.constant 0.000000e+00 : f32
    %138 = vector.broadcast %cst_48 : f32 to vector<1x16xf32>
    %139 = vector.extract_strided_slice %137 {offsets = [0, 0], sizes = [63, 16], strides = [1, 1]} : vector<64x16xf32> to vector<63x16xf32>
    %140 = tpu.concatenate %138, %139 in 0 : vector<1x16xf32>, vector<63x16xf32> -> vector<64x16xf32>
    %141 = vector.extract_strided_slice %110 {offsets = [0, 96], sizes = [64, 16], strides = [1, 1]} : vector<64x112xf32> to vector<64x16xf32>
    %142 = arith.addf %140, %141 : vector<64x16xf32>
    %143 = vector.broadcast %111 : vector<1x16xf32> to vector<64x16xf32>
    %144 = arith.addf %142, %143 : vector<64x16xf32>
    %c0_49 = arith.constant 0 : index
    %c0_50 = arith.constant 0 : index
    %c0_51 = arith.constant 0 : index
    %145 = vector.load %arg9[%c0_49, %c0_50, %c0_51] : memref<1x64x16xf32, #tpu.memory_space<vmem>>, vector<1x64x16xf32>
    %146 = vector.shape_cast %145 : vector<1x64x16xf32> to vector<64x16xf32>
    %147 = vector.shape_cast %144 : vector<64x16xf32> to vector<1x64x16xf32>
    tpu.vector_store %arg9[%c0_49, %c0_50, %c0_51], %147 {strides = array<i32>} : memref<1x64x16xf32, #tpu.memory_space<vmem>>, vector<1x64x16xf32>,
    return
  }
  func.func @transform_0(%arg0: i32) -> (i32, i32, i32, i32, i32) {
    %c0_i32 = arith.constant 0 : i32
    %c0_i32_0 = arith.constant 0 : i32
    %c0_i32_1 = arith.constant 0 : i32
    %c0_i32_2 = arith.constant 0 : i32
    %c0_i32_3 = arith.constant 0 : i32
    return %arg0, %c0_i32, %c0_i32_0, %c0_i32_1, %c0_i32_2 : i32, i32, i32, i32, i32
  }
  func.func @transform_1(%arg0: i32) -> (i32, i32) {
    %c0_i32 = arith.constant 0 : i32
    %c0_i32_0 = arith.constant 0 : i32
    %c0_i32_1 = arith.constant 0 : i32
    return %c0_i32, %c0_i32_0 : i32, i32
  }
  func.func @transform_2(%arg0: i32) -> (i32, i32) {
    %c0_i32 = arith.constant 0 : i32
    %c0_i32_0 = arith.constant 0 : i32
    %c0_i32_1 = arith.constant 0 : i32
    return %c0_i32, %c0_i32_0 : i32, i32
  }
  func.func @transform_3(%arg0: i32) -> (i32, i32) {
    %c0_i32 = arith.constant 0 : i32
    %c0_i32_0 = arith.constant 0 : i32
    %c0_i32_1 = arith.constant 0 : i32
    return %c0_i32, %c0_i32_0 : i32, i32
  }
  func.func @transform_4(%arg0: i32) -> (i32, i32) {
    %c0_i32 = arith.constant 0 : i32
    %c0_i32_0 = arith.constant 0 : i32
    %c0_i32_1 = arith.constant 0 : i32
    return %c0_i32, %c0_i32_0 : i32, i32
  }
  func.func @transform_5(%arg0: i32) -> (i32, i32) {
    %c0_i32 = arith.constant 0 : i32
    %c0_i32_0 = arith.constant 0 : i32
    %c0_i32_1 = arith.constant 0 : i32
    return %c0_i32, %c0_i32_0 : i32, i32
  }
  func.func @transform_6(%arg0: i32) -> (i32, i32) {
    %c0_i32 = arith.constant 0 : i32
    %c0_i32_0 = arith.constant 0 : i32
    %c0_i32_1 = arith.constant 0 : i32
    return %c0_i32, %c0_i32_0 : i32, i32
  }
  func.func @transform_7(%arg0: i32) -> (i32, i32, i32) {
    %c0_i32 = arith.constant 0 : i32
    %c0_i32_0 = arith.constant 0 : i32
    %c0_i32_1 = arith.constant 0 : i32
    %c0_i32_2 = arith.constant 0 : i32
    return %c0_i32, %c0_i32_0, %c0_i32_1 : i32, i32, i32
  }
  func.func @transform_8(%arg0: i32) -> (i32, i32, i32) {
    %c0_i32 = arith.constant 0 : i32
    %c0_i32_0 = arith.constant 0 : i32
    %c0_i32_1 = arith.constant 0 : i32
    return %arg0, %c0_i32, %c0_i32_0 : i32, i32, i32
  }
}

</mosaic_0001>

<llo_original>
// kernel: model_forward.1
$region0: #{model_forward.1}
  #allocation0 [shape = 'u32[]', space=smem, size = 0x4, offset = 0x4, fixed_abs, tag = 'smem constant byte address 0x4 - core index']
  #allocation1 [shape = 'u32[144,128]{1,0:T(1,128)}', space=vmem, size = 0x12000, scoped, tag = 'internal scratch']
  %s0 = inlined_call_operand.vmem [shape: f32[2,2,18,32,16], index: 0, kind: input, shape index: {}]
  %s1 = inlined_call_operand.vmem [shape: f32[48,48], index: 1, kind: input, shape index: {}]
  %s2 = inlined_call_operand.vmem [shape: f32[1,16], index: 2, kind: input, shape index: {}]
  %s3 = inlined_call_operand.vmem [shape: f32[80,80], index: 3, kind: input, shape index: {}]
  %s4 = inlined_call_operand.vmem [shape: f32[1,16], index: 4, kind: input, shape index: {}]
  %s5 = inlined_call_operand.vmem [shape: f32[112,112], index: 5, kind: input, shape index: {}]
  %s6 = inlined_call_operand.vmem [shape: f32[1,16], index: 6, kind: input, shape index: {}]
  %s7 = inlined_call_operand.vmem [shape: f32[2,32,16], index: 7, kind: input, shape index: {}]
  %s8 = inlined_call_operand.vmem [shape: f32[2,64,16], index: 8, kind: output, shape index: {}]
  %s9 = sld [smem:[#allocation0]]
  $region65: #{model_forward.1} parent=0
    _
  %s11 = ssub.s32 1, %s9
  %s12 = scalar_select 0, %s11, %s9
  loop: start=0, step=1, limit=4
  $region2: #{model_forward.1} parent=0 // loop_pre_header
    _
  $region3: #{model_forward.1} parent=0 // loop_header
    %s14 = sphi 0, %s18
    %p15 = scmp.ge.s32.totalorder %s14, 4
    %s24 = sphi 0, %s26
    %s27 = sphi 0, %s24
    %s28 = sphi 0, %s27
    %s44 = sphi 0, %s28
    %s48 = sphi 0, %s48
    %s50 = sphi 0, %s48
    %s51 = sphi 0, %s50
    %s65 = sphi 0, %s51
    %s69 = sphi 0, %s69
    %s71 = sphi 0, %s69
    %s72 = sphi 0, %s71
    %s86 = sphi 0, %s72
    %s90 = sphi 0, %s90
    %s92 = sphi 0, %s90
    %s93 = sphi 0, %s92
    %s107 = sphi 0, %s93
    %s111 = sphi 0, %s111
    %s113 = sphi 0, %s111
    %s114 = sphi 0, %s113
    %s128 = sphi 0, %s114
    %s132 = sphi 0, %s132
    %s134 = sphi 0, %s132
    %s135 = sphi 0, %s134
    %s149 = sphi 0, %s135
    %s153 = sphi 0, %s153
    %s155 = sphi 0, %s153
    %s156 = sphi 0, %s155
    %s170 = sphi 0, %s156
    %s174 = sphi 0, %s174
    %s176 = sphi 0, %s174
    %s177 = sphi 0, %s176
    %s191 = sphi 0, %s177
    %s197 = sphi 0, %s199
    %s200 = sphi 0, %s197
    %s201 = sphi 0, %s200
    %s217 = sphi 0, %s201
  $region4: #{model_forward.1} parent=0 // loop_header_branch
    %17 = sbr.rel (%p15) target = $region8
  $region5: #{model_forward.1} parent=0 // loop_body
    %s19 = ssub.s32 %s14, 1
    %s20 = ssub.s32 %s14, 2
    %s21 = sadd.s32 %s14, 1
    %s22 = ssub.s32 %s14, %s21
    %p23 = scmp.eq.s32.totalorder %s22, 0
    %s25 = sadd.s32 %s24, 1
    %s26 = scalar_select %p23, %s24, %s25
    %p29 = pneg %p23
    %p30 = scmp.eq.s32.totalorder %s14, 1
    %p31 = por %p29, %p30
    %p32 = scmp.ne.s32.totalorder %s24, %s27
    %p33 = scmp.eq.s32.totalorder %s14, 0
    %p34 = por %p32, %p33
    %p35 = scmp.ne.s32.totalorder %s24, %s27
    %p36 = scmp.eq.s32.totalorder %s19, 1
    %p37 = por %p35, %p36
    %p38 = scmp.ne.s32.totalorder %s27, %s28
    %p39 = scmp.eq.s32.totalorder %s19, 0
    %p40 = por %p38, %p39
    %p41 = scmp.ne.s32.totalorder %s27, %s28
    %p42 = scmp.eq.s32.totalorder %s20, 1
    %p43 = por %p41, %p42
    %p45 = scmp.ne.s32.totalorder %s28, %s44
    %p46 = scmp.eq.s32.totalorder %s20, 0
    %p47 = por %p45, %p46
    %s49 = sadd.s32 %s48, 1
    %p52 = scmp.eq.s32.totalorder %s14, 1
    %p53 = scmp.ne.s32.totalorder %s48, %s50
    %p54 = scmp.eq.s32.totalorder %s14, 0
    %p55 = por %p53, %p54
    %p56 = scmp.ne.s32.totalorder %s48, %s50
    %p57 = scmp.eq.s32.totalorder %s19, 1
    %p58 = por %p56, %p57
    %p59 = scmp.ne.s32.totalorder %s50, %s51
    %p60 = scmp.eq.s32.totalorder %s19, 0
    %p61 = por %p59, %p60
    %p62 = scmp.ne.s32.totalorder %s50, %s51
    %p63 = scmp.eq.s32.totalorder %s20, 1
    %p64 = por %p62, %p63
    %p66 = scmp.ne.s32.totalorder %s51, %s65
    %p67 = scmp.eq.s32.totalorder %s20, 0
    %p68 = por %p66, %p67
    %s70 = sadd.s32 %s69, 1
    %p73 = scmp.eq.s32.totalorder %s14, 1
    %p74 = scmp.ne.s32.totalorder %s69, %s71
    %p75 = scmp.eq.s32.totalorder %s14, 0
    %p76 = por %p74, %p75
    %p77 = scmp.ne.s32.totalorder %s69, %s71
    %p78 = scmp.eq.s32.totalorder %s19, 1
    %p79 = por %p77, %p78
    %p80 = scmp.ne.s32.totalorder %s71, %s72
    %p81 = scmp.eq.s32.totalorder %s19, 0
    %p82 = por %p80, %p81
    %p83 = scmp.ne.s32.totalorder %s71, %s72
    %p84 = scmp.eq.s32.totalorder %s20, 1
    %p85 = por %p83, %p84
    %p87 = scmp.ne.s32.totalorder %s72, %s86
    %p88 = scmp.eq.s32.totalorder %s20, 0
    %p89 = por %p87, %p88
    %s91 = sadd.s32 %s90, 1
    %p94 = scmp.eq.s32.totalorder %s14, 1
    %p95 = scmp.ne.s32.totalorder %s90, %s92
    %p96 = scmp.eq.s32.totalorder %s14, 0
    %p97 = por %p95, %p96
    %p98 = scmp.ne.s32.totalorder %s90, %s92
    %p99 = scmp.eq.s32.totalorder %s19, 1
    %p100 = por %p98, %p99
    %p101 = scmp.ne.s32.totalorder %s92, %s93
    %p102 = scmp.eq.s32.totalorder %s19, 0
    %p103 = por %p101, %p102
    %p104 = scmp.ne.s32.totalorder %s92, %s93
    %p105 = scmp.eq.s32.totalorder %s20, 1
    %p106 = por %p104, %p105
    %p108 = scmp.ne.s32.totalorder %s93, %s107
    %p109 = scmp.eq.s32.totalorder %s20, 0
    %p110 = por %p108, %p109
    %s112 = sadd.s32 %s111, 1
    %p115 = scmp.eq.s32.totalorder %s14, 1
    %p116 = scmp.ne.s32.totalorder %s111, %s113
    %p117 = scmp.eq.s32.totalorder %s14, 0
    %p118 = por %p116, %p117
    %p119 = scmp.ne.s32.totalorder %s111, %s113
    %p120 = scmp.eq.s32.totalorder %s19, 1
    %p121 = por %p119, %p120
    %p122 = scmp.ne.s32.totalorder %s113, %s114
    %p123 = scmp.eq.s32.totalorder %s19, 0
    %p124 = por %p122, %p123
    %p125 = scmp.ne.s32.totalorder %s113, %s114
    %p126 = scmp.eq.s32.totalorder %s20, 1
    %p127 = por %p125, %p126
    %p129 = scmp.ne.s32.totalorder %s114, %s128
    %p130 = scmp.eq.s32.totalorder %s20, 0
    %p131 = por %p129, %p130
    %s133 = sadd.s32 %s132, 1
    %p136 = scmp.eq.s32.totalorder %s14, 1
    %p137 = scmp.ne.s32.totalorder %s132, %s134
    %p138 = scmp.eq.s32.totalorder %s14, 0
    %p139 = por %p137, %p138
    %p140 = scmp.ne.s32.totalorder %s132, %s134
    %p141 = scmp.eq.s32.totalorder %s19, 1
    %p142 = por %p140, %p141
    %p143 = scmp.ne.s32.totalorder %s134, %s135
    %p144 = scmp.eq.s32.totalorder %s19, 0
    %p145 = por %p143, %p144
    %p146 = scmp.ne.s32.totalorder %s134, %s135
    %p147 = scmp.eq.s32.totalorder %s20, 1
    %p148 = por %p146, %p147
    %p150 = scmp.ne.s32.totalorder %s135, %s149
    %p151 = scmp.eq.s32.totalorder %s20, 0
    %p152 = por %p150, %p151
    %s154 = sadd.s32 %s153, 1
    %p157 = scmp.eq.s32.totalorder %s14, 1
    %p158 = scmp.ne.s32.totalorder %s153, %s155
    %p159 = scmp.eq.s32.totalorder %s14, 0
    %p160 = por %p158, %p159
    %p161 = scmp.ne.s32.totalorder %s153, %s155
    %p162 = scmp.eq.s32.totalorder %s19, 1
    %p163 = por %p161, %p162
    %p164 = scmp.ne.s32.totalorder %s155, %s156
    %p165 = scmp.eq.s32.totalorder %s19, 0
    %p166 = por %p164, %p165
    %p167 = scmp.ne.s32.totalorder %s155, %s156
    %p168 = scmp.eq.s32.totalorder %s20, 1
    %p169 = por %p167, %p168
    %p171 = scmp.ne.s32.totalorder %s156, %s170
    %p172 = scmp.eq.s32.totalorder %s20, 0
    %p173 = por %p171, %p172
    %s175 = sadd.s32 %s174, 1
    %p178 = scmp.eq.s32.totalorder %s14, 1
    %p179 = scmp.ne.s32.totalorder %s174, %s176
    %p180 = scmp.eq.s32.totalorder %s14, 0
    %p181 = por %p179, %p180
    %p182 = scmp.ne.s32.totalorder %s174, %s176
    %p183 = scmp.eq.s32.totalorder %s19, 1
    %p184 = por %p182, %p183
    %p185 = scmp.ne.s32.totalorder %s176, %s177
    %p186 = scmp.eq.s32.totalorder %s19, 0
    %p187 = por %p185, %p186
    %p188 = scmp.ne.s32.totalorder %s176, %s177
    %p189 = scmp.eq.s32.totalorder %s20, 1
    %p190 = por %p188, %p189
    %p192 = scmp.ne.s32.totalorder %s177, %s191
    %p193 = scmp.eq.s32.totalorder %s20, 0
    %p194 = por %p192, %p193
    %s195 = ssub.s32 %s14, %s21
    %p196 = scmp.eq.s32.totalorder %s195, 0
    %s198 = sadd.s32 %s197, 1
    %s199 = scalar_select %p196, %s197, %s198
    %p202 = pneg %p196
    %p203 = scmp.eq.s32.totalorder %s14, 1
    %p204 = por %p202, %p203
    %p205 = scmp.ne.s32.totalorder %s197, %s200
    %p206 = scmp.eq.s32.totalorder %s14, 0
    %p207 = por %p205, %p206
    %p208 = scmp.ne.s32.totalorder %s197, %s200
    %p209 = scmp.eq.s32.totalorder %s19, 1
    %p210 = por %p208, %p209
    %p211 = scmp.ne.s32.totalorder %s200, %s201
    %p212 = scmp.eq.s32.totalorder %s19, 0
    %p213 = por %p211, %p212
    %p214 = scmp.ne.s32.totalorder %s200, %s201
    %p215 = scmp.eq.s32.totalorder %s20, 1
    %p216 = por %p214, %p215
    %p218 = scmp.ne.s32.totalorder %s201, %s217
    %p219 = scmp.eq.s32.totalorder %s20, 0
    %p220 = por %p218, %p219
    %p221 = scmp.le.s32.totalorder 1, %s14
    %p222 = scmp.lt.s32.totalorder %s14, 3
    %p223 = pnand %p221, %p222
    %p224 = pneg %p223
    // Predicated region
    $region9: #{model_forward.1} parent=5 // pred_check
      _
    $region10: #{model_forward.1} parent=5 // pred_check_branch
      %226 = sbr.rel (%p223) target = $region12
    $region11: #{model_forward.1} parent=5 // pred_region
      %s227 = ssub.s32 %s14, 1
      // Predicated region
      $region13: #{model_forward.1} parent=11 // pred_check
        %p228 = pneg %p61
      $region14: #{model_forward.1} parent=11 // pred_check_branch
        %230 = sbr.rel (%p228) target = $region16
      $region15: #{model_forward.1} parent=11 // pred_region
        _
      $region16: #{model_forward.1} parent=11 // pred_fallthru
        _
      // Predicated region
      $region17: #{model_forward.1} parent=11 // pred_check
        %p231 = pneg %p82
      $region18: #{model_forward.1} parent=11 // pred_check_branch
        %233 = sbr.rel (%p231) target = $region20
      $region19: #{model_forward.1} parent=11 // pred_region
        _
      $region20: #{model_forward.1} parent=11 // pred_fallthru
        _
      // Predicated region
      $region21: #{model_forward.1} parent=11 // pred_check
        %p234 = pneg %p103
      $region22: #{model_forward.1} parent=11 // pred_check_branch
        %236 = sbr.rel (%p234) target = $region24
      $region23: #{model_forward.1} parent=11 // pred_region
        _
      $region24: #{model_forward.1} parent=11 // pred_fallthru
        _
      // Predicated region
      $region25: #{model_forward.1} parent=11 // pred_check
        %p237 = pneg %p124
      $region26: #{model_forward.1} parent=11 // pred_check_branch
        %239 = sbr.rel (%p237) target = $region28
      $region27: #{model_forward.1} parent=11 // pred_region
        _
      $region28: #{model_forward.1} parent=11 // pred_fallthru
        _
      // Predicated region
      $region29: #{model_forward.1} parent=11 // pred_check
        %p240 = pneg %p145
      $region30: #{model_forward.1} parent=11 // pred_check_branch
        %242 = sbr.rel (%p240) target = $region32
      $region31: #{model_forward.1} parent=11 // pred_region
        _
      $region32: #{model_forward.1} parent=11 // pred_fallthru
        _
      // Predicated region
      $region33: #{model_forward.1} parent=11 // pred_check
        %p243 = pneg %p166
      $region34: #{model_forward.1} parent=11 // pred_check_branch
        %245 = sbr.rel (%p243) target = $region36
      $region35: #{model_forward.1} parent=11 // pred_region
        _
      $region36: #{model_forward.1} parent=11 // pred_fallthru
        _
      // Predicated region
      $region37: #{model_forward.1} parent=11 // pred_check
        %p246 = pneg %p187
      $region38: #{model_forward.1} parent=11 // pred_check_branch
        %248 = sbr.rel (%p246) target = $region40
      $region39: #{model_forward.1} parent=11 // pred_region
        _
      $region40: #{model_forward.1} parent=11 // pred_fallthru
        _
    $region12: #{model_forward.1} parent=5 // pred_fallthru
      _
    %p249 = scmp.lt.s32.totalorder %s14, 2
    // Predicated region
    $region41: #{model_forward.1} parent=5 // pred_check
      %p250 = pneg %p249
    $region42: #{model_forward.1} parent=5 // pred_check_branch
      %252 = sbr.rel (%p250) target = $region44
    $region43: #{model_forward.1} parent=5 // pred_region
      // Predicated region
      $region45: #{model_forward.1} parent=43 // pred_check
        %p253 = pneg %p34
      $region46: #{model_forward.1} parent=43 // pred_check_branch
        %255 = sbr.rel (%p253) target = $region48
      $region47: #{model_forward.1} parent=43 // pred_region
        %p256 = scmp.lt.s32.totalorder %s14, 1
        %s257 = scalar_select %p256, %s14, 1
        %s258 = smul.addr %s257, 144
        %s259 = smul.addr %s258, 8
        %s260 = scalar_lea.vmem %s0, %s259
      $region48: #{model_forward.1} parent=43 // pred_fallthru
        _
    $region44: #{model_forward.1} parent=5 // pred_fallthru
      _
    %p261 = scmp.le.s32.totalorder 1, %s14
    %p262 = scmp.lt.s32.totalorder %s14, 3
    %p263 = pnand %p261, %p262
    %p264 = pneg %p263
    // Predicated region
    $region49: #{model_forward.1} parent=5 // pred_check
      _
    $region50: #{model_forward.1} parent=5 // pred_check_branch
      %266 = sbr.rel (%p263) target = $region52
    $region51: #{model_forward.1} parent=5 // pred_region
      %s267 = ssub.s32 %s14, 1
      %p268 = scmp.lt.s32.totalorder %s19, 1
      %s269 = scalar_select %p268, %s19, 1
      %s270 = smul.addr %s269, 144
      %s271 = smul.addr %s270, 8
      %s272 = scalar_lea.vmem %s0, %s271
      %p273 = pneg %p40
      %p274 = pneg %p37
      %p275 = pneg %p61
      %p276 = pneg %p58
      %p277 = pneg %p82
      %p278 = pneg %p79
      %p279 = pneg %p103
      %p280 = pneg %p100
      %p281 = pneg %p124
      %p282 = pneg %p121
      %p283 = pneg %p145
      %p284 = pneg %p142
      %p285 = pneg %p166
      %p286 = pneg %p163
      %p287 = pneg %p187
      %p288 = pneg %p184
      %p289 = pneg %p213
      %p290 = pneg %p210
      %p291 = scmp.lt.s32.totalorder %s19, 1
      %s292 = scalar_select %p291, %s19, 1
      %s293 = smul.addr %s292, 8
      %s294 = smul.addr %s293, 8
      %s295 = scalar_lea.vmem %s8, %s294
      %p296 = scmp.lt.s32.totalorder %s19, 1
      %s297 = scalar_select %p296, %s19, 1
      %s298 = smul.addr %s297, 144
      %s299 = smul.addr %s298, 8
      %s300 = scalar_lea.vmem %s0, %s299
      %p301 = scmp.lt.s32.totalorder %s19, 1
      %s302 = scalar_select %p301, %s19, 1
      %s303 = smul.addr %s302, 8
      %s304 = smul.addr %s303, 8
      %s305 = scalar_lea.vmem %s8, %s304
      %v306 = vld [vmem:[%s300] sm:$0xff]
      %v307 = vld [vmem:[%s300 + $0x8] sm:$0xff]
      %v308 = vld [vmem:[%s300 + $0x10] sm:$0xff]
      %v309 = vld [vmem:[%s300 + $0x18] sm:$0xff]
      %v310 = vld [vmem:[%s300 + $0x20] sm:$0xff]
      %v311 = vld [vmem:[%s300 + $0x28] sm:$0xff]
      %v312 = vld [vmem:[%s300 + $0x30] sm:$0xff]
      %v313 = vld [vmem:[%s300 + $0x38] sm:$0xff]
      %v314 = vld [vmem:[%s300 + $0x40] sm:$0xff]
      %v315 = vld [vmem:[%s300 + $0x48] sm:$0xff]
      %v316 = vld [vmem:[%s300 + $0x50] sm:$0xff]
      %v317 = vld [vmem:[%s300 + $0x58] sm:$0xff]
      %v318 = vld [vmem:[%s300 + $0x60] sm:$0xff]
      %v319 = vld [vmem:[%s300 + $0x68] sm:$0xff]
      %v320 = vld [vmem:[%s300 + $0x70] sm:$0xff]
      %v321 = vld [vmem:[%s300 + $0x78] sm:$0xff]
      %v322 = vld [vmem:[%s300 + $0x80] sm:$0xff]
      %v323 = vld [vmem:[%s300 + $0x88] sm:$0xff]
      %v324 = vld [vmem:[%s300 + $0x90] sm:$0xff]
      %v325 = vld [vmem:[%s300 + $0x98] sm:$0xff]
      %v326 = vld [vmem:[%s300 + $0xa0] sm:$0xff]
      %v327 = vld [vmem:[%s300 + $0xa8] sm:$0xff]
      %v328 = vld [vmem:[%s300 + $0xb0] sm:$0xff]
      %v329 = vld [vmem:[%s300 + $0xb8] sm:$0xff]
      %v330 = vld [vmem:[%s300 + $0xc0] sm:$0xff]
      %v331 = vld [vmem:[%s300 + $0xc8] sm:$0xff]
      %v332 = vld [vmem:[%s300 + $0xd0] sm:$0xff]
      %v333 = vld [vmem:[%s300 + $0xd8] sm:$0xff]
      %v334 = vld [vmem:[%s300 + $0xe0] sm:$0xff]
      %v335 = vld [vmem:[%s300 + $0xe8] sm:$0xff]
      %v336 = vld [vmem:[%s300 + $0xf0] sm:$0xff]
      %v337 = vld [vmem:[%s300 + $0xf8] sm:$0xff]
      %v338 = vld [vmem:[%s300 + $0x100] sm:$0xff]
      %v339 = vld [vmem:[%s300 + $0x108] sm:$0xff]
      %v340 = vld [vmem:[%s300 + $0x110] sm:$0xff]
      %v341 = vld [vmem:[%s300 + $0x118] sm:$0xff]
      %v342 = vld [vmem:[%s300 + $0x120] sm:$0xff]
      %v343 = vld [vmem:[%s300 + $0x128] sm:$0xff]
      %v344 = vld [vmem:[%s300 + $0x130] sm:$0xff]
      %v345 = vld [vmem:[%s300 + $0x138] sm:$0xff]
      %v346 = vld [vmem:[%s300 + $0x140] sm:$0xff]
      %v347 = vld [vmem:[%s300 + $0x148] sm:$0xff]
      %v348 = vld [vmem:[%s300 + $0x150] sm:$0xff]
      %v349 = vld [vmem:[%s300 + $0x158] sm:$0xff]
      %v350 = vld [vmem:[%s300 + $0x160] sm:$0xff]
      %v351 = vld [vmem:[%s300 + $0x168] sm:$0xff]
      %v352 = vld [vmem:[%s300 + $0x170] sm:$0xff]
      %v353 = vld [vmem:[%s300 + $0x178] sm:$0xff]
      %v354 = vld [vmem:[%s300 + $0x180] sm:$0xff]
      %v355 = vld [vmem:[%s300 + $0x188] sm:$0xff]
      %v356 = vld [vmem:[%s300 + $0x190] sm:$0xff]
      %v357 = vld [vmem:[%s300 + $0x198] sm:$0xff]
      %v358 = vld [vmem:[%s300 + $0x1a0] sm:$0xff]
      %v359 = vld [vmem:[%s300 + $0x1a8] sm:$0xff]
      %v360 = vld [vmem:[%s300 + $0x1b0] sm:$0xff]
      %v361 = vld [vmem:[%s300 + $0x1b8] sm:$0xff]
      %v362 = vld [vmem:[%s300 + $0x1c0] sm:$0xff]
      %v363 = vld [vmem:[%s300 + $0x1c8] sm:$0xff]
      %v364 = vld [vmem:[%s300 + $0x1d0] sm:$0xff]
      %v365 = vld [vmem:[%s300 + $0x1d8] sm:$0xff]
      %v366 = vld [vmem:[%s300 + $0x1e0] sm:$0xff]
      %v367 = vld [vmem:[%s300 + $0x1e8] sm:$0xff]
      %v368 = vld [vmem:[%s300 + $0x1f0] sm:$0xff]
      %v369 = vld [vmem:[%s300 + $0x1f8] sm:$0xff]
      %v370 = vld [vmem:[%s300 + $0x200] sm:$0xff]
      %v371 = vld [vmem:[%s300 + $0x208] sm:$0xff]
      %v372 = vld [vmem:[%s300 + $0x210] sm:$0xff]
      %v373 = vld [vmem:[%s300 + $0x218] sm:$0xff]
      %s374 = scalar_lea.vmem %s300, 576
      %v375 = vld [vmem:[%s374] sm:$0xff]
      %v376 = vld [vmem:[%s374 + $0x8] sm:$0xff]
      %v377 = vld [vmem:[%s374 + $0x10] sm:$0xff]
      %v378 = vld [vmem:[%s374 + $0x18] sm:$0xff]
      %v379 = vld [vmem:[%s374 + $0x20] sm:$0xff]
      %v380 = vld [vmem:[%s374 + $0x28] sm:$0xff]
      %v381 = vld [vmem:[%s374 + $0x30] sm:$0xff]
      %v382 = vld [vmem:[%s374 + $0x38] sm:$0xff]
      %v383 = vld [vmem:[%s374 + $0x40] sm:$0xff]
      %v384 = vld [vmem:[%s374 + $0x48] sm:$0xff]
      %v385 = vld [vmem:[%s374 + $0x50] sm:$0xff]
      %v386 = vld [vmem:[%s374 + $0x58] sm:$0xff]
      %v387 = vld [vmem:[%s374 + $0x60] sm:$0xff]
      %v388 = vld [vmem:[%s374 + $0x68] sm:$0xff]
      %v389 = vld [vmem:[%s374 + $0x70] sm:$0xff]
      %v390 = vld [vmem:[%s374 + $0x78] sm:$0xff]
      %v391 = vld [vmem:[%s374 + $0x80] sm:$0xff]
      %v392 = vld [vmem:[%s374 + $0x88] sm:$0xff]
      %v393 = vld [vmem:[%s374 + $0x90] sm:$0xff]
      %v394 = vld [vmem:[%s374 + $0x98] sm:$0xff]
      %v395 = vld [vmem:[%s374 + $0xa0] sm:$0xff]
      %v396 = vld [vmem:[%s374 + $0xa8] sm:$0xff]
      %v397 = vld [vmem:[%s374 + $0xb0] sm:$0xff]
      %v398 = vld [vmem:[%s374 + $0xb8] sm:$0xff]
      %v399 = vld [vmem:[%s374 + $0xc0] sm:$0xff]
      %v400 = vld [vmem:[%s374 + $0xc8] sm:$0xff]
      %v401 = vld [vmem:[%s374 + $0xd0] sm:$0xff]
      %v402 = vld [vmem:[%s374 + $0xd8] sm:$0xff]
      %v403 = vld [vmem:[%s374 + $0xe0] sm:$0xff]
      %v404 = vld [vmem:[%s374 + $0xe8] sm:$0xff]
      %v405 = vld [vmem:[%s374 + $0xf0] sm:$0xff]
      %v406 = vld [vmem:[%s374 + $0xf8] sm:$0xff]
      %v407 = vld [vmem:[%s374 + $0x100] sm:$0xff]
      %v408 = vld [vmem:[%s374 + $0x108] sm:$0xff]
      %v409 = vld [vmem:[%s374 + $0x110] sm:$0xff]
      %v410 = vld [vmem:[%s374 + $0x118] sm:$0xff]
      %v411 = vld [vmem:[%s374 + $0x120] sm:$0xff]
      %v412 = vld [vmem:[%s374 + $0x128] sm:$0xff]
      %v413 = vld [vmem:[%s374 + $0x130] sm:$0xff]
      %v414 = vld [vmem:[%s374 + $0x138] sm:$0xff]
      %v415 = vld [vmem:[%s374 + $0x140] sm:$0xff]
      %v416 = vld [vmem:[%s374 + $0x148] sm:$0xff]
      %v417 = vld [vmem:[%s374 + $0x150] sm:$0xff]
      %v418 = vld [vmem:[%s374 + $0x158] sm:$0xff]
      %v419 = vld [vmem:[%s374 + $0x160] sm:$0xff]
      %v420 = vld [vmem:[%s374 + $0x168] sm:$0xff]
      %v421 = vld [vmem:[%s374 + $0x170] sm:$0xff]
      %v422 = vld [vmem:[%s374 + $0x178] sm:$0xff]
      %v423 = vld [vmem:[%s374 + $0x180] sm:$0xff]
      %v424 = vld [vmem:[%s374 + $0x188] sm:$0xff]
      %v425 = vld [vmem:[%s374 + $0x190] sm:$0xff]
      %v426 = vld [vmem:[%s374 + $0x198] sm:$0xff]
      %v427 = vld [vmem:[%s374 + $0x1a0] sm:$0xff]
      %v428 = vld [vmem:[%s374 + $0x1a8] sm:$0xff]
      %v429 = vld [vmem:[%s374 + $0x1b0] sm:$0xff]
      %v430 = vld [vmem:[%s374 + $0x1b8] sm:$0xff]
      %v431 = vld [vmem:[%s374 + $0x1c0] sm:$0xff]
      %v432 = vld [vmem:[%s374 + $0x1c8] sm:$0xff]
      %v433 = vld [vmem:[%s374 + $0x1d0] sm:$0xff]
      %v434 = vld [vmem:[%s374 + $0x1d8] sm:$0xff]
      %v435 = vld [vmem:[%s374 + $0x1e0] sm:$0xff]
      %v436 = vld [vmem:[%s374 + $0x1e8] sm:$0xff]
      %v437 = vld [vmem:[%s374 + $0x1f0] sm:$0xff]
      %v438 = vld [vmem:[%s374 + $0x1f8] sm:$0xff]
      %v439 = vld [vmem:[%s374 + $0x200] sm:$0xff]
      %v440 = vld [vmem:[%s374 + $0x208] sm:$0xff]
      %v441 = vld [vmem:[%s374 + $0x210] sm:$0xff]
      %v442 = vld [vmem:[%s374 + $0x218] sm:$0xff]
      %s443 = scalar_lea.vmem %s300, 32
      %v444 = vld [vmem:[%s443] sm:$0xff]
      %v445 = vld [vmem:[%s443 + $0x8] sm:$0xff]
      %v446 = vld [vmem:[%s443 + $0x10] sm:$0xff]
      %v447 = vld [vmem:[%s443 + $0x18] sm:$0xff]
      %v448 = vld [vmem:[%s443 + $0x20] sm:$0xff]
      %v449 = vld [vmem:[%s443 + $0x28] sm:$0xff]
      %v450 = vld [vmem:[%s443 + $0x30] sm:$0xff]
      %v451 = vld [vmem:[%s443 + $0x38] sm:$0xff]
      %v452 = vld [vmem:[%s443 + $0x40] sm:$0xff]
      %v453 = vld [vmem:[%s443 + $0x48] sm:$0xff]
      %v454 = vld [vmem:[%s443 + $0x50] sm:$0xff]
      %v455 = vld [vmem:[%s443 + $0x58] sm:$0xff]
      %v456 = vld [vmem:[%s443 + $0x60] sm:$0xff]
      %v457 = vld [vmem:[%s443 + $0x68] sm:$0xff]
      %v458 = vld [vmem:[%s443 + $0x70] sm:$0xff]
      %v459 = vld [vmem:[%s443 + $0x78] sm:$0xff]
      %v460 = vld [vmem:[%s443 + $0x80] sm:$0xff]
      %v461 = vld [vmem:[%s443 + $0x88] sm:$0xff]
      %v462 = vld [vmem:[%s443 + $0x90] sm:$0xff]
      %v463 = vld [vmem:[%s443 + $0x98] sm:$0xff]
      %v464 = vld [vmem:[%s443 + $0xa0] sm:$0xff]
      %v465 = vld [vmem:[%s443 + $0xa8] sm:$0xff]
      %v466 = vld [vmem:[%s443 + $0xb0] sm:$0xff]
      %v467 = vld [vmem:[%s443 + $0xb8] sm:$0xff]
      %v468 = vld [vmem:[%s443 + $0xc0] sm:$0xff]
      %v469 = vld [vmem:[%s443 + $0xc8] sm:$0xff]
      %v470 = vld [vmem:[%s443 + $0xd0] sm:$0xff]
      %v471 = vld [vmem:[%s443 + $0xd8] sm:$0xff]
      %v472 = vld [vmem:[%s443 + $0xe0] sm:$0xff]
      %v473 = vld [vmem:[%s443 + $0xe8] sm:$0xff]
      %v474 = vld [vmem:[%s443 + $0xf0] sm:$0xff]
      %v475 = vld [vmem:[%s443 + $0xf8] sm:$0xff]
      %v476 = vld [vmem:[%s443 + $0x100] sm:$0xff]
      %v477 = vld [vmem:[%s443 + $0x108] sm:$0xff]
      %v478 = vld [vmem:[%s443 + $0x110] sm:$0xff]
      %v479 = vld [vmem:[%s443 + $0x118] sm:$0xff]
      %v480 = vld [vmem:[%s443 + $0x120] sm:$0xff]
      %v481 = vld [vmem:[%s443 + $0x128] sm:$0xff]
      %v482 = vld [vmem:[%s443 + $0x130] sm:$0xff]
      %v483 = vld [vmem:[%s443 + $0x138] sm:$0xff]
      %v484 = vld [vmem:[%s443 + $0x140] sm:$0xff]
      %v485 = vld [vmem:[%s443 + $0x148] sm:$0xff]
      %v486 = vld [vmem:[%s443 + $0x150] sm:$0xff]
      %v487 = vld [vmem:[%s443 + $0x158] sm:$0xff]
      %v488 = vld [vmem:[%s443 + $0x160] sm:$0xff]
      %v489 = vld [vmem:[%s443 + $0x168] sm:$0xff]
      %v490 = vld [vmem:[%s443 + $0x170] sm:$0xff]
      %v491 = vld [vmem:[%s443 + $0x178] sm:$0xff]
      %v492 = vld [vmem:[%s443 + $0x180] sm:$0xff]
      %v493 = vld [vmem:[%s443 + $0x188] sm:$0xff]
      %v494 = vld [vmem:[%s443 + $0x190] sm:$0xff]
      %v495 = vld [vmem:[%s443 + $0x198] sm:$0xff]
      %v496 = vld [vmem:[%s443 + $0x1a0] sm:$0xff]
      %v497 = vld [vmem:[%s443 + $0x1a8] sm:$0xff]
      %v498 = vld [vmem:[%s443 + $0x1b0] sm:$0xff]
      %v499 = vld [vmem:[%s443 + $0x1b8] sm:$0xff]
      %v500 = vld [vmem:[%s443 + $0x1c0] sm:$0xff]
      %v501 = vld [vmem:[%s443 + $0x1c8] sm:$0xff]
      %v502 = vld [vmem:[%s443 + $0x1d0] sm:$0xff]
      %v503 = vld [vmem:[%s443 + $0x1d8] sm:$0xff]
      %v504 = vld [vmem:[%s443 + $0x1e0] sm:$0xff]
      %v505 = vld [vmem:[%s443 + $0x1e8] sm:$0xff]
      %v506 = vld [vmem:[%s443 + $0x1f0] sm:$0xff]
      %v507 = vld [vmem:[%s443 + $0x1f8] sm:$0xff]
      %v508 = vld [vmem:[%s443 + $0x200] sm:$0xff]
      %v509 = vld [vmem:[%s443 + $0x208] sm:$0xff]
      %v510 = vld [vmem:[%s443 + $0x210] sm:$0xff]
      %v511 = vld [vmem:[%s443 + $0x218] sm:$0xff]
      %580 = vrot.lane.b32.xlu0 %v375, 16
      %v581 = vpop.permute.xlu0 %580
      %582 = vrot.lane.b32.xlu0 %v376, 16
      %v583 = vpop.permute.xlu0 %582
      %584 = vrot.lane.b32.xlu0 %v377, 16
      %v585 = vpop.permute.xlu0 %584
      %586 = vrot.lane.b32.xlu0 %v378, 16
      %v587 = vpop.permute.xlu0 %586
      %588 = vrot.lane.b32.xlu0 %v379, 16
      %v589 = vpop.permute.xlu0 %588
      %590 = vrot.lane.b32.xlu0 %v380, 16
      %v591 = vpop.permute.xlu0 %590
      %592 = vrot.lane.b32.xlu0 %v381, 16
      %v593 = vpop.permute.xlu0 %592
      %594 = vrot.lane.b32.xlu0 %v382, 16
      %v595 = vpop.permute.xlu0 %594
      %596 = vrot.lane.b32.xlu0 %v383, 16
      %v597 = vpop.permute.xlu0 %596
      %598 = vrot.lane.b32.xlu0 %v384, 16
      %v599 = vpop.permute.xlu0 %598
      %600 = vrot.lane.b32.xlu0 %v385, 16
      %v601 = vpop.permute.xlu0 %600
      %602 = vrot.lane.b32.xlu0 %v386, 16
      %v603 = vpop.permute.xlu0 %602
      %604 = vrot.lane.b32.xlu0 %v387, 16
      %v605 = vpop.permute.xlu0 %604
      %606 = vrot.lane.b32.xlu0 %v388, 16
      %v607 = vpop.permute.xlu0 %606
      %608 = vrot.lane.b32.xlu0 %v389, 16
      %v609 = vpop.permute.xlu0 %608
      %610 = vrot.lane.b32.xlu0 %v390, 16
      %v611 = vpop.permute.xlu0 %610
      %612 = vrot.lane.b32.xlu0 %v391, 16
      %v613 = vpop.permute.xlu0 %612
      %614 = vrot.lane.b32.xlu0 %v392, 16
      %v615 = vpop.permute.xlu0 %614
      %616 = vrot.lane.b32.xlu0 %v393, 16
      %v617 = vpop.permute.xlu0 %616
      %618 = vrot.lane.b32.xlu0 %v394, 16
      %v619 = vpop.permute.xlu0 %618
      %620 = vrot.lane.b32.xlu0 %v395, 16
      %v621 = vpop.permute.xlu0 %620
      %622 = vrot.lane.b32.xlu0 %v396, 16
      %v623 = vpop.permute.xlu0 %622
      %624 = vrot.lane.b32.xlu0 %v397, 16
      %v625 = vpop.permute.xlu0 %624
      %626 = vrot.lane.b32.xlu0 %v398, 16
      %v627 = vpop.permute.xlu0 %626
      %628 = vrot.lane.b32.xlu0 %v399, 16
      %v629 = vpop.permute.xlu0 %628
      %630 = vrot.lane.b32.xlu0 %v400, 16
      %v631 = vpop.permute.xlu0 %630
      %632 = vrot.lane.b32.xlu0 %v401, 16
      %v633 = vpop.permute.xlu0 %632
      %634 = vrot.lane.b32.xlu0 %v402, 16
      %v635 = vpop.permute.xlu0 %634
      %636 = vrot.lane.b32.xlu0 %v403, 16
      %v637 = vpop.permute.xlu0 %636
      %638 = vrot.lane.b32.xlu0 %v404, 16
      %v639 = vpop.permute.xlu0 %638
      %640 = vrot.lane.b32.xlu0 %v405, 16
      %v641 = vpop.permute.xlu0 %640
      %642 = vrot.lane.b32.xlu0 %v406, 16
      %v643 = vpop.permute.xlu0 %642
      %644 = vrot.lane.b32.xlu0 %v407, 16
      %v645 = vpop.permute.xlu0 %644
      %646 = vrot.lane.b32.xlu0 %v408, 16
      %v647 = vpop.permute.xlu0 %646
      %648 = vrot.lane.b32.xlu0 %v409, 16
      %v649 = vpop.permute.xlu0 %648
      %650 = vrot.lane.b32.xlu0 %v410, 16
      %v651 = vpop.permute.xlu0 %650
      %652 = vrot.lane.b32.xlu0 %v411, 16
      %v653 = vpop.permute.xlu0 %652
      %654 = vrot.lane.b32.xlu0 %v412, 16
      %v655 = vpop.permute.xlu0 %654
      %656 = vrot.lane.b32.xlu0 %v413, 16
      %v657 = vpop.permute.xlu0 %656
      %658 = vrot.lane.b32.xlu0 %v414, 16
      %v659 = vpop.permute.xlu0 %658
      %660 = vrot.lane.b32.xlu0 %v415, 16
      %v661 = vpop.permute.xlu0 %660
      %662 = vrot.lane.b32.xlu0 %v416, 16
      %v663 = vpop.permute.xlu0 %662
      %664 = vrot.lane.b32.xlu0 %v417, 16
      %v665 = vpop.permute.xlu0 %664
      %666 = vrot.lane.b32.xlu0 %v418, 16
      %v667 = vpop.permute.xlu0 %666
      %668 = vrot.lane.b32.xlu0 %v419, 16
      %v669 = vpop.permute.xlu0 %668
      %670 = vrot.lane.b32.xlu0 %v420, 16
      %v671 = vpop.permute.xlu0 %670
      %672 = vrot.lane.b32.xlu0 %v421, 16
      %v673 = vpop.permute.xlu0 %672
      %674 = vrot.lane.b32.xlu0 %v422, 16
      %v675 = vpop.permute.xlu0 %674
      %676 = vrot.lane.b32.xlu0 %v423, 16
      %v677 = vpop.permute.xlu0 %676
      %678 = vrot.lane.b32.xlu0 %v424, 16
      %v679 = vpop.permute.xlu0 %678
      %680 = vrot.lane.b32.xlu0 %v425, 16
      %v681 = vpop.permute.xlu0 %680
      %682 = vrot.lane.b32.xlu0 %v426, 16
      %v683 = vpop.permute.xlu0 %682
      %684 = vrot.lane.b32.xlu0 %v427, 16
      %v685 = vpop.permute.xlu0 %684
      %686 = vrot.lane.b32.xlu0 %v428, 16
      %v687 = vpop.permute.xlu0 %686
      %688 = vrot.lane.b32.xlu0 %v429, 16
      %v689 = vpop.permute.xlu0 %688
      %690 = vrot.lane.b32.xlu0 %v430, 16
      %v691 = vpop.permute.xlu0 %690
      %692 = vrot.lane.b32.xlu0 %v431, 16
      %v693 = vpop.permute.xlu0 %692
      %694 = vrot.lane.b32.xlu0 %v432, 16
      %v695 = vpop.permute.xlu0 %694
      %696 = vrot.lane.b32.xlu0 %v433, 16
      %v697 = vpop.permute.xlu0 %696
      %698 = vrot.lane.b32.xlu0 %v434, 16
      %v699 = vpop.permute.xlu0 %698
      %700 = vrot.lane.b32.xlu0 %v435, 16
      %v701 = vpop.permute.xlu0 %700
      %702 = vrot.lane.b32.xlu0 %v436, 16
      %v703 = vpop.permute.xlu0 %702
      %704 = vrot.lane.b32.xlu0 %v437, 16
      %v705 = vpop.permute.xlu0 %704
      %706 = vrot.lane.b32.xlu0 %v438, 16
      %v707 = vpop.permute.xlu0 %706
      %708 = vrot.lane.b32.xlu0 %v439, 16
      %v709 = vpop.permute.xlu0 %708
      %710 = vrot.lane.b32.xlu0 %v440, 16
      %v711 = vpop.permute.xlu0 %710
      %712 = vrot.lane.b32.xlu0 %v441, 16
      %v713 = vpop.permute.xlu0 %712
      %714 = vrot.lane.b32.xlu0 %v442, 16
      %v715 = vpop.permute.xlu0 %714
      %852 = vrot.lane.b32.xlu0 %v444, 32
      %v853 = vpop.permute.xlu0 %852
      %854 = vrot.lane.b32.xlu0 %v445, 32
      %v855 = vpop.permute.xlu0 %854
      %856 = vrot.lane.b32.xlu0 %v446, 32
      %v857 = vpop.permute.xlu0 %856
      %858 = vrot.lane.b32.xlu0 %v447, 32
      %v859 = vpop.permute.xlu0 %858
      %860 = vrot.lane.b32.xlu0 %v448, 32
      %v861 = vpop.permute.xlu0 %860
      %862 = vrot.lane.b32.xlu0 %v449, 32
      %v863 = vpop.permute.xlu0 %862
      %864 = vrot.lane.b32.xlu0 %v450, 32
      %v865 = vpop.permute.xlu0 %864
      %866 = vrot.lane.b32.xlu0 %v451, 32
      %v867 = vpop.permute.xlu0 %866
      %868 = vrot.lane.b32.xlu0 %v452, 32
      %v869 = vpop.permute.xlu0 %868
      %870 = vrot.lane.b32.xlu0 %v453, 32
      %v871 = vpop.permute.xlu0 %870
      %872 = vrot.lane.b32.xlu0 %v454, 32
      %v873 = vpop.permute.xlu0 %872
      %874 = vrot.lane.b32.xlu0 %v455, 32
      %v875 = vpop.permute.xlu0 %874
      %876 = vrot.lane.b32.xlu0 %v456, 32
      %v877 = vpop.permute.xlu0 %876
      %878 = vrot.lane.b32.xlu0 %v457, 32
      %v879 = vpop.permute.xlu0 %878
      %880 = vrot.lane.b32.xlu0 %v458, 32
      %v881 = vpop.permute.xlu0 %880
      %882 = vrot.lane.b32.xlu0 %v459, 32
      %v883 = vpop.permute.xlu0 %882
      %884 = vrot.lane.b32.xlu0 %v460, 32
      %v885 = vpop.permute.xlu0 %884
      %886 = vrot.lane.b32.xlu0 %v461, 32
      %v887 = vpop.permute.xlu0 %886
      %888 = vrot.lane.b32.xlu0 %v462, 32
      %v889 = vpop.permute.xlu0 %888
      %890 = vrot.lane.b32.xlu0 %v463, 32
      %v891 = vpop.permute.xlu0 %890
      %892 = vrot.lane.b32.xlu0 %v464, 32
      %v893 = vpop.permute.xlu0 %892
      %894 = vrot.lane.b32.xlu0 %v465, 32
      %v895 = vpop.permute.xlu0 %894
      %896 = vrot.lane.b32.xlu0 %v466, 32
      %v897 = vpop.permute.xlu0 %896
      %898 = vrot.lane.b32.xlu0 %v467, 32
      %v899 = vpop.permute.xlu0 %898
      %900 = vrot.lane.b32.xlu0 %v468, 32
      %v901 = vpop.permute.xlu0 %900
      %902 = vrot.lane.b32.xlu0 %v469, 32
      %v903 = vpop.permute.xlu0 %902
      %904 = vrot.lane.b32.xlu0 %v470, 32
      %v905 = vpop.permute.xlu0 %904
      %906 = vrot.lane.b32.xlu0 %v471, 32
      %v907 = vpop.permute.xlu0 %906
      %908 = vrot.lane.b32.xlu0 %v472, 32
      %v909 = vpop.permute.xlu0 %908
      %910 = vrot.lane.b32.xlu0 %v473, 32
      %v911 = vpop.permute.xlu0 %910
      %912 = vrot.lane.b32.xlu0 %v474, 32
      %v913 = vpop.permute.xlu0 %912
      %914 = vrot.lane.b32.xlu0 %v475, 32
      %v915 = vpop.permute.xlu0 %914
      %916 = vrot.lane.b32.xlu0 %v476, 32
      %v917 = vpop.permute.xlu0 %916
      %918 = vrot.lane.b32.xlu0 %v477, 32
      %v919 = vpop.permute.xlu0 %918
      %920 = vrot.lane.b32.xlu0 %v478, 32
      %v921 = vpop.permute.xlu0 %920
      %922 = vrot.lane.b32.xlu0 %v479, 32
      %v923 = vpop.permute.xlu0 %922
      %924 = vrot.lane.b32.xlu0 %v480, 32
      %v925 = vpop.permute.xlu0 %924
      %926 = vrot.lane.b32.xlu0 %v481, 32
      %v927 = vpop.permute.xlu0 %926
      %928 = vrot.lane.b32.xlu0 %v482, 32
      %v929 = vpop.permute.xlu0 %928
      %930 = vrot.lane.b32.xlu0 %v483, 32
      %v931 = vpop.permute.xlu0 %930
      %932 = vrot.lane.b32.xlu0 %v484, 32
      %v933 = vpop.permute.xlu0 %932
      %934 = vrot.lane.b32.xlu0 %v485, 32
      %v935 = vpop.permute.xlu0 %934
      %936 = vrot.lane.b32.xlu0 %v486, 32
      %v937 = vpop.permute.xlu0 %936
      %938 = vrot.lane.b32.xlu0 %v487, 32
      %v939 = vpop.permute.xlu0 %938
      %940 = vrot.lane.b32.xlu0 %v488, 32
      %v941 = vpop.permute.xlu0 %940
      %942 = vrot.lane.b32.xlu0 %v489, 32
      %v943 = vpop.permute.xlu0 %942
      %944 = vrot.lane.b32.xlu0 %v490, 32
      %v945 = vpop.permute.xlu0 %944
      %946 = vrot.lane.b32.xlu0 %v491, 32
      %v947 = vpop.permute.xlu0 %946
      %948 = vrot.lane.b32.xlu0 %v492, 32
      %v949 = vpop.permute.xlu0 %948
      %950 = vrot.lane.b32.xlu0 %v493, 32
      %v951 = vpop.permute.xlu0 %950
      %952 = vrot.lane.b32.xlu0 %v494, 32
      %v953 = vpop.permute.xlu0 %952
      %954 = vrot.lane.b32.xlu0 %v495, 32
      %v955 = vpop.permute.xlu0 %954
      %956 = vrot.lane.b32.xlu0 %v496, 32
      %v957 = vpop.permute.xlu0 %956
      %958 = vrot.lane.b32.xlu0 %v497, 32
      %v959 = vpop.permute.xlu0 %958
      %960 = vrot.lane.b32.xlu0 %v498, 32
      %v961 = vpop.permute.xlu0 %960
      %962 = vrot.lane.b32.xlu0 %v499, 32
      %v963 = vpop.permute.xlu0 %962
      %964 = vrot.lane.b32.xlu0 %v500, 32
      %v965 = vpop.permute.xlu0 %964
      %966 = vrot.lane.b32.xlu0 %v501, 32
      %v967 = vpop.permute.xlu0 %966
      %968 = vrot.lane.b32.xlu0 %v502, 32
      %v969 = vpop.permute.xlu0 %968
      %970 = vrot.lane.b32.xlu0 %v503, 32
      %v971 = vpop.permute.xlu0 %970
      %972 = vrot.lane.b32.xlu0 %v504, 32
      %v973 = vpop.permute.xlu0 %972
      %974 = vrot.lane.b32.xlu0 %v505, 32
      %v975 = vpop.permute.xlu0 %974
      %976 = vrot.lane.b32.xlu0 %v506, 32
      %v977 = vpop.permute.xlu0 %976
      %978 = vrot.lane.b32.xlu0 %v507, 32
      %v979 = vpop.permute.xlu0 %978
      %980 = vrot.lane.b32.xlu0 %v508, 32
      %v981 = vpop.permute.xlu0 %980
      %982 = vrot.lane.b32.xlu0 %v509, 32
      %v983 = vpop.permute.xlu0 %982
      %984 = vrot.lane.b32.xlu0 %v510, 32
      %v985 = vpop.permute.xlu0 %984
      %986 = vrot.lane.b32.xlu0 %v511, 32
      %v987 = vpop.permute.xlu0 %986
      %vm1056 = vcmask 130048
      %v1057 = vsel %vm1056, %v306, %v581
      %v1058 = vsel %vm1056, %v307, %v583
      %v1059 = vsel %vm1056, %v308, %v585
      %v1060 = vsel %vm1056, %v309, %v587
      %v1061 = vsel %vm1056, %v310, %v589
      %v1062 = vsel %vm1056, %v311, %v591
      %v1063 = vsel %vm1056, %v312, %v593
      %v1064 = vsel %vm1056, %v313, %v595
      %v1065 = vsel %vm1056, %v314, %v597
      %v1066 = vsel %vm1056, %v315, %v599
      %v1067 = vsel %vm1056, %v316, %v601
      %v1068 = vsel %vm1056, %v317, %v603
      %v1069 = vsel %vm1056, %v318, %v605
      %v1070 = vsel %vm1056, %v319, %v607
      %v1071 = vsel %vm1056, %v320, %v609
      %v1072 = vsel %vm1056, %v321, %v611
      %v1073 = vsel %vm1056, %v322, %v613
      %v1074 = vsel %vm1056, %v323, %v615
      %v1075 = vsel %vm1056, %v324, %v617
      %v1076 = vsel %vm1056, %v325, %v619
      %v1077 = vsel %vm1056, %v326, %v621
      %v1078 = vsel %vm1056, %v327, %v623
      %v1079 = vsel %vm1056, %v328, %v625
      %v1080 = vsel %vm1056, %v329, %v627
      %v1081 = vsel %vm1056, %v330, %v629
      %v1082 = vsel %vm1056, %v331, %v631
      %v1083 = vsel %vm1056, %v332, %v633
      %v1084 = vsel %vm1056, %v333, %v635
      %v1085 = vsel %vm1056, %v334, %v637
      %v1086 = vsel %vm1056, %v335, %v639
      %v1087 = vsel %vm1056, %v336, %v641
      %v1088 = vsel %vm1056, %v337, %v643
      %v1089 = vsel %vm1056, %v338, %v645
      %v1090 = vsel %vm1056, %v339, %v647
      %v1091 = vsel %vm1056, %v340, %v649
      %v1092 = vsel %vm1056, %v341, %v651
      %v1093 = vsel %vm1056, %v342, %v653
      %v1094 = vsel %vm1056, %v343, %v655
      %v1095 = vsel %vm1056, %v344, %v657
      %v1096 = vsel %vm1056, %v345, %v659
      %v1097 = vsel %vm1056, %v346, %v661
      %v1098 = vsel %vm1056, %v347, %v663
      %v1099 = vsel %vm1056, %v348, %v665
      %v1100 = vsel %vm1056, %v349, %v667
      %v1101 = vsel %vm1056, %v350, %v669
      %v1102 = vsel %vm1056, %v351, %v671
      %v1103 = vsel %vm1056, %v352, %v673
      %v1104 = vsel %vm1056, %v353, %v675
      %v1105 = vsel %vm1056, %v354, %v677
      %v1106 = vsel %vm1056, %v355, %v679
      %v1107 = vsel %vm1056, %v356, %v681
      %v1108 = vsel %vm1056, %v357, %v683
      %v1109 = vsel %vm1056, %v358, %v685
      %v1110 = vsel %vm1056, %v359, %v687
      %v1111 = vsel %vm1056, %v360, %v689
      %v1112 = vsel %vm1056, %v361, %v691
      %v1113 = vsel %vm1056, %v362, %v693
      %v1114 = vsel %vm1056, %v363, %v695
      %v1115 = vsel %vm1056, %v364, %v697
      %v1116 = vsel %vm1056, %v365, %v699
      %v1117 = vsel %vm1056, %v366, %v701
      %v1118 = vsel %vm1056, %v367, %v703
      %v1119 = vsel %vm1056, %v368, %v705
      %v1120 = vsel %vm1056, %v369, %v707
      %v1121 = vsel %vm1056, %v370, %v709
      %v1122 = vsel %vm1056, %v371, %v711
      %v1123 = vsel %vm1056, %v372, %v713
      %v1124 = vsel %vm1056, %v373, %v715
      %vm1125 = vcmask 261120
      %v1126 = vsel %vm1125, %v1057, %v853
      %v1127 = vsel %vm1125, %v1058, %v855
      %v1128 = vsel %vm1125, %v1059, %v857
      %v1129 = vsel %vm1125, %v1060, %v859
      %v1130 = vsel %vm1125, %v1061, %v861
      %v1131 = vsel %vm1125, %v1062, %v863
      %v1132 = vsel %vm1125, %v1063, %v865
      %v1133 = vsel %vm1125, %v1064, %v867
      %v1134 = vsel %vm1125, %v1065, %v869
      %v1135 = vsel %vm1125, %v1066, %v871
      %v1136 = vsel %vm1125, %v1067, %v873
      %v1137 = vsel %vm1125, %v1068, %v875
      %v1138 = vsel %vm1125, %v1069, %v877
      %v1139 = vsel %vm1125, %v1070, %v879
      %v1140 = vsel %vm1125, %v1071, %v881
      %v1141 = vsel %vm1125, %v1072, %v883
      %v1142 = vsel %vm1125, %v1073, %v885
      %v1143 = vsel %vm1125, %v1074, %v887
      %v1144 = vsel %vm1125, %v1075, %v889
      %v1145 = vsel %vm1125, %v1076, %v891
      %v1146 = vsel %vm1125, %v1077, %v893
      %v1147 = vsel %vm1125, %v1078, %v895
      %v1148 = vsel %vm1125, %v1079, %v897
      %v1149 = vsel %vm1125, %v1080, %v899
      %v1150 = vsel %vm1125, %v1081, %v901
      %v1151 = vsel %vm1125, %v1082, %v903
      %v1152 = vsel %vm1125, %v1083, %v905
      %v1153 = vsel %vm1125, %v1084, %v907
      %v1154 = vsel %vm1125, %v1085, %v909
      %v1155 = vsel %vm1125, %v1086, %v911
      %v1156 = vsel %vm1125, %v1087, %v913
      %v1157 = vsel %vm1125, %v1088, %v915
      %v1158 = vsel %vm1125, %v1089, %v917
      %v1159 = vsel %vm1125, %v1090, %v919
      %v1160 = vsel %vm1125, %v1091, %v921
      %v1161 = vsel %vm1125, %v1092, %v923
      %v1162 = vsel %vm1125, %v1093, %v925
      %v1163 = vsel %vm1125, %v1094, %v927
      %v1164 = vsel %vm1125, %v1095, %v929
      %v1165 = vsel %vm1125, %v1096, %v931
      %v1166 = vsel %vm1125, %v1097, %v933
      %v1167 = vsel %vm1125, %v1098, %v935
      %v1168 = vsel %vm1125, %v1099, %v937
      %v1169 = vsel %vm1125, %v1100, %v939
      %v1170 = vsel %vm1125, %v1101, %v941
      %v1171 = vsel %vm1125, %v1102, %v943
      %v1172 = vsel %vm1125, %v1103, %v945
      %v1173 = vsel %vm1125, %v1104, %v947
      %v1174 = vsel %vm1125, %v1105, %v949
      %v1175 = vsel %vm1125, %v1106, %v951
      %v1176 = vsel %vm1125, %v1107, %v953
      %v1177 = vsel %vm1125, %v1108, %v955
      %v1178 = vsel %vm1125, %v1109, %v957
      %v1179 = vsel %vm1125, %v1110, %v959
      %v1180 = vsel %vm1125, %v1111, %v961
      %v1181 = vsel %vm1125, %v1112, %v963
      %v1182 = vsel %vm1125, %v1113, %v965
      %v1183 = vsel %vm1125, %v1114, %v967
      %v1184 = vsel %vm1125, %v1115, %v969
      %v1185 = vsel %vm1125, %v1116, %v971
      %v1186 = vsel %vm1125, %v1117, %v973
      %v1187 = vsel %vm1125, %v1118, %v975
      %v1188 = vsel %vm1125, %v1119, %v977
      %v1189 = vsel %vm1125, %v1120, %v979
      %v1190 = vsel %vm1125, %v1121, %v981
      %v1191 = vsel %vm1125, %v1122, %v983
      %v1192 = vsel %vm1125, %v1123, %v985
      %v1193 = vsel %vm1125, %v1124, %v987
      %v1194 = vld [vmem:[%s1] sm:$0xff]
      %v1195 = vld [vmem:[%s1 + $0x8] sm:$0xff]
      %v1196 = vld [vmem:[%s1 + $0x10] sm:$0xff]
      %v1197 = vld [vmem:[%s1 + $0x18] sm:$0xff]
      %v1198 = vld [vmem:[%s1 + $0x20] sm:$0xff]
      %v1199 = vld [vmem:[%s1 + $0x28] sm:$0xff]
      %vm1200 = vcmask 392192
      %v1202 = vsel %vm1200, %v1126, 0
      %v1205 = vsel %vm1200, %v1127, 0
      %v1208 = vsel %vm1200, %v1128, 0
      %v1211 = vsel %vm1200, %v1129, 0
      %v1214 = vsel %vm1200, %v1130, 0
      %v1217 = vsel %vm1200, %v1131, 0
      %v1220 = vsel %vm1200, %v1132, 0
      %v1223 = vsel %vm1200, %v1133, 0
      %v1226 = vsel %vm1200, %v1134, 0
      %v1229 = vsel %vm1200, %v1135, 0
      %v1232 = vsel %vm1200, %v1136, 0
      %v1235 = vsel %vm1200, %v1137, 0
      %v1238 = vsel %vm1200, %v1138, 0
      %v1241 = vsel %vm1200, %v1139, 0
      %v1244 = vsel %vm1200, %v1140, 0
      %v1247 = vsel %vm1200, %v1141, 0
      %v1250 = vsel %vm1200, %v1142, 0
      %v1253 = vsel %vm1200, %v1143, 0
      %v1256 = vsel %vm1200, %v1144, 0
      %v1259 = vsel %vm1200, %v1145, 0
      %v1262 = vsel %vm1200, %v1146, 0
      %v1265 = vsel %vm1200, %v1147, 0
      %v1268 = vsel %vm1200, %v1148, 0
      %v1271 = vsel %vm1200, %v1149, 0
      %v1274 = vsel %vm1200, %v1150, 0
      %v1277 = vsel %vm1200, %v1151, 0
      %v1280 = vsel %vm1200, %v1152, 0
      %v1283 = vsel %vm1200, %v1153, 0
      %v1286 = vsel %vm1200, %v1154, 0
      %v1289 = vsel %vm1200, %v1155, 0
      %v1292 = vsel %vm1200, %v1156, 0
      %v1295 = vsel %vm1200, %v1157, 0
      %v1298 = vsel %vm1200, %v1158, 0
      %v1301 = vsel %vm1200, %v1159, 0
      %v1304 = vsel %vm1200, %v1160, 0
      %v1307 = vsel %vm1200, %v1161, 0
      %v1310 = vsel %vm1200, %v1162, 0
      %v1313 = vsel %vm1200, %v1163, 0
      %v1316 = vsel %vm1200, %v1164, 0
      %v1319 = vsel %vm1200, %v1165, 0
      %v1322 = vsel %vm1200, %v1166, 0
      %v1325 = vsel %vm1200, %v1167, 0
      %v1328 = vsel %vm1200, %v1168, 0
      %v1331 = vsel %vm1200, %v1169, 0
      %v1334 = vsel %vm1200, %v1170, 0
      %v1337 = vsel %vm1200, %v1171, 0
      %v1340 = vsel %vm1200, %v1172, 0
      %v1343 = vsel %vm1200, %v1173, 0
      %v1346 = vsel %vm1200, %v1174, 0
      %v1349 = vsel %vm1200, %v1175, 0
      %v1352 = vsel %vm1200, %v1176, 0
      %v1355 = vsel %vm1200, %v1177, 0
      %v1358 = vsel %vm1200, %v1178, 0
      %v1361 = vsel %vm1200, %v1179, 0
      %v1364 = vsel %vm1200, %v1180, 0
      %v1367 = vsel %vm1200, %v1181, 0
      %v1370 = vsel %vm1200, %v1182, 0
      %v1373 = vsel %vm1200, %v1183, 0
      %v1376 = vsel %vm1200, %v1184, 0
      %v1379 = vsel %vm1200, %v1185, 0
      %v1382 = vsel %vm1200, %v1186, 0
      %v1385 = vsel %vm1200, %v1187, 0
      %v1388 = vsel %vm1200, %v1188, 0
      %v1391 = vsel %vm1200, %v1189, 0
      %v1394 = vsel %vm1200, %v1190, 0
      %v1397 = vsel %vm1200, %v1191, 0
      %v1400 = vsel %vm1200, %v1192, 0
      %v1403 = vsel %vm1200, %v1193, 0
      %1405 = vmatprep.subr.mxu0 0.0
      %1406 = vmatpush1.msra.mxu0 %v1194
      %1407 = vmatprep.subr.mxu0 0.0
      %1408 = vmatpush1.msra.mxu0 %v1195
      %1409 = vmatprep.subr.mxu0 0.0
      %1410 = vmatpush1.msra.mxu0 %v1196
      %1411 = vmatprep.subr.mxu0 0.0
      %1412 = vmatpush1.msra.mxu0 %v1197
      %1413 = vmatprep.subr.mxu0 0.0
      %1414 = vmatpush1.msra.mxu0 %v1198
      %1415 = vmatprep.subr.mxu0 0.0
      %1416 = vmatpush1.msra.mxu0 %v1199
      %1417 = vmatprep.subr.mxu0 0.0
      %1418 = vmatpush1.msra.mxu0 0.0
      %1419 = vmatprep.subr.mxu0 0.0
      %1420 = vmatpush1.msra.mxu0 0.0
      %1421 = vmatprep.subr.mxu0 0.0
      %1422 = vmatpush1.msra.mxu0 0.0
      %1423 = vmatprep.subr.mxu0 0.0
      %1424 = vmatpush1.msra.mxu0 0.0
      %1425 = vmatprep.subr.mxu0 0.0
      %1426 = vmatpush1.msra.mxu0 0.0
      %1427 = vmatprep.subr.mxu0 0.0
      %1428 = vmatpush1.msra.mxu0 0.0
      %1429 = vmatprep.subr.mxu0 0.0
      %1430 = vmatpush1.msra.mxu0 0.0
      %1431 = vmatprep.subr.mxu0 0.0
      %1432 = vmatpush1.msra.mxu0 0.0
      %1433 = vmatprep.subr.mxu0 0.0
      %1434 = vmatpush1.msra.mxu0 0.0
      %1435 = vmatprep.subr.mxu0 0.0
      %1436 = vmatpush1.msra.mxu0 0.0
      %1437 = vmatprep.subr.mxu0 0.0
      %1438 = vmatpush1.msra.mxu0 0.0
      %1439 = vmatprep.subr.mxu0 0.0
      %1440 = vmatpush1.msra.mxu0 0.0
      %1441 = vmatprep.subr.mxu0 0.0
      %1442 = vmatpush1.msra.mxu0 0.0
      %1443 = vmatprep.subr.mxu0 0.0
      %1444 = vmatpush1.msra.mxu0 0.0
      %1445 = vmatprep.subr.mxu0 0.0
      %1446 = vmatpush1.msra.mxu0 0.0
      %1447 = vmatprep.subr.mxu0 0.0
      %1448 = vmatpush1.msra.mxu0 0.0
      %1449 = vmatprep.subr.mxu0 0.0
      %1450 = vmatpush1.msra.mxu0 0.0
      %1451 = vmatprep.subr.mxu0 0.0
      %1452 = vmatpush1.msra.mxu0 0.0
      %1453 = vmatprep.subr.mxu0 0.0
      %1454 = vmatpush1.msra.mxu0 0.0
      %1455 = vmatprep.subr.mxu0 0.0
      %1456 = vmatpush1.msra.mxu0 0.0
      %1457 = vmatprep.subr.mxu0 0.0
      %1458 = vmatpush1.msra.mxu0 0.0
      %1459 = vmatprep.subr.mxu0 0.0
      %1460 = vmatpush1.msra.mxu0 0.0
      %1461 = vmatprep.subr.mxu0 0.0
      %1462 = vmatpush1.msra.mxu0 0.0
      %1463 = vmatprep.subr.mxu0 0.0
      %1464 = vmatpush1.msra.mxu0 0.0
      %1465 = vmatprep.subr.mxu0 0.0
      %1466 = vmatpush1.msra.mxu0 0.0
      %1467 = vmatprep.subr.mxu0 0.0
      %1468 = vmatpush1.msra.mxu0 0.0
      %1469 = vmatprep.mubr.f32.mxu0 0.0
      %1470 = vmatmul.mubr.f32.gmra.mrb[0].mxu0 %v1202
      %v1471 = vpop.f32.mrb[0].mxu0
      %v1472 = vadd.f32 0.0, %v1471
      %v1473 = vpop.f32.mrb[0].mxu0
      %1474 = vmatprep.mubr.f32.mxu0 0.0
      %1475 = vmatmul.mubr.f32.gmra.mrb[0].mxu0 %v1205
      %v1476 = vpop.f32.mrb[0].mxu0
      %v1477 = vadd.f32 0.0, %v1476
      %v1478 = vpop.f32.mrb[0].mxu0
      %1479 = vmatprep.mubr.f32.mxu0 0.0
      %1480 = vmatmul.mubr.f32.gmra.mrb[0].mxu0 %v1208
      %v1481 = vpop.f32.mrb[0].mxu0
      %v1482 = vadd.f32 0.0, %v1481
      %v1483 = vpop.f32.mrb[0].mxu0
      %1484 = vmatprep.mubr.f32.mxu0 0.0
      %1485 = vmatmul.mubr.f32.gmra.mrb[0].mxu0 %v1211
      %v1486 = vpop.f32.mrb[0].mxu0
      %v1487 = vadd.f32 0.0, %v1486
      %v1488 = vpop.f32.mrb[0].mxu0
      %1489 = vmatprep.mubr.f32.mxu0 0.0
      %1490 = vmatmul.mubr.f32.gmra.mrb[0].mxu0 %v1214
      %v1491 = vpop.f32.mrb[0].mxu0
      %v1492 = vadd.f32 0.0, %v1491
      %v1493 = vpop.f32.mrb[0].mxu0
      %1494 = vmatprep.mubr.f32.mxu0 0.0
      %1495 = vmatmul.mubr.f32.gmra.mrb[0].mxu0 %v1217
      %v1496 = vpop.f32.mrb[0].mxu0
      %v1497 = vadd.f32 0.0, %v1496
      %v1498 = vpop.f32.mrb[0].mxu0
      %1499 = vmatprep.mubr.f32.mxu0 0.0
      %1500 = vmatmul.mubr.f32.gmra.mrb[0].mxu0 %v1220
      %v1501 = vpop.f32.mrb[0].mxu0
      %v1502 = vadd.f32 0.0, %v1501
      %v1503 = vpop.f32.mrb[0].mxu0
      %1504 = vmatprep.mubr.f32.mxu0 0.0
      %1505 = vmatmul.mubr.f32.gmra.mrb[0].mxu0 %v1223
      %v1506 = vpop.f32.mrb[0].mxu0
      %v1507 = vadd.f32 0.0, %v1506
      %v1508 = vpop.f32.mrb[0].mxu0
      %1509 = vmatprep.mubr.f32.mxu0 0.0
      %1510 = vmatmul.mubr.f32.gmra.mrb[0].mxu0 %v1226
      %v1511 = vpop.f32.mrb[0].mxu0
      %v1512 = vadd.f32 0.0, %v1511
      %v1513 = vpop.f32.mrb[0].mxu0
      %1514 = vmatprep.mubr.f32.mxu0 0.0
      %1515 = vmatmul.mubr.f32.gmra.mrb[0].mxu0 %v1229
      %v1516 = vpop.f32.mrb[0].mxu0
      %v1517 = vadd.f32 0.0, %v1516
      %v1518 = vpop.f32.mrb[0].mxu0
      %1519 = vmatprep.mubr.f32.mxu0 0.0
      %1520 = vmatmul.mubr.f32.gmra.mrb[0].mxu0 %v1232
      %v1521 = vpop.f32.mrb[0].mxu0
      %v1522 = vadd.f32 0.0, %v1521
      %v1523 = vpop.f32.mrb[0].mxu0
      %1524 = vmatprep.mubr.f32.mxu0 0.0
      %1525 = vmatmul.mubr.f32.gmra.mrb[0].mxu0 %v1235
      %v1526 = vpop.f32.mrb[0].mxu0
      %v1527 = vadd.f32 0.0, %v1526
      %v1528 = vpop.f32.mrb[0].mxu0
      %1529 = vmatprep.mubr.f32.mxu0 0.0
      %1530 = vmatmul.mubr.f32.gmra.mrb[0].mxu0 %v1238
      %v1531 = vpop.f32.mrb[0].mxu0
      %v1532 = vadd.f32 0.0, %v1531
      %v1533 = vpop.f32.mrb[0].mxu0
      %1534 = vmatprep.mubr.f32.mxu0 0.0
      %1535 = vmatmul.mubr.f32.gmra.mrb[0].mxu0 %v1241
      %v1536 = vpop.f32.mrb[0].mxu0
      %v1537 = vadd.f32 0.0, %v1536
      %v1538 = vpop.f32.mrb[0].mxu0
      %1539 = vmatprep.mubr.f32.mxu0 0.0
      %1540 = vmatmul.mubr.f32.gmra.mrb[0].mxu0 %v1244
      %v1541 = vpop.f32.mrb[0].mxu0
      %v1542 = vadd.f32 0.0, %v1541
      %v1543 = vpop.f32.mrb[0].mxu0
      %1544 = vmatprep.mubr.f32.mxu0 0.0
      %1545 = vmatmul.mubr.f32.gmra.mrb[0].mxu0 %v1247
      %v1546 = vpop.f32.mrb[0].mxu0
      %v1547 = vadd.f32 0.0, %v1546
      %v1548 = vpop.f32.mrb[0].mxu0
      %1549 = vmatprep.mubr.f32.mxu0 0.0
      %1550 = vmatmul.mubr.f32.gmra.mrb[0].mxu0 %v1250
      %v1551 = vpop.f32.mrb[0].mxu0
      %v1552 = vadd.f32 0.0, %v1551
      %v1553 = vpop.f32.mrb[0].mxu0
      %1554 = vmatprep.mubr.f32.mxu0 0.0
      %1555 = vmatmul.mubr.f32.gmra.mrb[0].mxu0 %v1253
      %v1556 = vpop.f32.mrb[0].mxu0
      %v1557 = vadd.f32 0.0, %v1556
      %v1558 = vpop.f32.mrb[0].mxu0
      %1559 = vmatprep.mubr.f32.mxu0 0.0
      %1560 = vmatmul.mubr.f32.gmra.mrb[0].mxu0 %v1256
      %v1561 = vpop.f32.mrb[0].mxu0
      %v1562 = vadd.f32 0.0, %v1561
      %v1563 = vpop.f32.mrb[0].mxu0
      %1564 = vmatprep.mubr.f32.mxu0 0.0
      %1565 = vmatmul.mubr.f32.gmra.mrb[0].mxu0 %v1259
      %v1566 = vpop.f32.mrb[0].mxu0
      %v1567 = vadd.f32 0.0, %v1566
      %v1568 = vpop.f32.mrb[0].mxu0
      %1569 = vmatprep.mubr.f32.mxu0 0.0
      %1570 = vmatmul.mubr.f32.gmra.mrb[0].mxu0 %v1262
      %v1571 = vpop.f32.mrb[0].mxu0
      %v1572 = vadd.f32 0.0, %v1571
      %v1573 = vpop.f32.mrb[0].mxu0
      %1574 = vmatprep.mubr.f32.mxu0 0.0
      %1575 = vmatmul.mubr.f32.gmra.mrb[0].mxu0 %v1265
      %v1576 = vpop.f32.mrb[0].mxu0
      %v1577 = vadd.f32 0.0, %v1576
      %v1578 = vpop.f32.mrb[0].mxu0
      %1579 = vmatprep.mubr.f32.mxu0 0.0
      %1580 = vmatmul.mubr.f32.gmra.mrb[0].mxu0 %v1268
      %v1581 = vpop.f32.mrb[0].mxu0
      %v1582 = vadd.f32 0.0, %v1581
      %v1583 = vpop.f32.mrb[0].mxu0
      %1584 = vmatprep.mubr.f32.mxu0 0.0
      %1585 = vmatmul.mubr.f32.gmra.mrb[0].mxu0 %v1271
      %v1586 = vpop.f32.mrb[0].mxu0
      %v1587 = vadd.f32 0.0, %v1586
      %v1588 = vpop.f32.mrb[0].mxu0
      %1589 = vmatprep.mubr.f32.mxu0 0.0
      %1590 = vmatmul.mubr.f32.gmra.mrb[0].mxu0 %v1274
      %v1591 = vpop.f32.mrb[0].mxu0
      %v1592 = vadd.f32 0.0, %v1591
      %v1593 = vpop.f32.mrb[0].mxu0
      %1594 = vmatprep.mubr.f32.mxu0 0.0
      %1595 = vmatmul.mubr.f32.gmra.mrb[0].mxu0 %v1277
      %v1596 = vpop.f32.mrb[0].mxu0
      %v1597 = vadd.f32 0.0, %v1596
      %v1598 = vpop.f32.mrb[0].mxu0
      %1599 = vmatprep.mubr.f32.mxu0 0.0
      %1600 = vmatmul.mubr.f32.gmra.mrb[0].mxu0 %v1280
      %v1601 = vpop.f32.mrb[0].mxu0
      %v1602 = vadd.f32 0.0, %v1601
      %v1603 = vpop.f32.mrb[0].mxu0
      %1604 = vmatprep.mubr.f32.mxu0 0.0
      %1605 = vmatmul.mubr.f32.gmra.mrb[0].mxu0 %v1283
      %v1606 = vpop.f32.mrb[0].mxu0
      %v1607 = vadd.f32 0.0, %v1606
      %v1608 = vpop.f32.mrb[0].mxu0
      %1609 = vmatprep.mubr.f32.mxu0 0.0
      %1610 = vmatmul.mubr.f32.gmra.mrb[0].mxu0 %v1286
      %v1611 = vpop.f32.mrb[0].mxu0
      %v1612 = vadd.f32 0.0, %v1611
      %v1613 = vpop.f32.mrb[0].mxu0
      %1614 = vmatprep.mubr.f32.mxu0 0.0
      %1615 = vmatmul.mubr.f32.gmra.mrb[0].mxu0 %v1289
      %v1616 = vpop.f32.mrb[0].mxu0
      %v1617 = vadd.f32 0.0, %v1616
      %v1618 = vpop.f32.mrb[0].mxu0
      %1619 = vmatprep.mubr.f32.mxu0 0.0
      %1620 = vmatmul.mubr.f32.gmra.mrb[0].mxu0 %v1292
      %v1621 = vpop.f32.mrb[0].mxu0
      %v1622 = vadd.f32 0.0, %v1621
      %v1623 = vpop.f32.mrb[0].mxu0
      %1624 = vmatprep.mubr.f32.mxu0 0.0
      %1625 = vmatmul.mubr.f32.gmra.mrb[0].mxu0 %v1295
      %v1626 = vpop.f32.mrb[0].mxu0
      %v1627 = vadd.f32 0.0, %v1626
      %v1628 = vpop.f32.mrb[0].mxu0
      %1629 = vmatprep.mubr.f32.mxu0 0.0
      %1630 = vmatmul.mubr.f32.gmra.mrb[0].mxu0 %v1298
      %v1631 = vpop.f32.mrb[0].mxu0
      %v1632 = vadd.f32 0.0, %v1631
      %v1633 = vpop.f32.mrb[0].mxu0
      %1634 = vmatprep.mubr.f32.mxu0 0.0
      %1635 = vmatmul.mubr.f32.gmra.mrb[0].mxu0 %v1301
      %v1636 = vpop.f32.mrb[0].mxu0
      %v1637 = vadd.f32 0.0, %v1636
      %v1638 = vpop.f32.mrb[0].mxu0
      %1639 = vmatprep.mubr.f32.mxu0 0.0
      %1640 = vmatmul.mubr.f32.gmra.mrb[0].mxu0 %v1304
      %v1641 = vpop.f32.mrb[0].mxu0
      %v1642 = vadd.f32 0.0, %v1641
      %v1643 = vpop.f32.mrb[0].mxu0
      %1644 = vmatprep.mubr.f32.mxu0 0.0
      %1645 = vmatmul.mubr.f32.gmra.mrb[0].mxu0 %v1307
      %v1646 = vpop.f32.mrb[0].mxu0
      %v1647 = vadd.f32 0.0, %v1646
      %v1648 = vpop.f32.mrb[0].mxu0
      %1649 = vmatprep.mubr.f32.mxu0 0.0
      %1650 = vmatmul.mubr.f32.gmra.mrb[0].mxu0 %v1310
      %v1651 = vpop.f32.mrb[0].mxu0
      %v1652 = vadd.f32 0.0, %v1651
      %v1653 = vpop.f32.mrb[0].mxu0
      %1654 = vmatprep.mubr.f32.mxu0 0.0
      %1655 = vmatmul.mubr.f32.gmra.mrb[0].mxu0 %v1313
      %v1656 = vpop.f32.mrb[0].mxu0
      %v1657 = vadd.f32 0.0, %v1656
      %v1658 = vpop.f32.mrb[0].mxu0
      %1659 = vmatprep.mubr.f32.mxu0 0.0
      %1660 = vmatmul.mubr.f32.gmra.mrb[0].mxu0 %v1316
      %v1661 = vpop.f32.mrb[0].mxu0
      %v1662 = vadd.f32 0.0, %v1661
      %v1663 = vpop.f32.mrb[0].mxu0
      %1664 = vmatprep.mubr.f32.mxu0 0.0
      %1665 = vmatmul.mubr.f32.gmra.mrb[0].mxu0 %v1319
      %v1666 = vpop.f32.mrb[0].mxu0
      %v1667 = vadd.f32 0.0, %v1666
      %v1668 = vpop.f32.mrb[0].mxu0
      %1669 = vmatprep.mubr.f32.mxu0 0.0
      %1670 = vmatmul.mubr.f32.gmra.mrb[0].mxu0 %v1322
      %v1671 = vpop.f32.mrb[0].mxu0
      %v1672 = vadd.f32 0.0, %v1671
      %v1673 = vpop.f32.mrb[0].mxu0
      %1674 = vmatprep.mubr.f32.mxu0 0.0
      %1675 = vmatmul.mubr.f32.gmra.mrb[0].mxu0 %v1325
      %v1676 = vpop.f32.mrb[0].mxu0
      %v1677 = vadd.f32 0.0, %v1676
      %v1678 = vpop.f32.mrb[0].mxu0
      %1679 = vmatprep.mubr.f32.mxu0 0.0
      %1680 = vmatmul.mubr.f32.gmra.mrb[0].mxu0 %v1328
      %v1681 = vpop.f32.mrb[0].mxu0
      %v1682 = vadd.f32 0.0, %v1681
      %v1683 = vpop.f32.mrb[0].mxu0
      %1684 = vmatprep.mubr.f32.mxu0 0.0
      %1685 = vmatmul.mubr.f32.gmra.mrb[0].mxu0 %v1331
      %v1686 = vpop.f32.mrb[0].mxu0
      %v1687 = vadd.f32 0.0, %v1686
      %v1688 = vpop.f32.mrb[0].mxu0
      %1689 = vmatprep.mubr.f32.mxu0 0.0
      %1690 = vmatmul.mubr.f32.gmra.mrb[0].mxu0 %v1334
      %v1691 = vpop.f32.mrb[0].mxu0
      %v1692 = vadd.f32 0.0, %v1691
      %v1693 = vpop.f32.mrb[0].mxu0
      %1694 = vmatprep.mubr.f32.mxu0 0.0
      %1695 = vmatmul.mubr.f32.gmra.mrb[0].mxu0 %v1337
      %v1696 = vpop.f32.mrb[0].mxu0
      %v1697 = vadd.f32 0.0, %v1696
      %v1698 = vpop.f32.mrb[0].mxu0
      %1699 = vmatprep.mubr.f32.mxu0 0.0
      %1700 = vmatmul.mubr.f32.gmra.mrb[0].mxu0 %v1340
      %v1701 = vpop.f32.mrb[0].mxu0
      %v1702 = vadd.f32 0.0, %v1701
      %v1703 = vpop.f32.mrb[0].mxu0
      %1704 = vmatprep.mubr.f32.mxu0 0.0
      %1705 = vmatmul.mubr.f32.gmra.mrb[0].mxu0 %v1343
      %v1706 = vpop.f32.mrb[0].mxu0
      %v1707 = vadd.f32 0.0, %v1706
      %v1708 = vpop.f32.mrb[0].mxu0
      %1709 = vmatprep.mubr.f32.mxu0 0.0
      %1710 = vmatmul.mubr.f32.gmra.mrb[0].mxu0 %v1346
      %v1711 = vpop.f32.mrb[0].mxu0
      %v1712 = vadd.f32 0.0, %v1711
      %v1713 = vpop.f32.mrb[0].mxu0
      %1714 = vmatprep.mubr.f32.mxu0 0.0
      %1715 = vmatmul.mubr.f32.gmra.mrb[0].mxu0 %v1349
      %v1716 = vpop.f32.mrb[0].mxu0
      %v1717 = vadd.f32 0.0, %v1716
      %v1718 = vpop.f32.mrb[0].mxu0
      %1719 = vmatprep.mubr.f32.mxu0 0.0
      %1720 = vmatmul.mubr.f32.gmra.mrb[0].mxu0 %v1352
      %v1721 = vpop.f32.mrb[0].mxu0
      %v1722 = vadd.f32 0.0, %v1721
      %v1723 = vpop.f32.mrb[0].mxu0
      %1724 = vmatprep.mubr.f32.mxu0 0.0
      %1725 = vmatmul.mubr.f32.gmra.mrb[0].mxu0 %v1355
      %v1726 = vpop.f32.mrb[0].mxu0
      %v1727 = vadd.f32 0.0, %v1726
      %v1728 = vpop.f32.mrb[0].mxu0
      %1729 = vmatprep.mubr.f32.mxu0 0.0
      %1730 = vmatmul.mubr.f32.gmra.mrb[0].mxu0 %v1358
      %v1731 = vpop.f32.mrb[0].mxu0
      %v1732 = vadd.f32 0.0, %v1731
      %v1733 = vpop.f32.mrb[0].mxu0
      %1734 = vmatprep.mubr.f32.mxu0 0.0
      %1735 = vmatmul.mubr.f32.gmra.mrb[0].mxu0 %v1361
      %v1736 = vpop.f32.mrb[0].mxu0
      %v1737 = vadd.f32 0.0, %v1736
      %v1738 = vpop.f32.mrb[0].mxu0
      %1739 = vmatprep.mubr.f32.mxu0 0.0
      %1740 = vmatmul.mubr.f32.gmra.mrb[0].mxu0 %v1364
      %v1741 = vpop.f32.mrb[0].mxu0
      %v1742 = vadd.f32 0.0, %v1741
      %v1743 = vpop.f32.mrb[0].mxu0
      %1744 = vmatprep.mubr.f32.mxu0 0.0
      %1745 = vmatmul.mubr.f32.gmra.mrb[0].mxu0 %v1367
      %v1746 = vpop.f32.mrb[0].mxu0
      %v1747 = vadd.f32 0.0, %v1746
      %v1748 = vpop.f32.mrb[0].mxu0
      %1749 = vmatprep.mubr.f32.mxu0 0.0
      %1750 = vmatmul.mubr.f32.gmra.mrb[0].mxu0 %v1370
      %v1751 = vpop.f32.mrb[0].mxu0
      %v1752 = vadd.f32 0.0, %v1751
      %v1753 = vpop.f32.mrb[0].mxu0
      %1754 = vmatprep.mubr.f32.mxu0 0.0
      %1755 = vmatmul.mubr.f32.gmra.mrb[0].mxu0 %v1373
      %v1756 = vpop.f32.mrb[0].mxu0
      %v1757 = vadd.f32 0.0, %v1756
      %v1758 = vpop.f32.mrb[0].mxu0
      %1759 = vmatprep.mubr.f32.mxu0 0.0
      %1760 = vmatmul.mubr.f32.gmra.mrb[0].mxu0 %v1376
      %v1761 = vpop.f32.mrb[0].mxu0
      %v1762 = vadd.f32 0.0, %v1761
      %v1763 = vpop.f32.mrb[0].mxu0
      %1764 = vmatprep.mubr.f32.mxu0 0.0
      %1765 = vmatmul.mubr.f32.gmra.mrb[0].mxu0 %v1379
      %v1766 = vpop.f32.mrb[0].mxu0
      %v1767 = vadd.f32 0.0, %v1766
      %v1768 = vpop.f32.mrb[0].mxu0
      %1769 = vmatprep.mubr.f32.mxu0 0.0
      %1770 = vmatmul.mubr.f32.gmra.mrb[0].mxu0 %v1382
      %v1771 = vpop.f32.mrb[0].mxu0
      %v1772 = vadd.f32 0.0, %v1771
      %v1773 = vpop.f32.mrb[0].mxu0
      %1774 = vmatprep.mubr.f32.mxu0 0.0
      %1775 = vmatmul.mubr.f32.gmra.mrb[0].mxu0 %v1385
      %v1776 = vpop.f32.mrb[0].mxu0
      %v1777 = vadd.f32 0.0, %v1776
      %v1778 = vpop.f32.mrb[0].mxu0
      %1779 = vmatprep.mubr.f32.mxu0 0.0
      %1780 = vmatmul.mubr.f32.gmra.mrb[0].mxu0 %v1388
      %v1781 = vpop.f32.mrb[0].mxu0
      %v1782 = vadd.f32 0.0, %v1781
      %v1783 = vpop.f32.mrb[0].mxu0
      %1784 = vmatprep.mubr.f32.mxu0 0.0
      %1785 = vmatmul.mubr.f32.gmra.mrb[0].mxu0 %v1391
      %v1786 = vpop.f32.mrb[0].mxu0
      %v1787 = vadd.f32 0.0, %v1786
      %v1788 = vpop.f32.mrb[0].mxu0
      %1789 = vmatprep.mubr.f32.mxu0 0.0
      %1790 = vmatmul.mubr.f32.gmra.mrb[0].mxu0 %v1394
      %v1791 = vpop.f32.mrb[0].mxu0
      %v1792 = vadd.f32 0.0, %v1791
      %v1793 = vpop.f32.mrb[0].mxu0
      %1794 = vmatprep.mubr.f32.mxu0 0.0
      %1795 = vmatmul.mubr.f32.gmra.mrb[0].mxu0 %v1397
      %v1796 = vpop.f32.mrb[0].mxu0
      %v1797 = vadd.f32 0.0, %v1796
      %v1798 = vpop.f32.mrb[0].mxu0
      %1799 = vmatprep.mubr.f32.mxu0 0.0
      %1800 = vmatmul.mubr.f32.gmra.mrb[0].mxu0 %v1400
      %v1801 = vpop.f32.mrb[0].mxu0
      %v1802 = vadd.f32 0.0, %v1801
      %v1803 = vpop.f32.mrb[0].mxu0
      %1804 = vmatprep.mubr.f32.mxu0 0.0
      %1805 = vmatmul.mubr.f32.gmra.mrb[0].mxu0 %v1403
      %v1806 = vpop.f32.mrb[0].mxu0
      %v1807 = vadd.f32 0.0, %v1806
      %v1808 = vpop.f32.mrb[0].mxu0
      %1809 = vdwg.mxu0
      %v1810 = vld [vmem:[%s2] sm:$0x1]
      %vm1879 = vcmask 1040384
      %v1880 = vrot.slane %v1472, 7
      %v1881 = vrot.slane %v1477, 7
      %v1882 = vsel %vm1879, %v1880, %v1881
      %v1883 = vrot.slane %v1482, 7
      %v1884 = vsel %vm1879, %v1881, %v1883
      %v1885 = vrot.slane %v1487, 7
      %v1886 = vsel %vm1879, %v1883, %v1885
      %v1887 = vrot.slane %v1492, 7
      %v1888 = vsel %vm1879, %v1885, %v1887
      %v1889 = vrot.slane %v1497, 7
      %v1890 = vsel %vm1879, %v1887, %v1889
      %v1891 = vrot.slane %v1502, 7
      %v1892 = vsel %vm1879, %v1889, %v1891
      %v1893 = vrot.slane %v1507, 7
      %v1894 = vsel %vm1879, %v1891, %v1893
      %v1895 = vrot.slane %v1512, 7
      %v1896 = vsel %vm1879, %v1893, %v1895
      %v1897 = vrot.slane %v1517, 7
      %v1898 = vsel %vm1879, %v1895, %v1897
      %v1899 = vrot.slane %v1522, 7
      %v1900 = vsel %vm1879, %v1897, %v1899
      %v1901 = vrot.slane %v1527, 7
      %v1902 = vsel %vm1879, %v1899, %v1901
      %v1903 = vrot.slane %v1532, 7
      %v1904 = vsel %vm1879, %v1901, %v1903
      %v1905 = vrot.slane %v1537, 7
      %v1906 = vsel %vm1879, %v1903, %v1905
      %v1907 = vrot.slane %v1542, 7
      %v1908 = vsel %vm1879, %v1905, %v1907
      %v1909 = vrot.slane %v1547, 7
      %v1910 = vsel %vm1879, %v1907, %v1909
      %v1911 = vrot.slane %v1552, 7
      %v1912 = vsel %vm1879, %v1909, %v1911
      %v1913 = vrot.slane %v1557, 7
      %v1914 = vsel %vm1879, %v1911, %v1913
      %v1915 = vrot.slane %v1562, 7
      %v1916 = vsel %vm1879, %v1913, %v1915
      %v1917 = vrot.slane %v1567, 7
      %v1918 = vsel %vm1879, %v1915, %v1917
      %v1919 = vrot.slane %v1572, 7
      %v1920 = vsel %vm1879, %v1917, %v1919
      %v1921 = vrot.slane %v1577, 7
      %v1922 = vsel %vm1879, %v1919, %v1921
      %v1923 = vrot.slane %v1582, 7
      %v1924 = vsel %vm1879, %v1921, %v1923
      %v1925 = vrot.slane %v1587, 7
      %v1926 = vsel %vm1879, %v1923, %v1925
      %v1927 = vrot.slane %v1592, 7
      %v1928 = vsel %vm1879, %v1925, %v1927
      %v1929 = vrot.slane %v1597, 7
      %v1930 = vsel %vm1879, %v1927, %v1929
      %v1931 = vrot.slane %v1602, 7
      %v1932 = vsel %vm1879, %v1929, %v1931
      %v1933 = vrot.slane %v1607, 7
      %v1934 = vsel %vm1879, %v1931, %v1933
      %v1935 = vrot.slane %v1612, 7
      %v1936 = vsel %vm1879, %v1933, %v1935
      %v1937 = vrot.slane %v1617, 7
      %v1938 = vsel %vm1879, %v1935, %v1937
      %v1939 = vrot.slane %v1622, 7
      %v1940 = vsel %vm1879, %v1937, %v1939
      %v1941 = vrot.slane %v1627, 7
      %v1942 = vsel %vm1879, %v1939, %v1941
      %v1943 = vrot.slane %v1632, 7
      %v1944 = vsel %vm1879, %v1941, %v1943
      %v1945 = vrot.slane %v1637, 7
      %v1946 = vsel %vm1879, %v1943, %v1945
      %v1947 = vrot.slane %v1642, 7
      %v1948 = vsel %vm1879, %v1945, %v1947
      %v1949 = vrot.slane %v1647, 7
      %v1950 = vsel %vm1879, %v1947, %v1949
      %v1951 = vrot.slane %v1652, 7
      %v1952 = vsel %vm1879, %v1949, %v1951
      %v1953 = vrot.slane %v1657, 7
      %v1954 = vsel %vm1879, %v1951, %v1953
      %v1955 = vrot.slane %v1662, 7
      %v1956 = vsel %vm1879, %v1953, %v1955
      %v1957 = vrot.slane %v1667, 7
      %v1958 = vsel %vm1879, %v1955, %v1957
      %v1959 = vrot.slane %v1672, 7
      %v1960 = vsel %vm1879, %v1957, %v1959
      %v1961 = vrot.slane %v1677, 7
      %v1962 = vsel %vm1879, %v1959, %v1961
      %v1963 = vrot.slane %v1682, 7
      %v1964 = vsel %vm1879, %v1961, %v1963
      %v1965 = vrot.slane %v1687, 7
      %v1966 = vsel %vm1879, %v1963, %v1965
      %v1967 = vrot.slane %v1692, 7
      %v1968 = vsel %vm1879, %v1965, %v1967
      %v1969 = vrot.slane %v1697, 7
      %v1970 = vsel %vm1879, %v1967, %v1969
      %v1971 = vrot.slane %v1702, 7
      %v1972 = vsel %vm1879, %v1969, %v1971
      %v1973 = vrot.slane %v1707, 7
      %v1974 = vsel %vm1879, %v1971, %v1973
      %v1975 = vrot.slane %v1712, 7
      %v1976 = vsel %vm1879, %v1973, %v1975
      %v1977 = vrot.slane %v1717, 7
      %v1978 = vsel %vm1879, %v1975, %v1977
      %v1979 = vrot.slane %v1722, 7
      %v1980 = vsel %vm1879, %v1977, %v1979
      %v1981 = vrot.slane %v1727, 7
      %v1982 = vsel %vm1879, %v1979, %v1981
      %v1983 = vrot.slane %v1732, 7
      %v1984 = vsel %vm1879, %v1981, %v1983
      %v1985 = vrot.slane %v1737, 7
      %v1986 = vsel %vm1879, %v1983, %v1985
      %v1987 = vrot.slane %v1742, 7
      %v1988 = vsel %vm1879, %v1985, %v1987
      %v1989 = vrot.slane %v1747, 7
      %v1990 = vsel %vm1879, %v1987, %v1989
      %v1991 = vrot.slane %v1752, 7
      %v1992 = vsel %vm1879, %v1989, %v1991
      %v1993 = vrot.slane %v1757, 7
      %v1994 = vsel %vm1879, %v1991, %v1993
      %v1995 = vrot.slane %v1762, 7
      %v1996 = vsel %vm1879, %v1993, %v1995
      %v1997 = vrot.slane %v1767, 7
      %v1998 = vsel %vm1879, %v1995, %v1997
      %v1999 = vrot.slane %v1772, 7
      %v2000 = vsel %vm1879, %v1997, %v1999
      %v2001 = vrot.slane %v1777, 7
      %v2002 = vsel %vm1879, %v1999, %v2001
      %v2003 = vrot.slane %v1782, 7
      %v2004 = vsel %vm1879, %v2001, %v2003
      %v2005 = vrot.slane %v1787, 7
      %v2006 = vsel %vm1879, %v2003, %v2005
      %v2007 = vrot.slane %v1792, 7
      %v2008 = vsel %vm1879, %v2005, %v2007
      %v2009 = vrot.slane %v1797, 7
      %v2010 = vsel %vm1879, %v2007, %v2009
      %v2011 = vrot.slane %v1802, 7
      %v2012 = vsel %vm1879, %v2009, %v2011
      %v2013 = vrot.slane %v1807, 7
      %v2014 = vsel %vm1879, %v2011, %v2013
      %v2083 = vsel %vm1879, 0.0, %v1880
      %2084 = vrot.lane.b32.xlu0 %v1472, 112
      %v2085 = vpop.permute.xlu0 %2084
      %2086 = vrot.lane.b32.xlu0 %v1477, 112
      %v2087 = vpop.permute.xlu0 %2086
      %2088 = vrot.lane.b32.xlu0 %v1482, 112
      %v2089 = vpop.permute.xlu0 %2088
      %2090 = vrot.lane.b32.xlu0 %v1487, 112
      %v2091 = vpop.permute.xlu0 %2090
      %2092 = vrot.lane.b32.xlu0 %v1492, 112
      %v2093 = vpop.permute.xlu0 %2092
      %2094 = vrot.lane.b32.xlu0 %v1497, 112
      %v2095 = vpop.permute.xlu0 %2094
      %2096 = vrot.lane.b32.xlu0 %v1502, 112
      %v2097 = vpop.permute.xlu0 %2096
      %2098 = vrot.lane.b32.xlu0 %v1507, 112
      %v2099 = vpop.permute.xlu0 %2098
      %2100 = vrot.lane.b32.xlu0 %v1512, 112
      %v2101 = vpop.permute.xlu0 %2100
      %2102 = vrot.lane.b32.xlu0 %v1517, 112
      %v2103 = vpop.permute.xlu0 %2102
      %2104 = vrot.lane.b32.xlu0 %v1522, 112
      %v2105 = vpop.permute.xlu0 %2104
      %2106 = vrot.lane.b32.xlu0 %v1527, 112
      %v2107 = vpop.permute.xlu0 %2106
      %2108 = vrot.lane.b32.xlu0 %v1532, 112
      %v2109 = vpop.permute.xlu0 %2108
      %2110 = vrot.lane.b32.xlu0 %v1537, 112
      %v2111 = vpop.permute.xlu0 %2110
      %2112 = vrot.lane.b32.xlu0 %v1542, 112
      %v2113 = vpop.permute.xlu0 %2112
      %2114 = vrot.lane.b32.xlu0 %v1547, 112
      %v2115 = vpop.permute.xlu0 %2114
      %2116 = vrot.lane.b32.xlu0 %v1552, 112
      %v2117 = vpop.permute.xlu0 %2116
      %2118 = vrot.lane.b32.xlu0 %v1557, 112
      %v2119 = vpop.permute.xlu0 %2118
      %2120 = vrot.lane.b32.xlu0 %v1562, 112
      %v2121 = vpop.permute.xlu0 %2120
      %2122 = vrot.lane.b32.xlu0 %v1567, 112
      %v2123 = vpop.permute.xlu0 %2122
      %2124 = vrot.lane.b32.xlu0 %v1572, 112
      %v2125 = vpop.permute.xlu0 %2124
      %2126 = vrot.lane.b32.xlu0 %v1577, 112
      %v2127 = vpop.permute.xlu0 %2126
      %2128 = vrot.lane.b32.xlu0 %v1582, 112
      %v2129 = vpop.permute.xlu0 %2128
      %2130 = vrot.lane.b32.xlu0 %v1587, 112
      %v2131 = vpop.permute.xlu0 %2130
      %2132 = vrot.lane.b32.xlu0 %v1592, 112
      %v2133 = vpop.permute.xlu0 %2132
      %2134 = vrot.lane.b32.xlu0 %v1597, 112
      %v2135 = vpop.permute.xlu0 %2134
      %2136 = vrot.lane.b32.xlu0 %v1602, 112
      %v2137 = vpop.permute.xlu0 %2136
      %2138 = vrot.lane.b32.xlu0 %v1607, 112
      %v2139 = vpop.permute.xlu0 %2138
      %2140 = vrot.lane.b32.xlu0 %v1612, 112
      %v2141 = vpop.permute.xlu0 %2140
      %2142 = vrot.lane.b32.xlu0 %v1617, 112
      %v2143 = vpop.permute.xlu0 %2142
      %2144 = vrot.lane.b32.xlu0 %v1622, 112
      %v2145 = vpop.permute.xlu0 %2144
      %2146 = vrot.lane.b32.xlu0 %v1627, 112
      %v2147 = vpop.permute.xlu0 %2146
      %2148 = vrot.lane.b32.xlu0 %v1632, 112
      %v2149 = vpop.permute.xlu0 %2148
      %2150 = vrot.lane.b32.xlu0 %v1637, 112
      %v2151 = vpop.permute.xlu0 %2150
      %2152 = vrot.lane.b32.xlu0 %v1642, 112
      %v2153 = vpop.permute.xlu0 %2152
      %2154 = vrot.lane.b32.xlu0 %v1647, 112
      %v2155 = vpop.permute.xlu0 %2154
      %2156 = vrot.lane.b32.xlu0 %v1652, 112
      %v2157 = vpop.permute.xlu0 %2156
      %2158 = vrot.lane.b32.xlu0 %v1657, 112
      %v2159 = vpop.permute.xlu0 %2158
      %2160 = vrot.lane.b32.xlu0 %v1662, 112
      %v2161 = vpop.permute.xlu0 %2160
      %2162 = vrot.lane.b32.xlu0 %v1667, 112
      %v2163 = vpop.permute.xlu0 %2162
      %2164 = vrot.lane.b32.xlu0 %v1672, 112
      %v2165 = vpop.permute.xlu0 %2164
      %2166 = vrot.lane.b32.xlu0 %v1677, 112
      %v2167 = vpop.permute.xlu0 %2166
      %2168 = vrot.lane.b32.xlu0 %v1682, 112
      %v2169 = vpop.permute.xlu0 %2168
      %2170 = vrot.lane.b32.xlu0 %v1687, 112
      %v2171 = vpop.permute.xlu0 %2170
      %2172 = vrot.lane.b32.xlu0 %v1692, 112
      %v2173 = vpop.permute.xlu0 %2172
      %2174 = vrot.lane.b32.xlu0 %v1697, 112
      %v2175 = vpop.permute.xlu0 %2174
      %2176 = vrot.lane.b32.xlu0 %v1702, 112
      %v2177 = vpop.permute.xlu0 %2176
      %2178 = vrot.lane.b32.xlu0 %v1707, 112
      %v2179 = vpop.permute.xlu0 %2178
      %2180 = vrot.lane.b32.xlu0 %v1712, 112
      %v2181 = vpop.permute.xlu0 %2180
      %2182 = vrot.lane.b32.xlu0 %v1717, 112
      %v2183 = vpop.permute.xlu0 %2182
      %2184 = vrot.lane.b32.xlu0 %v1722, 112
      %v2185 = vpop.permute.xlu0 %2184
      %2186 = vrot.lane.b32.xlu0 %v1727, 112
      %v2187 = vpop.permute.xlu0 %2186
      %2188 = vrot.lane.b32.xlu0 %v1732, 112
      %v2189 = vpop.permute.xlu0 %2188
      %2190 = vrot.lane.b32.xlu0 %v1737, 112
      %v2191 = vpop.permute.xlu0 %2190
      %2192 = vrot.lane.b32.xlu0 %v1742, 112
      %v2193 = vpop.permute.xlu0 %2192
      %2194 = vrot.lane.b32.xlu0 %v1747, 112
      %v2195 = vpop.permute.xlu0 %2194
      %2196 = vrot.lane.b32.xlu0 %v1752, 112
      %v2197 = vpop.permute.xlu0 %2196
      %2198 = vrot.lane.b32.xlu0 %v1757, 112
      %v2199 = vpop.permute.xlu0 %2198
      %2200 = vrot.lane.b32.xlu0 %v1762, 112
      %v2201 = vpop.permute.xlu0 %2200
      %2202 = vrot.lane.b32.xlu0 %v1767, 112
      %v2203 = vpop.permute.xlu0 %2202
      %2204 = vrot.lane.b32.xlu0 %v1772, 112
      %v2205 = vpop.permute.xlu0 %2204
      %2206 = vrot.lane.b32.xlu0 %v1777, 112
      %v2207 = vpop.permute.xlu0 %2206
      %2208 = vrot.lane.b32.xlu0 %v1782, 112
      %v2209 = vpop.permute.xlu0 %2208
      %2210 = vrot.lane.b32.xlu0 %v1787, 112
      %v2211 = vpop.permute.xlu0 %2210
      %2212 = vrot.lane.b32.xlu0 %v1792, 112
      %v2213 = vpop.permute.xlu0 %2212
      %2214 = vrot.lane.b32.xlu0 %v1797, 112
      %v2215 = vpop.permute.xlu0 %2214
      %2216 = vrot.lane.b32.xlu0 %v1802, 112
      %v2217 = vpop.permute.xlu0 %2216
      %2218 = vrot.lane.b32.xlu0 %v1807, 112
      %v2219 = vpop.permute.xlu0 %2218
      %v2288 = vadd.f32 %v2083, %v2085
      %v2289 = vadd.f32 %v1882, %v2087
      %v2290 = vadd.f32 %v1884, %v2089
      %v2291 = vadd.f32 %v1886, %v2091
      %v2292 = vadd.f32 %v1888, %v2093
      %v2293 = vadd.f32 %v1890, %v2095
      %v2294 = vadd.f32 %v1892, %v2097
      %v2295 = vadd.f32 %v1894, %v2099
      %v2296 = vadd.f32 %v1896, %v2101
      %v2297 = vadd.f32 %v1898, %v2103
      %v2298 = vadd.f32 %v1900, %v2105
      %v2299 = vadd.f32 %v1902, %v2107
      %v2300 = vadd.f32 %v1904, %v2109
      %v2301 = vadd.f32 %v1906, %v2111
      %v2302 = vadd.f32 %v1908, %v2113
      %v2303 = vadd.f32 %v1910, %v2115
      %v2304 = vadd.f32 %v1912, %v2117
      %v2305 = vadd.f32 %v1914, %v2119
      %v2306 = vadd.f32 %v1916, %v2121
      %v2307 = vadd.f32 %v1918, %v2123
      %v2308 = vadd.f32 %v1920, %v2125
      %v2309 = vadd.f32 %v1922, %v2127
      %v2310 = vadd.f32 %v1924, %v2129
      %v2311 = vadd.f32 %v1926, %v2131
      %v2312 = vadd.f32 %v1928, %v2133
      %v2313 = vadd.f32 %v1930, %v2135
      %v2314 = vadd.f32 %v1932, %v2137
      %v2315 = vadd.f32 %v1934, %v2139
      %v2316 = vadd.f32 %v1936, %v2141
      %v2317 = vadd.f32 %v1938, %v2143
      %v2318 = vadd.f32 %v1940, %v2145
      %v2319 = vadd.f32 %v1942, %v2147
      %v2320 = vadd.f32 %v1944, %v2149
      %v2321 = vadd.f32 %v1946, %v2151
      %v2322 = vadd.f32 %v1948, %v2153
      %v2323 = vadd.f32 %v1950, %v2155
      %v2324 = vadd.f32 %v1952, %v2157
      %v2325 = vadd.f32 %v1954, %v2159
      %v2326 = vadd.f32 %v1956, %v2161
      %v2327 = vadd.f32 %v1958, %v2163
      %v2328 = vadd.f32 %v1960, %v2165
      %v2329 = vadd.f32 %v1962, %v2167
      %v2330 = vadd.f32 %v1964, %v2169
      %v2331 = vadd.f32 %v1966, %v2171
      %v2332 = vadd.f32 %v1968, %v2173
      %v2333 = vadd.f32 %v1970, %v2175
      %v2334 = vadd.f32 %v1972, %v2177
      %v2335 = vadd.f32 %v1974, %v2179
      %v2336 = vadd.f32 %v1976, %v2181
      %v2337 = vadd.f32 %v1978, %v2183
      %v2338 = vadd.f32 %v1980, %v2185
      %v2339 = vadd.f32 %v1982, %v2187
      %v2340 = vadd.f32 %v1984, %v2189
      %v2341 = vadd.f32 %v1986, %v2191
      %v2342 = vadd.f32 %v1988, %v2193
      %v2343 = vadd.f32 %v1990, %v2195
      %v2344 = vadd.f32 %v1992, %v2197
      %v2345 = vadd.f32 %v1994, %v2199
      %v2346 = vadd.f32 %v1996, %v2201
      %v2347 = vadd.f32 %v1998, %v2203
      %v2348 = vadd.f32 %v2000, %v2205
      %v2349 = vadd.f32 %v2002, %v2207
      %v2350 = vadd.f32 %v2004, %v2209
      %v2351 = vadd.f32 %v2006, %v2211
      %v2352 = vadd.f32 %v2008, %v2213
      %v2353 = vadd.f32 %v2010, %v2215
      %v2354 = vadd.f32 %v2012, %v2217
      %v2355 = vadd.f32 %v2014, %v2219
      %v2424 = vrot.slane %v2288, 7
      %v2425 = vrot.slane %v2289, 7
      %v2426 = vsel %vm1879, %v2424, %v2425
      %v2427 = vrot.slane %v2290, 7
      %v2428 = vsel %vm1879, %v2425, %v2427
      %v2429 = vrot.slane %v2291, 7
      %v2430 = vsel %vm1879, %v2427, %v2429
      %v2431 = vrot.slane %v2292, 7
      %v2432 = vsel %vm1879, %v2429, %v2431
      %v2433 = vrot.slane %v2293, 7
      %v2434 = vsel %vm1879, %v2431, %v2433
      %v2435 = vrot.slane %v2294, 7
      %v2436 = vsel %vm1879, %v2433, %v2435
      %v2437 = vrot.slane %v2295, 7
      %v2438 = vsel %vm1879, %v2435, %v2437
      %v2439 = vrot.slane %v2296, 7
      %v2440 = vsel %vm1879, %v2437, %v2439
      %v2441 = vrot.slane %v2297, 7
      %v2442 = vsel %vm1879, %v2439, %v2441
      %v2443 = vrot.slane %v2298, 7
      %v2444 = vsel %vm1879, %v2441, %v2443
      %v2445 = vrot.slane %v2299, 7
      %v2446 = vsel %vm1879, %v2443, %v2445
      %v2447 = vrot.slane %v2300, 7
      %v2448 = vsel %vm1879, %v2445, %v2447
      %v2449 = vrot.slane %v2301, 7
      %v2450 = vsel %vm1879, %v2447, %v2449
      %v2451 = vrot.slane %v2302, 7
      %v2452 = vsel %vm1879, %v2449, %v2451
      %v2453 = vrot.slane %v2303, 7
      %v2454 = vsel %vm1879, %v2451, %v2453
      %v2455 = vrot.slane %v2304, 7
      %v2456 = vsel %vm1879, %v2453, %v2455
      %v2457 = vrot.slane %v2305, 7
      %v2458 = vsel %vm1879, %v2455, %v2457
      %v2459 = vrot.slane %v2306, 7
      %v2460 = vsel %vm1879, %v2457, %v2459
      %v2461 = vrot.slane %v2307, 7
      %v2462 = vsel %vm1879, %v2459, %v2461
      %v2463 = vrot.slane %v2308, 7
      %v2464 = vsel %vm1879, %v2461, %v2463
      %v2465 = vrot.slane %v2309, 7
      %v2466 = vsel %vm1879, %v2463, %v2465
      %v2467 = vrot.slane %v2310, 7
      %v2468 = vsel %vm1879, %v2465, %v2467
      %v2469 = vrot.slane %v2311, 7
      %v2470 = vsel %vm1879, %v2467, %v2469
      %v2471 = vrot.slane %v2312, 7
      %v2472 = vsel %vm1879, %v2469, %v2471
      %v2473 = vrot.slane %v2313, 7
      %v2474 = vsel %vm1879, %v2471, %v2473
      %v2475 = vrot.slane %v2314, 7
      %v2476 = vsel %vm1879, %v2473, %v2475
      %v2477 = vrot.slane %v2315, 7
      %v2478 = vsel %vm1879, %v2475, %v2477
      %v2479 = vrot.slane %v2316, 7
      %v2480 = vsel %vm1879, %v2477, %v2479
      %v2481 = vrot.slane %v2317, 7
      %v2482 = vsel %vm1879, %v2479, %v2481
      %v2483 = vrot.slane %v2318, 7
      %v2484 = vsel %vm1879, %v2481, %v2483
      %v2485 = vrot.slane %v2319, 7
      %v2486 = vsel %vm1879, %v2483, %v2485
      %v2487 = vrot.slane %v2320, 7
      %v2488 = vsel %vm1879, %v2485, %v2487
      %v2489 = vrot.slane %v2321, 7
      %v2490 = vsel %vm1879, %v2487, %v2489
      %v2491 = vrot.slane %v2322, 7
      %v2492 = vsel %vm1879, %v2489, %v2491
      %v2493 = vrot.slane %v2323, 7
      %v2494 = vsel %vm1879, %v2491, %v2493
      %v2495 = vrot.slane %v2324, 7
      %v2496 = vsel %vm1879, %v2493, %v2495
      %v2497 = vrot.slane %v2325, 7
      %v2498 = vsel %vm1879, %v2495, %v2497
      %v2499 = vrot.slane %v2326, 7
      %v2500 = vsel %vm1879, %v2497, %v2499
      %v2501 = vrot.slane %v2327, 7
      %v2502 = vsel %vm1879, %v2499, %v2501
      %v2503 = vrot.slane %v2328, 7
      %v2504 = vsel %vm1879, %v2501, %v2503
      %v2505 = vrot.slane %v2329, 7
      %v2506 = vsel %vm1879, %v2503, %v2505
      %v2507 = vrot.slane %v2330, 7
      %v2508 = vsel %vm1879, %v2505, %v2507
      %v2509 = vrot.slane %v2331, 7
      %v2510 = vsel %vm1879, %v2507, %v2509
      %v2511 = vrot.slane %v2332, 7
      %v2512 = vsel %vm1879, %v2509, %v2511
      %v2513 = vrot.slane %v2333, 7
      %v2514 = vsel %vm1879, %v2511, %v2513
      %v2515 = vrot.slane %v2334, 7
      %v2516 = vsel %vm1879, %v2513, %v2515
      %v2517 = vrot.slane %v2335, 7
      %v2518 = vsel %vm1879, %v2515, %v2517
      %v2519 = vrot.slane %v2336, 7
      %v2520 = vsel %vm1879, %v2517, %v2519
      %v2521 = vrot.slane %v2337, 7
      %v2522 = vsel %vm1879, %v2519, %v2521
      %v2523 = vrot.slane %v2338, 7
      %v2524 = vsel %vm1879, %v2521, %v2523
      %v2525 = vrot.slane %v2339, 7
      %v2526 = vsel %vm1879, %v2523, %v2525
      %v2527 = vrot.slane %v2340, 7
      %v2528 = vsel %vm1879, %v2525, %v2527
      %v2529 = vrot.slane %v2341, 7
      %v2530 = vsel %vm1879, %v2527, %v2529
      %v2531 = vrot.slane %v2342, 7
      %v2532 = vsel %vm1879, %v2529, %v2531
      %v2533 = vrot.slane %v2343, 7
      %v2534 = vsel %vm1879, %v2531, %v2533
      %v2535 = vrot.slane %v2344, 7
      %v2536 = vsel %vm1879, %v2533, %v2535
      %v2537 = vrot.slane %v2345, 7
      %v2538 = vsel %vm1879, %v2535, %v2537
      %v2539 = vrot.slane %v2346, 7
      %v2540 = vsel %vm1879, %v2537, %v2539
      %v2541 = vrot.slane %v2347, 7
      %v2542 = vsel %vm1879, %v2539, %v2541
      %v2543 = vrot.slane %v2348, 7
      %v2544 = vsel %vm1879, %v2541, %v2543
      %v2545 = vrot.slane %v2349, 7
      %v2546 = vsel %vm1879, %v2543, %v2545
      %v2547 = vrot.slane %v2350, 7
      %v2548 = vsel %vm1879, %v2545, %v2547
      %v2549 = vrot.slane %v2351, 7
      %v2550 = vsel %vm1879, %v2547, %v2549
      %v2551 = vrot.slane %v2352, 7
      %v2552 = vsel %vm1879, %v2549, %v2551
      %v2553 = vrot.slane %v2353, 7
      %v2554 = vsel %vm1879, %v2551, %v2553
      %v2555 = vrot.slane %v2354, 7
      %v2556 = vsel %vm1879, %v2553, %v2555
      %v2557 = vrot.slane %v2355, 7
      %v2558 = vsel %vm1879, %v2555, %v2557
      %v2627 = vsel %vm1879, 0.0, %v2424
      %2628 = vrot.lane.b32.xlu0 %v1472, 96
      %v2629 = vpop.permute.xlu0 %2628
      %2630 = vrot.lane.b32.xlu0 %v1477, 96
      %v2631 = vpop.permute.xlu0 %2630
      %2632 = vrot.lane.b32.xlu0 %v1482, 96
      %v2633 = vpop.permute.xlu0 %2632
      %2634 = vrot.lane.b32.xlu0 %v1487, 96
      %v2635 = vpop.permute.xlu0 %2634
      %2636 = vrot.lane.b32.xlu0 %v1492, 96
      %v2637 = vpop.permute.xlu0 %2636
      %2638 = vrot.lane.b32.xlu0 %v1497, 96
      %v2639 = vpop.permute.xlu0 %2638
      %2640 = vrot.lane.b32.xlu0 %v1502, 96
      %v2641 = vpop.permute.xlu0 %2640
      %2642 = vrot.lane.b32.xlu0 %v1507, 96
      %v2643 = vpop.permute.xlu0 %2642
      %2644 = vrot.lane.b32.xlu0 %v1512, 96
      %v2645 = vpop.permute.xlu0 %2644
      %2646 = vrot.lane.b32.xlu0 %v1517, 96
      %v2647 = vpop.permute.xlu0 %2646
      %2648 = vrot.lane.b32.xlu0 %v1522, 96
      %v2649 = vpop.permute.xlu0 %2648
      %2650 = vrot.lane.b32.xlu0 %v1527, 96
      %v2651 = vpop.permute.xlu0 %2650
      %2652 = vrot.lane.b32.xlu0 %v1532, 96
      %v2653 = vpop.permute.xlu0 %2652
      %2654 = vrot.lane.b32.xlu0 %v1537, 96
      %v2655 = vpop.permute.xlu0 %2654
      %2656 = vrot.lane.b32.xlu0 %v1542, 96
      %v2657 = vpop.permute.xlu0 %2656
      %2658 = vrot.lane.b32.xlu0 %v1547, 96
      %v2659 = vpop.permute.xlu0 %2658
      %2660 = vrot.lane.b32.xlu0 %v1552, 96
      %v2661 = vpop.permute.xlu0 %2660
      %2662 = vrot.lane.b32.xlu0 %v1557, 96
      %v2663 = vpop.permute.xlu0 %2662
      %2664 = vrot.lane.b32.xlu0 %v1562, 96
      %v2665 = vpop.permute.xlu0 %2664
      %2666 = vrot.lane.b32.xlu0 %v1567, 96
      %v2667 = vpop.permute.xlu0 %2666
      %2668 = vrot.lane.b32.xlu0 %v1572, 96
      %v2669 = vpop.permute.xlu0 %2668
      %2670 = vrot.lane.b32.xlu0 %v1577, 96
      %v2671 = vpop.permute.xlu0 %2670
      %2672 = vrot.lane.b32.xlu0 %v1582, 96
      %v2673 = vpop.permute.xlu0 %2672
      %2674 = vrot.lane.b32.xlu0 %v1587, 96
      %v2675 = vpop.permute.xlu0 %2674
      %2676 = vrot.lane.b32.xlu0 %v1592, 96
      %v2677 = vpop.permute.xlu0 %2676
      %2678 = vrot.lane.b32.xlu0 %v1597, 96
      %v2679 = vpop.permute.xlu0 %2678
      %2680 = vrot.lane.b32.xlu0 %v1602, 96
      %v2681 = vpop.permute.xlu0 %2680
      %2682 = vrot.lane.b32.xlu0 %v1607, 96
      %v2683 = vpop.permute.xlu0 %2682
      %2684 = vrot.lane.b32.xlu0 %v1612, 96
      %v2685 = vpop.permute.xlu0 %2684
      %2686 = vrot.lane.b32.xlu0 %v1617, 96
      %v2687 = vpop.permute.xlu0 %2686
      %2688 = vrot.lane.b32.xlu0 %v1622, 96
      %v2689 = vpop.permute.xlu0 %2688
      %2690 = vrot.lane.b32.xlu0 %v1627, 96
      %v2691 = vpop.permute.xlu0 %2690
      %2692 = vrot.lane.b32.xlu0 %v1632, 96
      %v2693 = vpop.permute.xlu0 %2692
      %2694 = vrot.lane.b32.xlu0 %v1637, 96
      %v2695 = vpop.permute.xlu0 %2694
      %2696 = vrot.lane.b32.xlu0 %v1642, 96
      %v2697 = vpop.permute.xlu0 %2696
      %2698 = vrot.lane.b32.xlu0 %v1647, 96
      %v2699 = vpop.permute.xlu0 %2698
      %2700 = vrot.lane.b32.xlu0 %v1652, 96
      %v2701 = vpop.permute.xlu0 %2700
      %2702 = vrot.lane.b32.xlu0 %v1657, 96
      %v2703 = vpop.permute.xlu0 %2702
      %2704 = vrot.lane.b32.xlu0 %v1662, 96
      %v2705 = vpop.permute.xlu0 %2704
      %2706 = vrot.lane.b32.xlu0 %v1667, 96
      %v2707 = vpop.permute.xlu0 %2706
      %2708 = vrot.lane.b32.xlu0 %v1672, 96
      %v2709 = vpop.permute.xlu0 %2708
      %2710 = vrot.lane.b32.xlu0 %v1677, 96
      %v2711 = vpop.permute.xlu0 %2710
      %2712 = vrot.lane.b32.xlu0 %v1682, 96
      %v2713 = vpop.permute.xlu0 %2712
      %2714 = vrot.lane.b32.xlu0 %v1687, 96
      %v2715 = vpop.permute.xlu0 %2714
      %2716 = vrot.lane.b32.xlu0 %v1692, 96
      %v2717 = vpop.permute.xlu0 %2716
      %2718 = vrot.lane.b32.xlu0 %v1697, 96
      %v2719 = vpop.permute.xlu0 %2718
      %2720 = vrot.lane.b32.xlu0 %v1702, 96
      %v2721 = vpop.permute.xlu0 %2720
      %2722 = vrot.lane.b32.xlu0 %v1707, 96
      %v2723 = vpop.permute.xlu0 %2722
      %2724 = vrot.lane.b32.xlu0 %v1712, 96
      %v2725 = vpop.permute.xlu0 %2724
      %2726 = vrot.lane.b32.xlu0 %v1717, 96
      %v2727 = vpop.permute.xlu0 %2726
      %2728 = vrot.lane.b32.xlu0 %v1722, 96
      %v2729 = vpop.permute.xlu0 %2728
      %2730 = vrot.lane.b32.xlu0 %v1727, 96
      %v2731 = vpop.permute.xlu0 %2730
      %2732 = vrot.lane.b32.xlu0 %v1732, 96
      %v2733 = vpop.permute.xlu0 %2732
      %2734 = vrot.lane.b32.xlu0 %v1737, 96
      %v2735 = vpop.permute.xlu0 %2734
      %2736 = vrot.lane.b32.xlu0 %v1742, 96
      %v2737 = vpop.permute.xlu0 %2736
      %2738 = vrot.lane.b32.xlu0 %v1747, 96
      %v2739 = vpop.permute.xlu0 %2738
      %2740 = vrot.lane.b32.xlu0 %v1752, 96
      %v2741 = vpop.permute.xlu0 %2740
      %2742 = vrot.lane.b32.xlu0 %v1757, 96
      %v2743 = vpop.permute.xlu0 %2742
      %2744 = vrot.lane.b32.xlu0 %v1762, 96
      %v2745 = vpop.permute.xlu0 %2744
      %2746 = vrot.lane.b32.xlu0 %v1767, 96
      %v2747 = vpop.permute.xlu0 %2746
      %2748 = vrot.lane.b32.xlu0 %v1772, 96
      %v2749 = vpop.permute.xlu0 %2748
      %2750 = vrot.lane.b32.xlu0 %v1777, 96
      %v2751 = vpop.permute.xlu0 %2750
      %2752 = vrot.lane.b32.xlu0 %v1782, 96
      %v2753 = vpop.permute.xlu0 %2752
      %2754 = vrot.lane.b32.xlu0 %v1787, 96
      %v2755 = vpop.permute.xlu0 %2754
      %2756 = vrot.lane.b32.xlu0 %v1792, 96
      %v2757 = vpop.permute.xlu0 %2756
      %2758 = vrot.lane.b32.xlu0 %v1797, 96
      %v2759 = vpop.permute.xlu0 %2758
      %2760 = vrot.lane.b32.xlu0 %v1802, 96
      %v2761 = vpop.permute.xlu0 %2760
      %2762 = vrot.lane.b32.xlu0 %v1807, 96
      %v2763 = vpop.permute.xlu0 %2762
      %v2832 = vadd.f32 %v2627, %v2629
      %v2833 = vadd.f32 %v2426, %v2631
      %v2834 = vadd.f32 %v2428, %v2633
      %v2835 = vadd.f32 %v2430, %v2635
      %v2836 = vadd.f32 %v2432, %v2637
      %v2837 = vadd.f32 %v2434, %v2639
      %v2838 = vadd.f32 %v2436, %v2641
      %v2839 = vadd.f32 %v2438, %v2643
      %v2840 = vadd.f32 %v2440, %v2645
      %v2841 = vadd.f32 %v2442, %v2647
      %v2842 = vadd.f32 %v2444, %v2649
      %v2843 = vadd.f32 %v2446, %v2651
      %v2844 = vadd.f32 %v2448, %v2653
      %v2845 = vadd.f32 %v2450, %v2655
      %v2846 = vadd.f32 %v2452, %v2657
      %v2847 = vadd.f32 %v2454, %v2659
      %v2848 = vadd.f32 %v2456, %v2661
      %v2849 = vadd.f32 %v2458, %v2663
      %v2850 = vadd.f32 %v2460, %v2665
      %v2851 = vadd.f32 %v2462, %v2667
      %v2852 = vadd.f32 %v2464, %v2669
      %v2853 = vadd.f32 %v2466, %v2671
      %v2854 = vadd.f32 %v2468, %v2673
      %v2855 = vadd.f32 %v2470, %v2675
      %v2856 = vadd.f32 %v2472, %v2677
      %v2857 = vadd.f32 %v2474, %v2679
      %v2858 = vadd.f32 %v2476, %v2681
      %v2859 = vadd.f32 %v2478, %v2683
      %v2860 = vadd.f32 %v2480, %v2685
      %v2861 = vadd.f32 %v2482, %v2687
      %v2862 = vadd.f32 %v2484, %v2689
      %v2863 = vadd.f32 %v2486, %v2691
      %v2864 = vadd.f32 %v2488, %v2693
      %v2865 = vadd.f32 %v2490, %v2695
      %v2866 = vadd.f32 %v2492, %v2697
      %v2867 = vadd.f32 %v2494, %v2699
      %v2868 = vadd.f32 %v2496, %v2701
      %v2869 = vadd.f32 %v2498, %v2703
      %v2870 = vadd.f32 %v2500, %v2705
      %v2871 = vadd.f32 %v2502, %v2707
      %v2872 = vadd.f32 %v2504, %v2709
      %v2873 = vadd.f32 %v2506, %v2711
      %v2874 = vadd.f32 %v2508, %v2713
      %v2875 = vadd.f32 %v2510, %v2715
      %v2876 = vadd.f32 %v2512, %v2717
      %v2877 = vadd.f32 %v2514, %v2719
      %v2878 = vadd.f32 %v2516, %v2721
      %v2879 = vadd.f32 %v2518, %v2723
      %v2880 = vadd.f32 %v2520, %v2725
      %v2881 = vadd.f32 %v2522, %v2727
      %v2882 = vadd.f32 %v2524, %v2729
      %v2883 = vadd.f32 %v2526, %v2731
      %v2884 = vadd.f32 %v2528, %v2733
      %v2885 = vadd.f32 %v2530, %v2735
      %v2886 = vadd.f32 %v2532, %v2737
      %v2887 = vadd.f32 %v2534, %v2739
      %v2888 = vadd.f32 %v2536, %v2741
      %v2889 = vadd.f32 %v2538, %v2743
      %v2890 = vadd.f32 %v2540, %v2745
      %v2891 = vadd.f32 %v2542, %v2747
      %v2892 = vadd.f32 %v2544, %v2749
      %v2893 = vadd.f32 %v2546, %v2751
      %v2894 = vadd.f32 %v2548, %v2753
      %v2895 = vadd.f32 %v2550, %v2755
      %v2896 = vadd.f32 %v2552, %v2757
      %v2897 = vadd.f32 %v2554, %v2759
      %v2898 = vadd.f32 %v2556, %v2761
      %v2899 = vadd.f32 %v2558, %v2763
      %v2901 = vlaneseq
      %v2902 = vshrl.u32 %v2901, 7
      %v2903 = vsub.s32 0, %v2902
      %v2904 = vrot.slane %v1810, %v2903
      %v2906 = vadd.f32 %v2832, %v2904
      %v2907 = vadd.f32 %v2833, %v2904
      %v2908 = vadd.f32 %v2834, %v2904
      %v2909 = vadd.f32 %v2835, %v2904
      %v2910 = vadd.f32 %v2836, %v2904
      %v2911 = vadd.f32 %v2837, %v2904
      %v2912 = vadd.f32 %v2838, %v2904
      %v2913 = vadd.f32 %v2839, %v2904
      %v2914 = vadd.f32 %v2840, %v2904
      %v2915 = vadd.f32 %v2841, %v2904
      %v2916 = vadd.f32 %v2842, %v2904
      %v2917 = vadd.f32 %v2843, %v2904
      %v2918 = vadd.f32 %v2844, %v2904
      %v2919 = vadd.f32 %v2845, %v2904
      %v2920 = vadd.f32 %v2846, %v2904
      %v2921 = vadd.f32 %v2847, %v2904
      %v2922 = vadd.f32 %v2848, %v2904
      %v2923 = vadd.f32 %v2849, %v2904
      %v2924 = vadd.f32 %v2850, %v2904
      %v2925 = vadd.f32 %v2851, %v2904
      %v2926 = vadd.f32 %v2852, %v2904
      %v2927 = vadd.f32 %v2853, %v2904
      %v2928 = vadd.f32 %v2854, %v2904
      %v2929 = vadd.f32 %v2855, %v2904
      %v2930 = vadd.f32 %v2856, %v2904
      %v2931 = vadd.f32 %v2857, %v2904
      %v2932 = vadd.f32 %v2858, %v2904
      %v2933 = vadd.f32 %v2859, %v2904
      %v2934 = vadd.f32 %v2860, %v2904
      %v2935 = vadd.f32 %v2861, %v2904
      %v2936 = vadd.f32 %v2862, %v2904
      %v2937 = vadd.f32 %v2863, %v2904
      %v2938 = vadd.f32 %v2864, %v2904
      %v2939 = vadd.f32 %v2865, %v2904
      %v2940 = vadd.f32 %v2866, %v2904
      %v2941 = vadd.f32 %v2867, %v2904
      %v2942 = vadd.f32 %v2868, %v2904
      %v2943 = vadd.f32 %v2869, %v2904
      %v2944 = vadd.f32 %v2870, %v2904
      %v2945 = vadd.f32 %v2871, %v2904
      %v2946 = vadd.f32 %v2872, %v2904
      %v2947 = vadd.f32 %v2873, %v2904
      %v2948 = vadd.f32 %v2874, %v2904
      %v2949 = vadd.f32 %v2875, %v2904
      %v2950 = vadd.f32 %v2876, %v2904
      %v2951 = vadd.f32 %v2877, %v2904
      %v2952 = vadd.f32 %v2878, %v2904
      %v2953 = vadd.f32 %v2879, %v2904
      %v2954 = vadd.f32 %v2880, %v2904
      %v2955 = vadd.f32 %v2881, %v2904
      %v2956 = vadd.f32 %v2882, %v2904
      %v2957 = vadd.f32 %v2883, %v2904
      %v2958 = vadd.f32 %v2884, %v2904
      %v2959 = vadd.f32 %v2885, %v2904
      %v2960 = vadd.f32 %v2886, %v2904
      %v2961 = vadd.f32 %v2887, %v2904
      %v2962 = vadd.f32 %v2888, %v2904
      %v2963 = vadd.f32 %v2889, %v2904
      %v2964 = vadd.f32 %v2890, %v2904
      %v2965 = vadd.f32 %v2891, %v2904
      %v2966 = vadd.f32 %v2892, %v2904
      %v2967 = vadd.f32 %v2893, %v2904
      %v2968 = vadd.f32 %v2894, %v2904
      %v2969 = vadd.f32 %v2895, %v2904
      %v2970 = vadd.f32 %v2896, %v2904
      %v2971 = vadd.f32 %v2897, %v2904
      %v2972 = vadd.f32 %v2898, %v2904
      %v2973 = vadd.f32 %v2899, %v2904
      %v2974 = vxor.u32 %v2906, 2147483648
      %v2975 = vxor.u32 %v2907, 2147483648
      %v2976 = vxor.u32 %v2908, 2147483648
      %v2977 = vxor.u32 %v2909, 2147483648
      %v2978 = vxor.u32 %v2910, 2147483648
      %v2979 = vxor.u32 %v2911, 2147483648
      %v2980 = vxor.u32 %v2912, 2147483648
      %v2981 = vxor.u32 %v2913, 2147483648
      %v2982 = vxor.u32 %v2914, 2147483648
      %v2983 = vxor.u32 %v2915, 2147483648
      %v2984 = vxor.u32 %v2916, 2147483648
      %v2985 = vxor.u32 %v2917, 2147483648
      %v2986 = vxor.u32 %v2918, 2147483648
      %v2987 = vxor.u32 %v2919, 2147483648
      %v2988 = vxor.u32 %v2920, 2147483648
      %v2989 = vxor.u32 %v2921, 2147483648
      %v2990 = vxor.u32 %v2922, 2147483648
      %v2991 = vxor.u32 %v2923, 2147483648
      %v2992 = vxor.u32 %v2924, 2147483648
      %v2993 = vxor.u32 %v2925, 2147483648
      %v2994 = vxor.u32 %v2926, 2147483648
      %v2995 = vxor.u32 %v2927, 2147483648
      %v2996 = vxor.u32 %v2928, 2147483648
      %v2997 = vxor.u32 %v2929, 2147483648
      %v2998 = vxor.u32 %v2930, 2147483648
      %v2999 = vxor.u32 %v2931, 2147483648
      %v3000 = vxor.u32 %v2932, 2147483648
      %v3001 = vxor.u32 %v2933, 2147483648
      %v3002 = vxor.u32 %v2934, 2147483648
      %v3003 = vxor.u32 %v2935, 2147483648
      %v3004 = vxor.u32 %v2936, 2147483648
      %v3005 = vxor.u32 %v2937, 2147483648
      %v3006 = vxor.u32 %v2938, 2147483648
      %v3007 = vxor.u32 %v2939, 2147483648
      %v3008 = vxor.u32 %v2940, 2147483648
      %v3009 = vxor.u32 %v2941, 2147483648
      %v3010 = vxor.u32 %v2942, 2147483648
      %v3011 = vxor.u32 %v2943, 2147483648
      %v3012 = vxor.u32 %v2944, 2147483648
      %v3013 = vxor.u32 %v2945, 2147483648
      %v3014 = vxor.u32 %v2946, 2147483648
      %v3015 = vxor.u32 %v2947, 2147483648
      %v3016 = vxor.u32 %v2948, 2147483648
      %v3017 = vxor.u32 %v2949, 2147483648
      %v3018 = vxor.u32 %v2950, 2147483648
      %v3019 = vxor.u32 %v2951, 2147483648
      %v3020 = vxor.u32 %v2952, 2147483648
      %v3021 = vxor.u32 %v2953, 2147483648
      %v3022 = vxor.u32 %v2954, 2147483648
      %v3023 = vxor.u32 %v2955, 2147483648
      %v3024 = vxor.u32 %v2956, 2147483648
      %v3025 = vxor.u32 %v2957, 2147483648
      %v3026 = vxor.u32 %v2958, 2147483648
      %v3027 = vxor.u32 %v2959, 2147483648
      %v3028 = vxor.u32 %v2960, 2147483648
      %v3029 = vxor.u32 %v2961, 2147483648
      %v3030 = vxor.u32 %v2962, 2147483648
      %v3031 = vxor.u32 %v2963, 2147483648
      %v3032 = vxor.u32 %v2964, 2147483648
      %v3033 = vxor.u32 %v2965, 2147483648
      %v3034 = vxor.u32 %v2966, 2147483648
      %v3035 = vxor.u32 %v2967, 2147483648
      %v3036 = vxor.u32 %v2968, 2147483648
      %v3037 = vxor.u32 %v2969, 2147483648
      %v3038 = vxor.u32 %v2970, 2147483648
      %v3039 = vxor.u32 %v2971, 2147483648
      %v3040 = vxor.u32 %v2972, 2147483648
      %v3041 = vxor.u32 %v2973, 2147483648
      %v3042 = vmul.f32 %v2974, 1.442695
      %v3043 = vpow.pop %v3042
      %v3044 = vmul.f32 %v2975, 1.442695
      %v3045 = vpow.pop %v3044
      %v3046 = vmul.f32 %v2976, 1.442695
      %v3047 = vpow.pop %v3046
      %v3048 = vmul.f32 %v2977, 1.442695
      %v3049 = vpow.pop %v3048
      %v3050 = vmul.f32 %v2978, 1.442695
      %v3051 = vpow.pop %v3050
      %v3052 = vmul.f32 %v2979, 1.442695
      %v3053 = vpow.pop %v3052
      %v3054 = vmul.f32 %v2980, 1.442695
      %v3055 = vpow.pop %v3054
      %v3056 = vmul.f32 %v2981, 1.442695
      %v3057 = vpow.pop %v3056
      %v3058 = vmul.f32 %v2982, 1.442695
      %v3059 = vpow.pop %v3058
      %v3060 = vmul.f32 %v2983, 1.442695
      %v3061 = vpow.pop %v3060
      %v3062 = vmul.f32 %v2984, 1.442695
      %v3063 = vpow.pop %v3062
      %v3064 = vmul.f32 %v2985, 1.442695
      %v3065 = vpow.pop %v3064
      %v3066 = vmul.f32 %v2986, 1.442695
      %v3067 = vpow.pop %v3066
      %v3068 = vmul.f32 %v2987, 1.442695
      %v3069 = vpow.pop %v3068
      %v3070 = vmul.f32 %v2988, 1.442695
      %v3071 = vpow.pop %v3070
      %v3072 = vmul.f32 %v2989, 1.442695
      %v3073 = vpow.pop %v3072
      %v3074 = vmul.f32 %v2990, 1.442695
      %v3075 = vpow.pop %v3074
      %v3076 = vmul.f32 %v2991, 1.442695
      %v3077 = vpow.pop %v3076
      %v3078 = vmul.f32 %v2992, 1.442695
      %v3079 = vpow.pop %v3078
      %v3080 = vmul.f32 %v2993, 1.442695
      %v3081 = vpow.pop %v3080
      %v3082 = vmul.f32 %v2994, 1.442695
      %v3083 = vpow.pop %v3082
      %v3084 = vmul.f32 %v2995, 1.442695
      %v3085 = vpow.pop %v3084
      %v3086 = vmul.f32 %v2996, 1.442695
      %v3087 = vpow.pop %v3086
      %v3088 = vmul.f32 %v2997, 1.442695
      %v3089 = vpow.pop %v3088
      %v3090 = vmul.f32 %v2998, 1.442695
      %v3091 = vpow.pop %v3090
      %v3092 = vmul.f32 %v2999, 1.442695
      %v3093 = vpow.pop %v3092
      %v3094 = vmul.f32 %v3000, 1.442695
      %v3095 = vpow.pop %v3094
      %v3096 = vmul.f32 %v3001, 1.442695
      %v3097 = vpow.pop %v3096
      %v3098 = vmul.f32 %v3002, 1.442695
      %v3099 = vpow.pop %v3098
      %v3100 = vmul.f32 %v3003, 1.442695
      %v3101 = vpow.pop %v3100
      %v3102 = vmul.f32 %v3004, 1.442695
      %v3103 = vpow.pop %v3102
      %v3104 = vmul.f32 %v3005, 1.442695
      %v3105 = vpow.pop %v3104
      %v3106 = vmul.f32 %v3006, 1.442695
      %v3107 = vpow.pop %v3106
      %v3108 = vmul.f32 %v3007, 1.442695
      %v3109 = vpow.pop %v3108
      %v3110 = vmul.f32 %v3008, 1.442695
      %v3111 = vpow.pop %v3110
      %v3112 = vmul.f32 %v3009, 1.442695
      %v3113 = vpow.pop %v3112
      %v3114 = vmul.f32 %v3010, 1.442695
      %v3115 = vpow.pop %v3114
      %v3116 = vmul.f32 %v3011, 1.442695
      %v3117 = vpow.pop %v3116
      %v3118 = vmul.f32 %v3012, 1.442695
      %v3119 = vpow.pop %v3118
      %v3120 = vmul.f32 %v3013, 1.442695
      %v3121 = vpow.pop %v3120
      %v3122 = vmul.f32 %v3014, 1.442695
      %v3123 = vpow.pop %v3122
      %v3124 = vmul.f32 %v3015, 1.442695
      %v3125 = vpow.pop %v3124
      %v3126 = vmul.f32 %v3016, 1.442695
      %v3127 = vpow.pop %v3126
      %v3128 = vmul.f32 %v3017, 1.442695
      %v3129 = vpow.pop %v3128
      %v3130 = vmul.f32 %v3018, 1.442695
      %v3131 = vpow.pop %v3130
      %v3132 = vmul.f32 %v3019, 1.442695
      %v3133 = vpow.pop %v3132
      %v3134 = vmul.f32 %v3020, 1.442695
      %v3135 = vpow.pop %v3134
      %v3136 = vmul.f32 %v3021, 1.442695
      %v3137 = vpow.pop %v3136
      %v3138 = vmul.f32 %v3022, 1.442695
      %v3139 = vpow.pop %v3138
      %v3140 = vmul.f32 %v3023, 1.442695
      %v3141 = vpow.pop %v3140
      %v3142 = vmul.f32 %v3024, 1.442695
      %v3143 = vpow.pop %v3142
      %v3144 = vmul.f32 %v3025, 1.442695
      %v3145 = vpow.pop %v3144
      %v3146 = vmul.f32 %v3026, 1.442695
      %v3147 = vpow.pop %v3146
      %v3148 = vmul.f32 %v3027, 1.442695
      %v3149 = vpow.pop %v3148
      %v3150 = vmul.f32 %v3028, 1.442695
      %v3151 = vpow.pop %v3150
      %v3152 = vmul.f32 %v3029, 1.442695
      %v3153 = vpow.pop %v3152
      %v3154 = vmul.f32 %v3030, 1.442695
      %v3155 = vpow.pop %v3154
      %v3156 = vmul.f32 %v3031, 1.442695
      %v3157 = vpow.pop %v3156
      %v3158 = vmul.f32 %v3032, 1.442695
      %v3159 = vpow.pop %v3158
      %v3160 = vmul.f32 %v3033, 1.442695
      %v3161 = vpow.pop %v3160
      %v3162 = vmul.f32 %v3034, 1.442695
      %v3163 = vpow.pop %v3162
      %v3164 = vmul.f32 %v3035, 1.442695
      %v3165 = vpow.pop %v3164
      %v3166 = vmul.f32 %v3036, 1.442695
      %v3167 = vpow.pop %v3166
      %v3168 = vmul.f32 %v3037, 1.442695
      %v3169 = vpow.pop %v3168
      %v3170 = vmul.f32 %v3038, 1.442695
      %v3171 = vpow.pop %v3170
      %v3172 = vmul.f32 %v3039, 1.442695
      %v3173 = vpow.pop %v3172
      %v3174 = vmul.f32 %v3040, 1.442695
      %v3175 = vpow.pop %v3174
      %v3176 = vmul.f32 %v3041, 1.442695
      %v3177 = vpow.pop %v3176
      %v3178 = vadd.f32 %v3043, 1.0
      %v3179 = vadd.f32 %v3045, 1.0
      %v3180 = vadd.f32 %v3047, 1.0
      %v3181 = vadd.f32 %v3049, 1.0
      %v3182 = vadd.f32 %v3051, 1.0
      %v3183 = vadd.f32 %v3053, 1.0
      %v3184 = vadd.f32 %v3055, 1.0
      %v3185 = vadd.f32 %v3057, 1.0
      %v3186 = vadd.f32 %v3059, 1.0
      %v3187 = vadd.f32 %v3061, 1.0
      %v3188 = vadd.f32 %v3063, 1.0
      %v3189 = vadd.f32 %v3065, 1.0
      %v3190 = vadd.f32 %v3067, 1.0
      %v3191 = vadd.f32 %v3069, 1.0
      %v3192 = vadd.f32 %v3071, 1.0
      %v3193 = vadd.f32 %v3073, 1.0
      %v3194 = vadd.f32 %v3075, 1.0
      %v3195 = vadd.f32 %v3077, 1.0
      %v3196 = vadd.f32 %v3079, 1.0
      %v3197 = vadd.f32 %v3081, 1.0
      %v3198 = vadd.f32 %v3083, 1.0
      %v3199 = vadd.f32 %v3085, 1.0
      %v3200 = vadd.f32 %v3087, 1.0
      %v3201 = vadd.f32 %v3089, 1.0
      %v3202 = vadd.f32 %v3091, 1.0
      %v3203 = vadd.f32 %v3093, 1.0
      %v3204 = vadd.f32 %v3095, 1.0
      %v3205 = vadd.f32 %v3097, 1.0
      %v3206 = vadd.f32 %v3099, 1.0
      %v3207 = vadd.f32 %v3101, 1.0
      %v3208 = vadd.f32 %v3103, 1.0
      %v3209 = vadd.f32 %v3105, 1.0
      %v3210 = vadd.f32 %v3107, 1.0
      %v3211 = vadd.f32 %v3109, 1.0
      %v3212 = vadd.f32 %v3111, 1.0
      %v3213 = vadd.f32 %v3113, 1.0
      %v3214 = vadd.f32 %v3115, 1.0
      %v3215 = vadd.f32 %v3117, 1.0
      %v3216 = vadd.f32 %v3119, 1.0
      %v3217 = vadd.f32 %v3121, 1.0
      %v3218 = vadd.f32 %v3123, 1.0
      %v3219 = vadd.f32 %v3125, 1.0
      %v3220 = vadd.f32 %v3127, 1.0
      %v3221 = vadd.f32 %v3129, 1.0
      %v3222 = vadd.f32 %v3131, 1.0
      %v3223 = vadd.f32 %v3133, 1.0
      %v3224 = vadd.f32 %v3135, 1.0
      %v3225 = vadd.f32 %v3137, 1.0
      %v3226 = vadd.f32 %v3139, 1.0
      %v3227 = vadd.f32 %v3141, 1.0
      %v3228 = vadd.f32 %v3143, 1.0
      %v3229 = vadd.f32 %v3145, 1.0
      %v3230 = vadd.f32 %v3147, 1.0
      %v3231 = vadd.f32 %v3149, 1.0
      %v3232 = vadd.f32 %v3151, 1.0
      %v3233 = vadd.f32 %v3153, 1.0
      %v3234 = vadd.f32 %v3155, 1.0
      %v3235 = vadd.f32 %v3157, 1.0
      %v3236 = vadd.f32 %v3159, 1.0
      %v3237 = vadd.f32 %v3161, 1.0
      %v3238 = vadd.f32 %v3163, 1.0
      %v3239 = vadd.f32 %v3165, 1.0
      %v3240 = vadd.f32 %v3167, 1.0
      %v3241 = vadd.f32 %v3169, 1.0
      %v3242 = vadd.f32 %v3171, 1.0
      %v3243 = vadd.f32 %v3173, 1.0
      %v3244 = vadd.f32 %v3175, 1.0
      %v3245 = vadd.f32 %v3177, 1.0
      %v3246 = vrcp.pop %v3178
      %v3247 = vmul.f32 1.0, %v3246
      %v3248 = vrcp.pop %v3179
      %v3249 = vmul.f32 1.0, %v3248
      %v3250 = vrcp.pop %v3180
      %v3251 = vmul.f32 1.0, %v3250
      %v3252 = vrcp.pop %v3181
      %v3253 = vmul.f32 1.0, %v3252
      %v3254 = vrcp.pop %v3182
      %v3255 = vmul.f32 1.0, %v3254
      %v3256 = vrcp.pop %v3183
      %v3257 = vmul.f32 1.0, %v3256
      %v3258 = vrcp.pop %v3184
      %v3259 = vmul.f32 1.0, %v3258
      %v3260 = vrcp.pop %v3185
      %v3261 = vmul.f32 1.0, %v3260
      %v3262 = vrcp.pop %v3186
      %v3263 = vmul.f32 1.0, %v3262
      %v3264 = vrcp.pop %v3187
      %v3265 = vmul.f32 1.0, %v3264
      %v3266 = vrcp.pop %v3188
      %v3267 = vmul.f32 1.0, %v3266
      %v3268 = vrcp.pop %v3189
      %v3269 = vmul.f32 1.0, %v3268
      %v3270 = vrcp.pop %v3190
      %v3271 = vmul.f32 1.0, %v3270
      %v3272 = vrcp.pop %v3191
      %v3273 = vmul.f32 1.0, %v3272
      %v3274 = vrcp.pop %v3192
      %v3275 = vmul.f32 1.0, %v3274
      %v3276 = vrcp.pop %v3193
      %v3277 = vmul.f32 1.0, %v3276
      %v3278 = vrcp.pop %v3194
      %v3279 = vmul.f32 1.0, %v3278
      %v3280 = vrcp.pop %v3195
      %v3281 = vmul.f32 1.0, %v3280
      %v3282 = vrcp.pop %v3196
      %v3283 = vmul.f32 1.0, %v3282
      %v3284 = vrcp.pop %v3197
      %v3285 = vmul.f32 1.0, %v3284
      %v3286 = vrcp.pop %v3198
      %v3287 = vmul.f32 1.0, %v3286
      %v3288 = vrcp.pop %v3199
      %v3289 = vmul.f32 1.0, %v3288
      %v3290 = vrcp.pop %v3200
      %v3291 = vmul.f32 1.0, %v3290
      %v3292 = vrcp.pop %v3201
      %v3293 = vmul.f32 1.0, %v3292
      %v3294 = vrcp.pop %v3202
      %v3295 = vmul.f32 1.0, %v3294
      %v3296 = vrcp.pop %v3203
      %v3297 = vmul.f32 1.0, %v3296
      %v3298 = vrcp.pop %v3204
      %v3299 = vmul.f32 1.0, %v3298
      %v3300 = vrcp.pop %v3205
      %v3301 = vmul.f32 1.0, %v3300
      %v3302 = vrcp.pop %v3206
      %v3303 = vmul.f32 1.0, %v3302
      %v3304 = vrcp.pop %v3207
      %v3305 = vmul.f32 1.0, %v3304
      %v3306 = vrcp.pop %v3208
      %v3307 = vmul.f32 1.0, %v3306
      %v3308 = vrcp.pop %v3209
      %v3309 = vmul.f32 1.0, %v3308
      %v3310 = vrcp.pop %v3210
      %v3311 = vmul.f32 1.0, %v3310
      %v3312 = vrcp.pop %v3211
      %v3313 = vmul.f32 1.0, %v3312
      %v3314 = vrcp.pop %v3212
      %v3315 = vmul.f32 1.0, %v3314
      %v3316 = vrcp.pop %v3213
      %v3317 = vmul.f32 1.0, %v3316
      %v3318 = vrcp.pop %v3214
      %v3319 = vmul.f32 1.0, %v3318
      %v3320 = vrcp.pop %v3215
      %v3321 = vmul.f32 1.0, %v3320
      %v3322 = vrcp.pop %v3216
      %v3323 = vmul.f32 1.0, %v3322
      %v3324 = vrcp.pop %v3217
      %v3325 = vmul.f32 1.0, %v3324
      %v3326 = vrcp.pop %v3218
      %v3327 = vmul.f32 1.0, %v3326
      %v3328 = vrcp.pop %v3219
      %v3329 = vmul.f32 1.0, %v3328
      %v3330 = vrcp.pop %v3220
      %v3331 = vmul.f32 1.0, %v3330
      %v3332 = vrcp.pop %v3221
      %v3333 = vmul.f32 1.0, %v3332
      %v3334 = vrcp.pop %v3222
      %v3335 = vmul.f32 1.0, %v3334
      %v3336 = vrcp.pop %v3223
      %v3337 = vmul.f32 1.0, %v3336
      %v3338 = vrcp.pop %v3224
      %v3339 = vmul.f32 1.0, %v3338
      %v3340 = vrcp.pop %v3225
      %v3341 = vmul.f32 1.0, %v3340
      %v3342 = vrcp.pop %v3226
      %v3343 = vmul.f32 1.0, %v3342
      %v3344 = vrcp.pop %v3227
      %v3345 = vmul.f32 1.0, %v3344
      %v3346 = vrcp.pop %v3228
      %v3347 = vmul.f32 1.0, %v3346
      %v3348 = vrcp.pop %v3229
      %v3349 = vmul.f32 1.0, %v3348
      %v3350 = vrcp.pop %v3230
      %v3351 = vmul.f32 1.0, %v3350
      %v3352 = vrcp.pop %v3231
      %v3353 = vmul.f32 1.0, %v3352
      %v3354 = vrcp.pop %v3232
      %v3355 = vmul.f32 1.0, %v3354
      %v3356 = vrcp.pop %v3233
      %v3357 = vmul.f32 1.0, %v3356
      %v3358 = vrcp.pop %v3234
      %v3359 = vmul.f32 1.0, %v3358
      %v3360 = vrcp.pop %v3235
      %v3361 = vmul.f32 1.0, %v3360
      %v3362 = vrcp.pop %v3236
      %v3363 = vmul.f32 1.0, %v3362
      %v3364 = vrcp.pop %v3237
      %v3365 = vmul.f32 1.0, %v3364
      %v3366 = vrcp.pop %v3238
      %v3367 = vmul.f32 1.0, %v3366
      %v3368 = vrcp.pop %v3239
      %v3369 = vmul.f32 1.0, %v3368
      %v3370 = vrcp.pop %v3240
      %v3371 = vmul.f32 1.0, %v3370
      %v3372 = vrcp.pop %v3241
      %v3373 = vmul.f32 1.0, %v3372
      %v3374 = vrcp.pop %v3242
      %v3375 = vmul.f32 1.0, %v3374
      %v3376 = vrcp.pop %v3243
      %v3377 = vmul.f32 1.0, %v3376
      %v3378 = vrcp.pop %v3244
      %v3379 = vmul.f32 1.0, %v3378
      %v3380 = vrcp.pop %v3245
      %v3381 = vmul.f32 1.0, %v3380
      %v3382 = vld [vmem:[%s7] sm:$0xff]
      %v3383 = vld [vmem:[%s7 + $0x8] sm:$0xff]
      %v3384 = vld [vmem:[%s7 + $0x10] sm:$0xff]
      %v3385 = vld [vmem:[%s7 + $0x18] sm:$0xff]
      %v3386 = vmul.f32 %v3247, %v3382
      %v3387 = vmul.f32 %v3249, %v3383
      %v3388 = vmul.f32 %v3251, %v3384
      %v3389 = vmul.f32 %v3253, %v3385
      %v3390 = vmul.f32 %v3255, %v3382
      %v3391 = vmul.f32 %v3257, %v3383
      %v3392 = vmul.f32 %v3259, %v3384
      %v3393 = vmul.f32 %v3261, %v3385
      %v3394 = vmul.f32 %v3263, %v3382
      %v3395 = vmul.f32 %v3265, %v3383
      %v3396 = vmul.f32 %v3267, %v3384
      %v3397 = vmul.f32 %v3269, %v3385
      %v3398 = vmul.f32 %v3271, %v3382
      %v3399 = vmul.f32 %v3273, %v3383
      %v3400 = vmul.f32 %v3275, %v3384
      %v3401 = vmul.f32 %v3277, %v3385
      %v3402 = vmul.f32 %v3279, %v3382
      %v3403 = vmul.f32 %v3281, %v3383
      %v3404 = vmul.f32 %v3283, %v3384
      %v3405 = vmul.f32 %v3285, %v3385
      %v3406 = vmul.f32 %v3287, %v3382
      %v3407 = vmul.f32 %v3289, %v3383
      %v3408 = vmul.f32 %v3291, %v3384
      %v3409 = vmul.f32 %v3293, %v3385
      %v3410 = vmul.f32 %v3295, %v3382
      %v3411 = vmul.f32 %v3297, %v3383
      %v3412 = vmul.f32 %v3299, %v3384
      %v3413 = vmul.f32 %v3301, %v3385
      %v3414 = vmul.f32 %v3303, %v3382
      %v3415 = vmul.f32 %v3305, %v3383
      %v3416 = vmul.f32 %v3307, %v3384
      %v3417 = vmul.f32 %v3309, %v3385
      %v3418 = vmul.f32 %v3311, %v3382
      %v3419 = vmul.f32 %v3313, %v3383
      %v3420 = vmul.f32 %v3315, %v3384
      %v3421 = vmul.f32 %v3317, %v3385
      %v3422 = vmul.f32 %v3319, %v3382
      %v3423 = vmul.f32 %v3321, %v3383
      %v3424 = vmul.f32 %v3323, %v3384
      %v3425 = vmul.f32 %v3325, %v3385
      %v3426 = vmul.f32 %v3327, %v3382
      %v3427 = vmul.f32 %v3329, %v3383
      %v3428 = vmul.f32 %v3331, %v3384
      %v3429 = vmul.f32 %v3333, %v3385
      %v3430 = vmul.f32 %v3335, %v3382
      %v3431 = vmul.f32 %v3337, %v3383
      %v3432 = vmul.f32 %v3339, %v3384
      %v3433 = vmul.f32 %v3341, %v3385
      %v3434 = vmul.f32 %v3343, %v3382
      %v3435 = vmul.f32 %v3345, %v3383
      %v3436 = vmul.f32 %v3347, %v3384
      %v3437 = vmul.f32 %v3349, %v3385
      %v3438 = vmul.f32 %v3351, %v3382
      %v3439 = vmul.f32 %v3353, %v3383
      %v3440 = vmul.f32 %v3355, %v3384
      %v3441 = vmul.f32 %v3357, %v3385
      %v3442 = vmul.f32 %v3359, %v3382
      %v3443 = vmul.f32 %v3361, %v3383
      %v3444 = vmul.f32 %v3363, %v3384
      %v3445 = vmul.f32 %v3365, %v3385
      %v3446 = vmul.f32 %v3367, %v3382
      %v3447 = vmul.f32 %v3369, %v3383
      %v3448 = vmul.f32 %v3371, %v3384
      %v3449 = vmul.f32 %v3373, %v3385
      %v3450 = vmul.f32 %v3375, %v3382
      %v3451 = vmul.f32 %v3377, %v3383
      %v3452 = vmul.f32 %v3379, %v3384
      %v3453 = vmul.f32 %v3381, %v3385
      %3486 = vrot.lane.b32.xlu0 %v3386, 16
      %v3487 = vpop.permute.xlu0 %3486
      %3488 = vrot.lane.b32.xlu0 %v3387, 16
      %v3489 = vpop.permute.xlu0 %3488
      %3490 = vrot.lane.b32.xlu0 %v3388, 16
      %v3491 = vpop.permute.xlu0 %3490
      %3492 = vrot.lane.b32.xlu0 %v3389, 16
      %v3493 = vpop.permute.xlu0 %3492
      %3494 = vrot.lane.b32.xlu0 %v3394, 16
      %v3495 = vpop.permute.xlu0 %3494
      %3496 = vrot.lane.b32.xlu0 %v3395, 16
      %v3497 = vpop.permute.xlu0 %3496
      %3498 = vrot.lane.b32.xlu0 %v3396, 16
      %v3499 = vpop.permute.xlu0 %3498
      %3500 = vrot.lane.b32.xlu0 %v3397, 16
      %v3501 = vpop.permute.xlu0 %3500
      %3502 = vrot.lane.b32.xlu0 %v3402, 16
      %v3503 = vpop.permute.xlu0 %3502
      %3504 = vrot.lane.b32.xlu0 %v3403, 16
      %v3505 = vpop.permute.xlu0 %3504
      %3506 = vrot.lane.b32.xlu0 %v3404, 16
      %v3507 = vpop.permute.xlu0 %3506
      %3508 = vrot.lane.b32.xlu0 %v3405, 16
      %v3509 = vpop.permute.xlu0 %3508
      %3510 = vrot.lane.b32.xlu0 %v3410, 16
      %v3511 = vpop.permute.xlu0 %3510
      %3512 = vrot.lane.b32.xlu0 %v3411, 16
      %v3513 = vpop.permute.xlu0 %3512
      %3514 = vrot.lane.b32.xlu0 %v3412, 16
      %v3515 = vpop.permute.xlu0 %3514
      %3516 = vrot.lane.b32.xlu0 %v3413, 16
      %v3517 = vpop.permute.xlu0 %3516
      %3518 = vrot.lane.b32.xlu0 %v3418, 16
      %v3519 = vpop.permute.xlu0 %3518
      %3520 = vrot.lane.b32.xlu0 %v3419, 16
      %v3521 = vpop.permute.xlu0 %3520
      %3522 = vrot.lane.b32.xlu0 %v3420, 16
      %v3523 = vpop.permute.xlu0 %3522
      %3524 = vrot.lane.b32.xlu0 %v3421, 16
      %v3525 = vpop.permute.xlu0 %3524
      %3526 = vrot.lane.b32.xlu0 %v3426, 16
      %v3527 = vpop.permute.xlu0 %3526
      %3528 = vrot.lane.b32.xlu0 %v3427, 16
      %v3529 = vpop.permute.xlu0 %3528
      %3530 = vrot.lane.b32.xlu0 %v3428, 16
      %v3531 = vpop.permute.xlu0 %3530
      %3532 = vrot.lane.b32.xlu0 %v3429, 16
      %v3533 = vpop.permute.xlu0 %3532
      %3534 = vrot.lane.b32.xlu0 %v3434, 16
      %v3535 = vpop.permute.xlu0 %3534
      %3536 = vrot.lane.b32.xlu0 %v3435, 16
      %v3537 = vpop.permute.xlu0 %3536
      %3538 = vrot.lane.b32.xlu0 %v3436, 16
      %v3539 = vpop.permute.xlu0 %3538
      %3540 = vrot.lane.b32.xlu0 %v3437, 16
      %v3541 = vpop.permute.xlu0 %3540
      %3542 = vrot.lane.b32.xlu0 %v3442, 16
      %v3543 = vpop.permute.xlu0 %3542
      %3544 = vrot.lane.b32.xlu0 %v3443, 16
      %v3545 = vpop.permute.xlu0 %3544
      %3546 = vrot.lane.b32.xlu0 %v3444, 16
      %v3547 = vpop.permute.xlu0 %3546
      %3548 = vrot.lane.b32.xlu0 %v3445, 16
      %v3549 = vpop.permute.xlu0 %3548
      %3614 = vrot.lane.b32.xlu0 %v3390, 32
      %v3615 = vpop.permute.xlu0 %3614
      %3616 = vrot.lane.b32.xlu0 %v3391, 32
      %v3617 = vpop.permute.xlu0 %3616
      %3618 = vrot.lane.b32.xlu0 %v3392, 32
      %v3619 = vpop.permute.xlu0 %3618
      %3620 = vrot.lane.b32.xlu0 %v3393, 32
      %v3621 = vpop.permute.xlu0 %3620
      %3622 = vrot.lane.b32.xlu0 %v3398, 32
      %v3623 = vpop.permute.xlu0 %3622
      %3624 = vrot.lane.b32.xlu0 %v3399, 32
      %v3625 = vpop.permute.xlu0 %3624
      %3626 = vrot.lane.b32.xlu0 %v3400, 32
      %v3627 = vpop.permute.xlu0 %3626
      %3628 = vrot.lane.b32.xlu0 %v3401, 32
      %v3629 = vpop.permute.xlu0 %3628
      %3630 = vrot.lane.b32.xlu0 %v3406, 32
      %v3631 = vpop.permute.xlu0 %3630
      %3632 = vrot.lane.b32.xlu0 %v3407, 32
      %v3633 = vpop.permute.xlu0 %3632
      %3634 = vrot.lane.b32.xlu0 %v3408, 32
      %v3635 = vpop.permute.xlu0 %3634
      %3636 = vrot.lane.b32.xlu0 %v3409, 32
      %v3637 = vpop.permute.xlu0 %3636
      %3638 = vrot.lane.b32.xlu0 %v3414, 32
      %v3639 = vpop.permute.xlu0 %3638
      %3640 = vrot.lane.b32.xlu0 %v3415, 32
      %v3641 = vpop.permute.xlu0 %3640
      %3642 = vrot.lane.b32.xlu0 %v3416, 32
      %v3643 = vpop.permute.xlu0 %3642
      %3644 = vrot.lane.b32.xlu0 %v3417, 32
      %v3645 = vpop.permute.xlu0 %3644
      %3646 = vrot.lane.b32.xlu0 %v3422, 32
      %v3647 = vpop.permute.xlu0 %3646
      %3648 = vrot.lane.b32.xlu0 %v3423, 32
      %v3649 = vpop.permute.xlu0 %3648
      %3650 = vrot.lane.b32.xlu0 %v3424, 32
      %v3651 = vpop.permute.xlu0 %3650
      %3652 = vrot.lane.b32.xlu0 %v3425, 32
      %v3653 = vpop.permute.xlu0 %3652
      %3654 = vrot.lane.b32.xlu0 %v3430, 32
      %v3655 = vpop.permute.xlu0 %3654
      %3656 = vrot.lane.b32.xlu0 %v3431, 32
      %v3657 = vpop.permute.xlu0 %3656
      %3658 = vrot.lane.b32.xlu0 %v3432, 32
      %v3659 = vpop.permute.xlu0 %3658
      %3660 = vrot.lane.b32.xlu0 %v3433, 32
      %v3661 = vpop.permute.xlu0 %3660
      %3662 = vrot.lane.b32.xlu0 %v3438, 32
      %v3663 = vpop.permute.xlu0 %3662
      %3664 = vrot.lane.b32.xlu0 %v3439, 32
      %v3665 = vpop.permute.xlu0 %3664
      %3666 = vrot.lane.b32.xlu0 %v3440, 32
      %v3667 = vpop.permute.xlu0 %3666
      %3668 = vrot.lane.b32.xlu0 %v3441, 32
      %v3669 = vpop.permute.xlu0 %3668
      %3670 = vrot.lane.b32.xlu0 %v3446, 32
      %v3671 = vpop.permute.xlu0 %3670
      %3672 = vrot.lane.b32.xlu0 %v3447, 32
      %v3673 = vpop.permute.xlu0 %3672
      %3674 = vrot.lane.b32.xlu0 %v3448, 32
      %v3675 = vpop.permute.xlu0 %3674
      %3676 = vrot.lane.b32.xlu0 %v3449, 32
      %v3677 = vpop.permute.xlu0 %3676
      %3714 = vrot.lane.b32.xlu0 %v3394, 48
      %v3715 = vpop.permute.xlu0 %3714
      %3716 = vrot.lane.b32.xlu0 %v3395, 48
      %v3717 = vpop.permute.xlu0 %3716
      %3718 = vrot.lane.b32.xlu0 %v3396, 48
      %v3719 = vpop.permute.xlu0 %3718
      %3720 = vrot.lane.b32.xlu0 %v3397, 48
      %v3721 = vpop.permute.xlu0 %3720
      %3722 = vrot.lane.b32.xlu0 %v3402, 48
      %v3723 = vpop.permute.xlu0 %3722
      %3724 = vrot.lane.b32.xlu0 %v3403, 48
      %v3725 = vpop.permute.xlu0 %3724
      %3726 = vrot.lane.b32.xlu0 %v3404, 48
      %v3727 = vpop.permute.xlu0 %3726
      %3728 = vrot.lane.b32.xlu0 %v3405, 48
      %v3729 = vpop.permute.xlu0 %3728
      %3730 = vrot.lane.b32.xlu0 %v3410, 48
      %v3731 = vpop.permute.xlu0 %3730
      %3732 = vrot.lane.b32.xlu0 %v3411, 48
      %v3733 = vpop.permute.xlu0 %3732
      %3734 = vrot.lane.b32.xlu0 %v3412, 48
      %v3735 = vpop.permute.xlu0 %3734
      %3736 = vrot.lane.b32.xlu0 %v3413, 48
      %v3737 = vpop.permute.xlu0 %3736
      %3738 = vrot.lane.b32.xlu0 %v3418, 48
      %v3739 = vpop.permute.xlu0 %3738
      %3740 = vrot.lane.b32.xlu0 %v3419, 48
      %v3741 = vpop.permute.xlu0 %3740
      %3742 = vrot.lane.b32.xlu0 %v3420, 48
      %v3743 = vpop.permute.xlu0 %3742
      %3744 = vrot.lane.b32.xlu0 %v3421, 48
      %v3745 = vpop.permute.xlu0 %3744
      %3746 = vrot.lane.b32.xlu0 %v3426, 48
      %v3747 = vpop.permute.xlu0 %3746
      %3748 = vrot.lane.b32.xlu0 %v3427, 48
      %v3749 = vpop.permute.xlu0 %3748
      %3750 = vrot.lane.b32.xlu0 %v3428, 48
      %v3751 = vpop.permute.xlu0 %3750
      %3752 = vrot.lane.b32.xlu0 %v3429, 48
      %v3753 = vpop.permute.xlu0 %3752
      %3754 = vrot.lane.b32.xlu0 %v3434, 48
      %v3755 = vpop.permute.xlu0 %3754
      %3756 = vrot.lane.b32.xlu0 %v3435, 48
      %v3757 = vpop.permute.xlu0 %3756
      %3758 = vrot.lane.b32.xlu0 %v3436, 48
      %v3759 = vpop.permute.xlu0 %3758
      %3760 = vrot.lane.b32.xlu0 %v3437, 48
      %v3761 = vpop.permute.xlu0 %3760
      %3762 = vrot.lane.b32.xlu0 %v3442, 48
      %v3763 = vpop.permute.xlu0 %3762
      %3764 = vrot.lane.b32.xlu0 %v3443, 48
      %v3765 = vpop.permute.xlu0 %3764
      %3766 = vrot.lane.b32.xlu0 %v3444, 48
      %v3767 = vpop.permute.xlu0 %3766
      %3768 = vrot.lane.b32.xlu0 %v3445, 48
      %v3769 = vpop.permute.xlu0 %3768
      %3770 = vrot.lane.b32.xlu0 %v3450, 48
      %v3771 = vpop.permute.xlu0 %3770
      %3772 = vrot.lane.b32.xlu0 %v3451, 48
      %v3773 = vpop.permute.xlu0 %3772
      %3774 = vrot.lane.b32.xlu0 %v3452, 48
      %v3775 = vpop.permute.xlu0 %3774
      %3776 = vrot.lane.b32.xlu0 %v3453, 48
      %v3777 = vpop.permute.xlu0 %3776
      %3811 = vrot.lane.b32.xlu0 %v3398, 64
      %v3812 = vpop.permute.xlu0 %3811
      %3813 = vrot.lane.b32.xlu0 %v3399, 64
      %v3814 = vpop.permute.xlu0 %3813
      %3815 = vrot.lane.b32.xlu0 %v3400, 64
      %v3816 = vpop.permute.xlu0 %3815
      %3817 = vrot.lane.b32.xlu0 %v3401, 64
      %v3818 = vpop.permute.xlu0 %3817
      %3819 = vrot.lane.b32.xlu0 %v3406, 64
      %v3820 = vpop.permute.xlu0 %3819
      %3821 = vrot.lane.b32.xlu0 %v3407, 64
      %v3822 = vpop.permute.xlu0 %3821
      %3823 = vrot.lane.b32.xlu0 %v3408, 64
      %v3824 = vpop.permute.xlu0 %3823
      %3825 = vrot.lane.b32.xlu0 %v3409, 64
      %v3826 = vpop.permute.xlu0 %3825
      %3827 = vrot.lane.b32.xlu0 %v3414, 64
      %v3828 = vpop.permute.xlu0 %3827
      %3829 = vrot.lane.b32.xlu0 %v3415, 64
      %v3830 = vpop.permute.xlu0 %3829
      %3831 = vrot.lane.b32.xlu0 %v3416, 64
      %v3832 = vpop.permute.xlu0 %3831
      %3833 = vrot.lane.b32.xlu0 %v3417, 64
      %v3834 = vpop.permute.xlu0 %3833
      %3835 = vrot.lane.b32.xlu0 %v3422, 64
      %v3836 = vpop.permute.xlu0 %3835
      %3837 = vrot.lane.b32.xlu0 %v3423, 64
      %v3838 = vpop.permute.xlu0 %3837
      %3839 = vrot.lane.b32.xlu0 %v3424, 64
      %v3840 = vpop.permute.xlu0 %3839
      %3841 = vrot.lane.b32.xlu0 %v3425, 64
      %v3842 = vpop.permute.xlu0 %3841
      %3843 = vrot.lane.b32.xlu0 %v3430, 64
      %v3844 = vpop.permute.xlu0 %3843
      %3845 = vrot.lane.b32.xlu0 %v3431, 64
      %v3846 = vpop.permute.xlu0 %3845
      %3847 = vrot.lane.b32.xlu0 %v3432, 64
      %v3848 = vpop.permute.xlu0 %3847
      %3849 = vrot.lane.b32.xlu0 %v3433, 64
      %v3850 = vpop.permute.xlu0 %3849
      %3851 = vrot.lane.b32.xlu0 %v3438, 64
      %v3852 = vpop.permute.xlu0 %3851
      %3853 = vrot.lane.b32.xlu0 %v3439, 64
      %v3854 = vpop.permute.xlu0 %3853
      %3855 = vrot.lane.b32.xlu0 %v3440, 64
      %v3856 = vpop.permute.xlu0 %3855
      %3857 = vrot.lane.b32.xlu0 %v3441, 64
      %v3858 = vpop.permute.xlu0 %3857
      %3859 = vrot.lane.b32.xlu0 %v3446, 64
      %v3860 = vpop.permute.xlu0 %3859
      %3861 = vrot.lane.b32.xlu0 %v3447, 64
      %v3862 = vpop.permute.xlu0 %3861
      %3863 = vrot.lane.b32.xlu0 %v3448, 64
      %v3864 = vpop.permute.xlu0 %3863
      %3865 = vrot.lane.b32.xlu0 %v3449, 64
      %v3866 = vpop.permute.xlu0 %3865
      %3867 = vrot.lane.b32.xlu0 0.0, 64
      %v3868 = vpop.permute.xlu0 %3867
      %v3898 = vsel %vm1056, 0.0, %v3487
      %v3899 = vsel %vm1056, 0.0, %v3489
      %v3900 = vsel %vm1056, 0.0, %v3491
      %v3901 = vsel %vm1056, 0.0, %v3493
      %v3902 = vsel %vm1056, %v3390, %v3495
      %v3903 = vsel %vm1056, %v3391, %v3497
      %v3904 = vsel %vm1056, %v3392, %v3499
      %v3905 = vsel %vm1056, %v3393, %v3501
      %v3906 = vsel %vm1056, %v3398, %v3503
      %v3907 = vsel %vm1056, %v3399, %v3505
      %v3908 = vsel %vm1056, %v3400, %v3507
      %v3909 = vsel %vm1056, %v3401, %v3509
      %v3910 = vsel %vm1056, %v3406, %v3511
      %v3911 = vsel %vm1056, %v3407, %v3513
      %v3912 = vsel %vm1056, %v3408, %v3515
      %v3913 = vsel %vm1056, %v3409, %v3517
      %v3914 = vsel %vm1056, %v3414, %v3519
      %v3915 = vsel %vm1056, %v3415, %v3521
      %v3916 = vsel %vm1056, %v3416, %v3523
      %v3917 = vsel %vm1056, %v3417, %v3525
      %v3918 = vsel %vm1056, %v3422, %v3527
      %v3919 = vsel %vm1056, %v3423, %v3529
      %v3920 = vsel %vm1056, %v3424, %v3531
      %v3921 = vsel %vm1056, %v3425, %v3533
      %v3922 = vsel %vm1056, %v3430, %v3535
      %v3923 = vsel %vm1056, %v3431, %v3537
      %v3924 = vsel %vm1056, %v3432, %v3539
      %v3925 = vsel %vm1056, %v3433, %v3541
      %v3926 = vsel %vm1056, %v3438, %v3543
      %v3927 = vsel %vm1056, %v3439, %v3545
      %v3928 = vsel %vm1056, %v3440, %v3547
      %v3929 = vsel %vm1056, %v3441, %v3549
      %v3930 = vsel %vm1125, %v3898, %v3615
      %v3931 = vsel %vm1125, %v3899, %v3617
      %v3932 = vsel %vm1125, %v3900, %v3619
      %v3933 = vsel %vm1125, %v3901, %v3621
      %v3934 = vsel %vm1125, %v3902, %v3623
      %v3935 = vsel %vm1125, %v3903, %v3625
      %v3936 = vsel %vm1125, %v3904, %v3627
      %v3937 = vsel %vm1125, %v3905, %v3629
      %v3938 = vsel %vm1125, %v3906, %v3631
      %v3939 = vsel %vm1125, %v3907, %v3633
      %v3940 = vsel %vm1125, %v3908, %v3635
      %v3941 = vsel %vm1125, %v3909, %v3637
      %v3942 = vsel %vm1125, %v3910, %v3639
      %v3943 = vsel %vm1125, %v3911, %v3641
      %v3944 = vsel %vm1125, %v3912, %v3643
      %v3945 = vsel %vm1125, %v3913, %v3645
      %v3946 = vsel %vm1125, %v3914, %v3647
      %v3947 = vsel %vm1125, %v3915, %v3649
      %v3948 = vsel %vm1125, %v3916, %v3651
      %v3949 = vsel %vm1125, %v3917, %v3653
      %v3950 = vsel %vm1125, %v3918, %v3655
      %v3951 = vsel %vm1125, %v3919, %v3657
      %v3952 = vsel %vm1125, %v3920, %v3659
      %v3953 = vsel %vm1125, %v3921, %v3661
      %v3954 = vsel %vm1125, %v3922, %v3663
      %v3955 = vsel %vm1125, %v3923, %v3665
      %v3956 = vsel %vm1125, %v3924, %v3667
      %v3957 = vsel %vm1125, %v3925, %v3669
      %v3958 = vsel %vm1125, %v3926, %v3671
      %v3959 = vsel %vm1125, %v3927, %v3673
      %v3960 = vsel %vm1125, %v3928, %v3675
      %v3961 = vsel %vm1125, %v3929, %v3677
      %v3962 = vsel %vm1200, %v3930, %v3715
      %v3963 = vsel %vm1200, %v3931, %v3717
      %v3964 = vsel %vm1200, %v3932, %v3719
      %v3965 = vsel %vm1200, %v3933, %v3721
      %v3966 = vsel %vm1200, %v3934, %v3723
      %v3967 = vsel %vm1200, %v3935, %v3725
      %v3968 = vsel %vm1200, %v3936, %v3727
      %v3969 = vsel %vm1200, %v3937, %v3729
      %v3970 = vsel %vm1200, %v3938, %v3731
      %v3971 = vsel %vm1200, %v3939, %v3733
      %v3972 = vsel %vm1200, %v3940, %v3735
      %v3973 = vsel %vm1200, %v3941, %v3737
      %v3974 = vsel %vm1200, %v3942, %v3739
      %v3975 = vsel %vm1200, %v3943, %v3741
      %v3976 = vsel %vm1200, %v3944, %v3743
      %v3977 = vsel %vm1200, %v3945, %v3745
      %v3978 = vsel %vm1200, %v3946, %v3747
      %v3979 = vsel %vm1200, %v3947, %v3749
      %v3980 = vsel %vm1200, %v3948, %v3751
      %v3981 = vsel %vm1200, %v3949, %v3753
      %v3982 = vsel %vm1200, %v3950, %v3755
      %v3983 = vsel %vm1200, %v3951, %v3757
      %v3984 = vsel %vm1200, %v3952, %v3759
      %v3985 = vsel %vm1200, %v3953, %v3761
      %v3986 = vsel %vm1200, %v3954, %v3763
      %v3987 = vsel %vm1200, %v3955, %v3765
      %v3988 = vsel %vm1200, %v3956, %v3767
      %v3989 = vsel %vm1200, %v3957, %v3769
      %v3990 = vsel %vm1200, %v3958, %v3771
      %v3991 = vsel %vm1200, %v3959, %v3773
      %v3992 = vsel %vm1200, %v3960, %v3775
      %v3993 = vsel %vm1200, %v3961, %v3777
      %vm3994 = vcmask 523264
      %v3995 = vsel %vm3994, %v3962, %v3812
      %v3996 = vsel %vm3994, %v3963, %v3814
      %v3997 = vsel %vm3994, %v3964, %v3816
      %v3998 = vsel %vm3994, %v3965, %v3818
      %v3999 = vsel %vm3994, %v3966, %v3820
      %v4000 = vsel %vm3994, %v3967, %v3822
      %v4001 = vsel %vm3994, %v3968, %v3824
      %v4002 = vsel %vm3994, %v3969, %v3826
      %v4003 = vsel %vm3994, %v3970, %v3828
      %v4004 = vsel %vm3994, %v3971, %v3830
      %v4005 = vsel %vm3994, %v3972, %v3832
      %v4006 = vsel %vm3994, %v3973, %v3834
      %v4007 = vsel %vm3994, %v3974, %v3836
      %v4008 = vsel %vm3994, %v3975, %v3838
      %v4009 = vsel %vm3994, %v3976, %v3840
      %v4010 = vsel %vm3994, %v3977, %v3842
      %v4011 = vsel %vm3994, %v3978, %v3844
      %v4012 = vsel %vm3994, %v3979, %v3846
      %v4013 = vsel %vm3994, %v3980, %v3848
      %v4014 = vsel %vm3994, %v3981, %v3850
      %v4015 = vsel %vm3994, %v3982, %v3852
      %v4016 = vsel %vm3994, %v3983, %v3854
      %v4017 = vsel %vm3994, %v3984, %v3856
      %v4018 = vsel %vm3994, %v3985, %v3858
      %v4019 = vsel %vm3994, %v3986, %v3860
      %v4020 = vsel %vm3994, %v3987, %v3862
      %v4021 = vsel %vm3994, %v3988, %v3864
      %v4022 = vsel %vm3994, %v3989, %v3866
      %v4023 = vsel %vm3994, %v3990, %v3868
      %v4024 = vsel %vm3994, %v3991, %v3868
      %v4025 = vsel %vm3994, %v3992, %v3868
      %v4026 = vsel %vm3994, %v3993, %v3868
      %v4027 = vld [vmem:[%s3] sm:$0xff]
      %v4028 = vld [vmem:[%s3 + $0x8] sm:$0xff]
      %v4029 = vld [vmem:[%s3 + $0x10] sm:$0xff]
      %v4030 = vld [vmem:[%s3 + $0x18] sm:$0xff]
      %v4031 = vld [vmem:[%s3 + $0x20] sm:$0xff]
      %v4032 = vld [vmem:[%s3 + $0x28] sm:$0xff]
      %v4033 = vld [vmem:[%s3 + $0x30] sm:$0xff]
      %v4034 = vld [vmem:[%s3 + $0x38] sm:$0xff]
      %v4035 = vld [vmem:[%s3 + $0x40] sm:$0xff]
      %v4036 = vld [vmem:[%s3 + $0x48] sm:$0xff]
      %vm4037 = vcmask 654336
      %v4039 = vsel %vm4037, %v3995, 0
      %v4042 = vsel %vm4037, %v3996, 0
      %v4045 = vsel %vm4037, %v3997, 0
      %v4048 = vsel %vm4037, %v3998, 0
      %v4051 = vsel %vm4037, %v3999, 0
      %v4054 = vsel %vm4037, %v4000, 0
      %v4057 = vsel %vm4037, %v4001, 0
      %v4060 = vsel %vm4037, %v4002, 0
      %v4063 = vsel %vm4037, %v4003, 0
      %v4066 = vsel %vm4037, %v4004, 0
      %v4069 = vsel %vm4037, %v4005, 0
      %v4072 = vsel %vm4037, %v4006, 0
      %v4075 = vsel %vm4037, %v4007, 0
      %v4078 = vsel %vm4037, %v4008, 0
      %v4081 = vsel %vm4037, %v4009, 0
      %v4084 = vsel %vm4037, %v4010, 0
      %v4087 = vsel %vm4037, %v4011, 0
      %v4090 = vsel %vm4037, %v4012, 0
      %v4093 = vsel %vm4037, %v4013, 0
      %v4096 = vsel %vm4037, %v4014, 0
      %v4099 = vsel %vm4037, %v4015, 0
      %v4102 = vsel %vm4037, %v4016, 0
      %v4105 = vsel %vm4037, %v4017, 0
      %v4108 = vsel %vm4037, %v4018, 0
      %v4111 = vsel %vm4037, %v4019, 0
      %v4114 = vsel %vm4037, %v4020, 0
      %v4117 = vsel %vm4037, %v4021, 0
      %v4120 = vsel %vm4037, %v4022, 0
      %v4123 = vsel %vm4037, %v4023, 0
      %v4126 = vsel %vm4037, %v4024, 0
      %v4129 = vsel %vm4037, %v4025, 0
      %v4132 = vsel %vm4037, %v4026, 0
      %4134 = vmatprep.subr.mxu0 0.0
      %4135 = vmatpush1.msra.mxu0 %v4027
      %4136 = vmatprep.subr.mxu0 0.0
      %4137 = vmatpush1.msra.mxu0 %v4028
      %4138 = vmatprep.subr.mxu0 0.0
      %4139 = vmatpush1.msra.mxu0 %v4029
      %4140 = vmatprep.subr.mxu0 0.0
      %4141 = vmatpush1.msra.mxu0 %v4030
      %4142 = vmatprep.subr.mxu0 0.0
      %4143 = vmatpush1.msra.mxu0 %v4031
      %4144 = vmatprep.subr.mxu0 0.0
      %4145 = vmatpush1.msra.mxu0 %v4032
      %4146 = vmatprep.subr.mxu0 0.0
      %4147 = vmatpush1.msra.mxu0 %v4033
      %4148 = vmatprep.subr.mxu0 0.0
      %4149 = vmatpush1.msra.mxu0 %v4034
      %4150 = vmatprep.subr.mxu0 0.0
      %4151 = vmatpush1.msra.mxu0 %v4035
      %4152 = vmatprep.subr.mxu0 0.0
      %4153 = vmatpush1.msra.mxu0 %v4036
      %4154 = vmatprep.subr.mxu0 0.0
      %4155 = vmatpush1.msra.mxu0 0.0
      %4156 = vmatprep.subr.mxu0 0.0
      %4157 = vmatpush1.msra.mxu0 0.0
      %4158 = vmatprep.subr.mxu0 0.0
      %4159 = vmatpush1.msra.mxu0 0.0
      %4160 = vmatprep.subr.mxu0 0.0
      %4161 = vmatpush1.msra.mxu0 0.0
      %4162 = vmatprep.subr.mxu0 0.0
      %4163 = vmatpush1.msra.mxu0 0.0
      %4164 = vmatprep.subr.mxu0 0.0
      %4165 = vmatpush1.msra.mxu0 0.0
      %4166 = vmatprep.subr.mxu0 0.0
      %4167 = vmatpush1.msra.mxu0 0.0
      %4168 = vmatprep.subr.mxu0 0.0
      %4169 = vmatpush1.msra.mxu0 0.0
      %4170 = vmatprep.subr.mxu0 0.0
      %4171 = vmatpush1.msra.mxu0 0.0
      %4172 = vmatprep.subr.mxu0 0.0
      %4173 = vmatpush1.msra.mxu0 0.0
      %4174 = vmatprep.subr.mxu0 0.0
      %4175 = vmatpush1.msra.mxu0 0.0
      %4176 = vmatprep.subr.mxu0 0.0
      %4177 = vmatpush1.msra.mxu0 0.0
      %4178 = vmatprep.subr.mxu0 0.0
      %4179 = vmatpush1.msra.mxu0 0.0
      %4180 = vmatprep.subr.mxu0 0.0
      %4181 = vmatpush1.msra.mxu0 0.0
      %4182 = vmatprep.subr.mxu0 0.0
      %4183 = vmatpush1.msra.mxu0 0.0
      %4184 = vmatprep.subr.mxu0 0.0
      %4185 = vmatpush1.msra.mxu0 0.0
      %4186 = vmatprep.subr.mxu0 0.0
      %4187 = vmatpush1.msra.mxu0 0.0
      %4188 = vmatprep.subr.mxu0 0.0
      %4189 = vmatpush1.msra.mxu0 0.0
      %4190 = vmatprep.subr.mxu0 0.0
      %4191 = vmatpush1.msra.mxu0 0.0
      %4192 = vmatprep.subr.mxu0 0.0
      %4193 = vmatpush1.msra.mxu0 0.0
      %4194 = vmatprep.subr.mxu0 0.0
      %4195 = vmatpush1.msra.mxu0 0.0
      %4196 = vmatprep.subr.mxu0 0.0
      %4197 = vmatpush1.msra.mxu0 0.0
      %4198 = vmatprep.mubr.f32.mxu0 0.0
      %4199 = vmatmul.mubr.f32.gmra.mrb[0].mxu0 %v4039
      %v4200 = vpop.f32.mrb[0].mxu0
      %v4201 = vadd.f32 0.0, %v4200
      %v4202 = vpop.f32.mrb[0].mxu0
      %4203 = vmatprep.mubr.f32.mxu0 0.0
      %4204 = vmatmul.mubr.f32.gmra.mrb[0].mxu0 %v4042
      %v4205 = vpop.f32.mrb[0].mxu0
      %v4206 = vadd.f32 0.0, %v4205
      %v4207 = vpop.f32.mrb[0].mxu0
      %4208 = vmatprep.mubr.f32.mxu0 0.0
      %4209 = vmatmul.mubr.f32.gmra.mrb[0].mxu0 %v4045
      %v4210 = vpop.f32.mrb[0].mxu0
      %v4211 = vadd.f32 0.0, %v4210
      %v4212 = vpop.f32.mrb[0].mxu0
      %4213 = vmatprep.mubr.f32.mxu0 0.0
      %4214 = vmatmul.mubr.f32.gmra.mrb[0].mxu0 %v4048
      %v4215 = vpop.f32.mrb[0].mxu0
      %v4216 = vadd.f32 0.0, %v4215
      %v4217 = vpop.f32.mrb[0].mxu0
      %4218 = vmatprep.mubr.f32.mxu0 0.0
      %4219 = vmatmul.mubr.f32.gmra.mrb[0].mxu0 %v4051
      %v4220 = vpop.f32.mrb[0].mxu0
      %v4221 = vadd.f32 0.0, %v4220
      %v4222 = vpop.f32.mrb[0].mxu0
      %4223 = vmatprep.mubr.f32.mxu0 0.0
      %4224 = vmatmul.mubr.f32.gmra.mrb[0].mxu0 %v4054
      %v4225 = vpop.f32.mrb[0].mxu0
      %v4226 = vadd.f32 0.0, %v4225
      %v4227 = vpop.f32.mrb[0].mxu0
      %4228 = vmatprep.mubr.f32.mxu0 0.0
      %4229 = vmatmul.mubr.f32.gmra.mrb[0].mxu0 %v4057
      %v4230 = vpop.f32.mrb[0].mxu0
      %v4231 = vadd.f32 0.0, %v4230
      %v4232 = vpop.f32.mrb[0].mxu0
      %4233 = vmatprep.mubr.f32.mxu0 0.0
      %4234 = vmatmul.mubr.f32.gmra.mrb[0].mxu0 %v4060
      %v4235 = vpop.f32.mrb[0].mxu0
      %v4236 = vadd.f32 0.0, %v4235
      %v4237 = vpop.f32.mrb[0].mxu0
      %4238 = vmatprep.mubr.f32.mxu0 0.0
      %4239 = vmatmul.mubr.f32.gmra.mrb[0].mxu0 %v4063
      %v4240 = vpop.f32.mrb[0].mxu0
      %v4241 = vadd.f32 0.0, %v4240
      %v4242 = vpop.f32.mrb[0].mxu0
      %4243 = vmatprep.mubr.f32.mxu0 0.0
      %4244 = vmatmul.mubr.f32.gmra.mrb[0].mxu0 %v4066
      %v4245 = vpop.f32.mrb[0].mxu0
      %v4246 = vadd.f32 0.0, %v4245
      %v4247 = vpop.f32.mrb[0].mxu0
      %4248 = vmatprep.mubr.f32.mxu0 0.0
      %4249 = vmatmul.mubr.f32.gmra.mrb[0].mxu0 %v4069
      %v4250 = vpop.f32.mrb[0].mxu0
      %v4251 = vadd.f32 0.0, %v4250
      %v4252 = vpop.f32.mrb[0].mxu0
      %4253 = vmatprep.mubr.f32.mxu0 0.0
      %4254 = vmatmul.mubr.f32.gmra.mrb[0].mxu0 %v4072
      %v4255 = vpop.f32.mrb[0].mxu0
      %v4256 = vadd.f32 0.0, %v4255
      %v4257 = vpop.f32.mrb[0].mxu0
      %4258 = vmatprep.mubr.f32.mxu0 0.0
      %4259 = vmatmul.mubr.f32.gmra.mrb[0].mxu0 %v4075
      %v4260 = vpop.f32.mrb[0].mxu0
      %v4261 = vadd.f32 0.0, %v4260
      %v4262 = vpop.f32.mrb[0].mxu0
      %4263 = vmatprep.mubr.f32.mxu0 0.0
      %4264 = vmatmul.mubr.f32.gmra.mrb[0].mxu0 %v4078
      %v4265 = vpop.f32.mrb[0].mxu0
      %v4266 = vadd.f32 0.0, %v4265
      %v4267 = vpop.f32.mrb[0].mxu0
      %4268 = vmatprep.mubr.f32.mxu0 0.0
      %4269 = vmatmul.mubr.f32.gmra.mrb[0].mxu0 %v4081
      %v4270 = vpop.f32.mrb[0].mxu0
      %v4271 = vadd.f32 0.0, %v4270
      %v4272 = vpop.f32.mrb[0].mxu0
      %4273 = vmatprep.mubr.f32.mxu0 0.0
      %4274 = vmatmul.mubr.f32.gmra.mrb[0].mxu0 %v4084
      %v4275 = vpop.f32.mrb[0].mxu0
      %v4276 = vadd.f32 0.0, %v4275
      %v4277 = vpop.f32.mrb[0].mxu0
      %4278 = vmatprep.mubr.f32.mxu0 0.0
      %4279 = vmatmul.mubr.f32.gmra.mrb[0].mxu0 %v4087
      %v4280 = vpop.f32.mrb[0].mxu0
      %v4281 = vadd.f32 0.0, %v4280
      %v4282 = vpop.f32.mrb[0].mxu0
      %4283 = vmatprep.mubr.f32.mxu0 0.0
      %4284 = vmatmul.mubr.f32.gmra.mrb[0].mxu0 %v4090
      %v4285 = vpop.f32.mrb[0].mxu0
      %v4286 = vadd.f32 0.0, %v4285
      %v4287 = vpop.f32.mrb[0].mxu0
      %4288 = vmatprep.mubr.f32.mxu0 0.0
      %4289 = vmatmul.mubr.f32.gmra.mrb[0].mxu0 %v4093
      %v4290 = vpop.f32.mrb[0].mxu0
      %v4291 = vadd.f32 0.0, %v4290
      %v4292 = vpop.f32.mrb[0].mxu0
      %4293 = vmatprep.mubr.f32.mxu0 0.0
      %4294 = vmatmul.mubr.f32.gmra.mrb[0].mxu0 %v4096
      %v4295 = vpop.f32.mrb[0].mxu0
      %v4296 = vadd.f32 0.0, %v4295
      %v4297 = vpop.f32.mrb[0].mxu0
      %4298 = vmatprep.mubr.f32.mxu0 0.0
      %4299 = vmatmul.mubr.f32.gmra.mrb[0].mxu0 %v4099
      %v4300 = vpop.f32.mrb[0].mxu0
      %v4301 = vadd.f32 0.0, %v4300
      %v4302 = vpop.f32.mrb[0].mxu0
      %4303 = vmatprep.mubr.f32.mxu0 0.0
      %4304 = vmatmul.mubr.f32.gmra.mrb[0].mxu0 %v4102
      %v4305 = vpop.f32.mrb[0].mxu0
      %v4306 = vadd.f32 0.0, %v4305
      %v4307 = vpop.f32.mrb[0].mxu0
      %4308 = vmatprep.mubr.f32.mxu0 0.0
      %4309 = vmatmul.mubr.f32.gmra.mrb[0].mxu0 %v4105
      %v4310 = vpop.f32.mrb[0].mxu0
      %v4311 = vadd.f32 0.0, %v4310
      %v4312 = vpop.f32.mrb[0].mxu0
      %4313 = vmatprep.mubr.f32.mxu0 0.0
      %4314 = vmatmul.mubr.f32.gmra.mrb[0].mxu0 %v4108
      %v4315 = vpop.f32.mrb[0].mxu0
      %v4316 = vadd.f32 0.0, %v4315
      %v4317 = vpop.f32.mrb[0].mxu0
      %4318 = vmatprep.mubr.f32.mxu0 0.0
      %4319 = vmatmul.mubr.f32.gmra.mrb[0].mxu0 %v4111
      %v4320 = vpop.f32.mrb[0].mxu0
      %v4321 = vadd.f32 0.0, %v4320
      %v4322 = vpop.f32.mrb[0].mxu0
      %4323 = vmatprep.mubr.f32.mxu0 0.0
      %4324 = vmatmul.mubr.f32.gmra.mrb[0].mxu0 %v4114
      %v4325 = vpop.f32.mrb[0].mxu0
      %v4326 = vadd.f32 0.0, %v4325
      %v4327 = vpop.f32.mrb[0].mxu0
      %4328 = vmatprep.mubr.f32.mxu0 0.0
      %4329 = vmatmul.mubr.f32.gmra.mrb[0].mxu0 %v4117
      %v4330 = vpop.f32.mrb[0].mxu0
      %v4331 = vadd.f32 0.0, %v4330
      %v4332 = vpop.f32.mrb[0].mxu0
      %4333 = vmatprep.mubr.f32.mxu0 0.0
      %4334 = vmatmul.mubr.f32.gmra.mrb[0].mxu0 %v4120
      %v4335 = vpop.f32.mrb[0].mxu0
      %v4336 = vadd.f32 0.0, %v4335
      %v4337 = vpop.f32.mrb[0].mxu0
      %4338 = vmatprep.mubr.f32.mxu0 0.0
      %4339 = vmatmul.mubr.f32.gmra.mrb[0].mxu0 %v4123
      %v4340 = vpop.f32.mrb[0].mxu0
      %v4341 = vadd.f32 0.0, %v4340
      %v4342 = vpop.f32.mrb[0].mxu0
      %4343 = vmatprep.mubr.f32.mxu0 0.0
      %4344 = vmatmul.mubr.f32.gmra.mrb[0].mxu0 %v4126
      %v4345 = vpop.f32.mrb[0].mxu0
      %v4346 = vadd.f32 0.0, %v4345
      %v4347 = vpop.f32.mrb[0].mxu0
      %4348 = vmatprep.mubr.f32.mxu0 0.0
      %4349 = vmatmul.mubr.f32.gmra.mrb[0].mxu0 %v4129
      %v4350 = vpop.f32.mrb[0].mxu0
      %v4351 = vadd.f32 0.0, %v4350
      %v4352 = vpop.f32.mrb[0].mxu0
      %4353 = vmatprep.mubr.f32.mxu0 0.0
      %4354 = vmatmul.mubr.f32.gmra.mrb[0].mxu0 %v4132
      %v4355 = vpop.f32.mrb[0].mxu0
      %v4356 = vadd.f32 0.0, %v4355
      %v4357 = vpop.f32.mrb[0].mxu0
      %4358 = vdwg.mxu0
      %v4359 = vld [vmem:[%s4] sm:$0x1]
      %v4392 = vrot.slane %v4201, 7
      %v4393 = vrot.slane %v4206, 7
      %v4394 = vsel %vm1879, %v4392, %v4393
      %v4395 = vrot.slane %v4211, 7
      %v4396 = vsel %vm1879, %v4393, %v4395
      %v4397 = vrot.slane %v4216, 7
      %v4398 = vsel %vm1879, %v4395, %v4397
      %v4399 = vrot.slane %v4221, 7
      %v4400 = vsel %vm1879, %v4397, %v4399
      %v4401 = vrot.slane %v4226, 7
      %v4402 = vsel %vm1879, %v4399, %v4401
      %v4403 = vrot.slane %v4231, 7
      %v4404 = vsel %vm1879, %v4401, %v4403
      %v4405 = vrot.slane %v4236, 7
      %v4406 = vsel %vm1879, %v4403, %v4405
      %v4407 = vrot.slane %v4241, 7
      %v4408 = vsel %vm1879, %v4405, %v4407
      %v4409 = vrot.slane %v4246, 7
      %v4410 = vsel %vm1879, %v4407, %v4409
      %v4411 = vrot.slane %v4251, 7
      %v4412 = vsel %vm1879, %v4409, %v4411
      %v4413 = vrot.slane %v4256, 7
      %v4414 = vsel %vm1879, %v4411, %v4413
      %v4415 = vrot.slane %v4261, 7
      %v4416 = vsel %vm1879, %v4413, %v4415
      %v4417 = vrot.slane %v4266, 7
      %v4418 = vsel %vm1879, %v4415, %v4417
      %v4419 = vrot.slane %v4271, 7
      %v4420 = vsel %vm1879, %v4417, %v4419
      %v4421 = vrot.slane %v4276, 7
      %v4422 = vsel %vm1879, %v4419, %v4421
      %v4423 = vrot.slane %v4281, 7
      %v4424 = vsel %vm1879, %v4421, %v4423
      %v4425 = vrot.slane %v4286, 7
      %v4426 = vsel %vm1879, %v4423, %v4425
      %v4427 = vrot.slane %v4291, 7
      %v4428 = vsel %vm1879, %v4425, %v4427
      %v4429 = vrot.slane %v4296, 7
      %v4430 = vsel %vm1879, %v4427, %v4429
      %v4431 = vrot.slane %v4301, 7
      %v4432 = vsel %vm1879, %v4429, %v4431
      %v4433 = vrot.slane %v4306, 7
      %v4434 = vsel %vm1879, %v4431, %v4433
      %v4435 = vrot.slane %v4311, 7
      %v4436 = vsel %vm1879, %v4433, %v4435
      %v4437 = vrot.slane %v4316, 7
      %v4438 = vsel %vm1879, %v4435, %v4437
      %v4439 = vrot.slane %v4321, 7
      %v4440 = vsel %vm1879, %v4437, %v4439
      %v4441 = vrot.slane %v4326, 7
      %v4442 = vsel %vm1879, %v4439, %v4441
      %v4443 = vrot.slane %v4331, 7
      %v4444 = vsel %vm1879, %v4441, %v4443
      %v4445 = vrot.slane %v4336, 7
      %v4446 = vsel %vm1879, %v4443, %v4445
      %v4447 = vrot.slane %v4341, 7
      %v4448 = vsel %vm1879, %v4445, %v4447
      %v4449 = vrot.slane %v4346, 7
      %v4450 = vsel %vm1879, %v4447, %v4449
      %v4451 = vrot.slane %v4351, 7
      %v4452 = vsel %vm1879, %v4449, %v4451
      %v4453 = vrot.slane %v4356, 7
      %v4454 = vsel %vm1879, %v4451, %v4453
      %v4487 = vsel %vm1879, 0.0, %v4392
      %4488 = vrot.lane.b32.xlu0 %v4201, 112
      %v4489 = vpop.permute.xlu0 %4488
      %4490 = vrot.lane.b32.xlu0 %v4206, 112
      %v4491 = vpop.permute.xlu0 %4490
      %4492 = vrot.lane.b32.xlu0 %v4211, 112
      %v4493 = vpop.permute.xlu0 %4492
      %4494 = vrot.lane.b32.xlu0 %v4216, 112
      %v4495 = vpop.permute.xlu0 %4494
      %4496 = vrot.lane.b32.xlu0 %v4221, 112
      %v4497 = vpop.permute.xlu0 %4496
      %4498 = vrot.lane.b32.xlu0 %v4226, 112
      %v4499 = vpop.permute.xlu0 %4498
      %4500 = vrot.lane.b32.xlu0 %v4231, 112
      %v4501 = vpop.permute.xlu0 %4500
      %4502 = vrot.lane.b32.xlu0 %v4236, 112
      %v4503 = vpop.permute.xlu0 %4502
      %4504 = vrot.lane.b32.xlu0 %v4241, 112
      %v4505 = vpop.permute.xlu0 %4504
      %4506 = vrot.lane.b32.xlu0 %v4246, 112
      %v4507 = vpop.permute.xlu0 %4506
      %4508 = vrot.lane.b32.xlu0 %v4251, 112
      %v4509 = vpop.permute.xlu0 %4508
      %4510 = vrot.lane.b32.xlu0 %v4256, 112
      %v4511 = vpop.permute.xlu0 %4510
      %4512 = vrot.lane.b32.xlu0 %v4261, 112
      %v4513 = vpop.permute.xlu0 %4512
      %4514 = vrot.lane.b32.xlu0 %v4266, 112
      %v4515 = vpop.permute.xlu0 %4514
      %4516 = vrot.lane.b32.xlu0 %v4271, 112
      %v4517 = vpop.permute.xlu0 %4516
      %4518 = vrot.lane.b32.xlu0 %v4276, 112
      %v4519 = vpop.permute.xlu0 %4518
      %4520 = vrot.lane.b32.xlu0 %v4281, 112
      %v4521 = vpop.permute.xlu0 %4520
      %4522 = vrot.lane.b32.xlu0 %v4286, 112
      %v4523 = vpop.permute.xlu0 %4522
      %4524 = vrot.lane.b32.xlu0 %v4291, 112
      %v4525 = vpop.permute.xlu0 %4524
      %4526 = vrot.lane.b32.xlu0 %v4296, 112
      %v4527 = vpop.permute.xlu0 %4526
      %4528 = vrot.lane.b32.xlu0 %v4301, 112
      %v4529 = vpop.permute.xlu0 %4528
      %4530 = vrot.lane.b32.xlu0 %v4306, 112
      %v4531 = vpop.permute.xlu0 %4530
      %4532 = vrot.lane.b32.xlu0 %v4311, 112
      %v4533 = vpop.permute.xlu0 %4532
      %4534 = vrot.lane.b32.xlu0 %v4316, 112
      %v4535 = vpop.permute.xlu0 %4534
      %4536 = vrot.lane.b32.xlu0 %v4321, 112
      %v4537 = vpop.permute.xlu0 %4536
      %4538 = vrot.lane.b32.xlu0 %v4326, 112
      %v4539 = vpop.permute.xlu0 %4538
      %4540 = vrot.lane.b32.xlu0 %v4331, 112
      %v4541 = vpop.permute.xlu0 %4540
      %4542 = vrot.lane.b32.xlu0 %v4336, 112
      %v4543 = vpop.permute.xlu0 %4542
      %4544 = vrot.lane.b32.xlu0 %v4341, 112
      %v4545 = vpop.permute.xlu0 %4544
      %4546 = vrot.lane.b32.xlu0 %v4346, 112
      %v4547 = vpop.permute.xlu0 %4546
      %4548 = vrot.lane.b32.xlu0 %v4351, 112
      %v4549 = vpop.permute.xlu0 %4548
      %4550 = vrot.lane.b32.xlu0 %v4356, 112
      %v4551 = vpop.permute.xlu0 %4550
      %v4584 = vadd.f32 %v4487, %v4489
      %v4585 = vadd.f32 %v4394, %v4491
      %v4586 = vadd.f32 %v4396, %v4493
      %v4587 = vadd.f32 %v4398, %v4495
      %v4588 = vadd.f32 %v4400, %v4497
      %v4589 = vadd.f32 %v4402, %v4499
      %v4590 = vadd.f32 %v4404, %v4501
      %v4591 = vadd.f32 %v4406, %v4503
      %v4592 = vadd.f32 %v4408, %v4505
      %v4593 = vadd.f32 %v4410, %v4507
      %v4594 = vadd.f32 %v4412, %v4509
      %v4595 = vadd.f32 %v4414, %v4511
      %v4596 = vadd.f32 %v4416, %v4513
      %v4597 = vadd.f32 %v4418, %v4515
      %v4598 = vadd.f32 %v4420, %v4517
      %v4599 = vadd.f32 %v4422, %v4519
      %v4600 = vadd.f32 %v4424, %v4521
      %v4601 = vadd.f32 %v4426, %v4523
      %v4602 = vadd.f32 %v4428, %v4525
      %v4603 = vadd.f32 %v4430, %v4527
      %v4604 = vadd.f32 %v4432, %v4529
      %v4605 = vadd.f32 %v4434, %v4531
      %v4606 = vadd.f32 %v4436, %v4533
      %v4607 = vadd.f32 %v4438, %v4535
      %v4608 = vadd.f32 %v4440, %v4537
      %v4609 = vadd.f32 %v4442, %v4539
      %v4610 = vadd.f32 %v4444, %v4541
      %v4611 = vadd.f32 %v4446, %v4543
      %v4612 = vadd.f32 %v4448, %v4545
      %v4613 = vadd.f32 %v4450, %v4547
      %v4614 = vadd.f32 %v4452, %v4549
      %v4615 = vadd.f32 %v4454, %v4551
      %v4648 = vrot.slane %v4584, 7
      %v4649 = vrot.slane %v4585, 7
      %v4650 = vsel %vm1879, %v4648, %v4649
      %v4651 = vrot.slane %v4586, 7
      %v4652 = vsel %vm1879, %v4649, %v4651
      %v4653 = vrot.slane %v4587, 7
      %v4654 = vsel %vm1879, %v4651, %v4653
      %v4655 = vrot.slane %v4588, 7
      %v4656 = vsel %vm1879, %v4653, %v4655
      %v4657 = vrot.slane %v4589, 7
      %v4658 = vsel %vm1879, %v4655, %v4657
      %v4659 = vrot.slane %v4590, 7
      %v4660 = vsel %vm1879, %v4657, %v4659
      %v4661 = vrot.slane %v4591, 7
      %v4662 = vsel %vm1879, %v4659, %v4661
      %v4663 = vrot.slane %v4592, 7
      %v4664 = vsel %vm1879, %v4661, %v4663
      %v4665 = vrot.slane %v4593, 7
      %v4666 = vsel %vm1879, %v4663, %v4665
      %v4667 = vrot.slane %v4594, 7
      %v4668 = vsel %vm1879, %v4665, %v4667
      %v4669 = vrot.slane %v4595, 7
      %v4670 = vsel %vm1879, %v4667, %v4669
      %v4671 = vrot.slane %v4596, 7
      %v4672 = vsel %vm1879, %v4669, %v4671
      %v4673 = vrot.slane %v4597, 7
      %v4674 = vsel %vm1879, %v4671, %v4673
      %v4675 = vrot.slane %v4598, 7
      %v4676 = vsel %vm1879, %v4673, %v4675
      %v4677 = vrot.slane %v4599, 7
      %v4678 = vsel %vm1879, %v4675, %v4677
      %v4679 = vrot.slane %v4600, 7
      %v4680 = vsel %vm1879, %v4677, %v4679
      %v4681 = vrot.slane %v4601, 7
      %v4682 = vsel %vm1879, %v4679, %v4681
      %v4683 = vrot.slane %v4602, 7
      %v4684 = vsel %vm1879, %v4681, %v4683
      %v4685 = vrot.slane %v4603, 7
      %v4686 = vsel %vm1879, %v4683, %v4685
      %v4687 = vrot.slane %v4604, 7
      %v4688 = vsel %vm1879, %v4685, %v4687
      %v4689 = vrot.slane %v4605, 7
      %v4690 = vsel %vm1879, %v4687, %v4689
      %v4691 = vrot.slane %v4606, 7
      %v4692 = vsel %vm1879, %v4689, %v4691
      %v4693 = vrot.slane %v4607, 7
      %v4694 = vsel %vm1879, %v4691, %v4693
      %v4695 = vrot.slane %v4608, 7
      %v4696 = vsel %vm1879, %v4693, %v4695
      %v4697 = vrot.slane %v4609, 7
      %v4698 = vsel %vm1879, %v4695, %v4697
      %v4699 = vrot.slane %v4610, 7
      %v4700 = vsel %vm1879, %v4697, %v4699
      %v4701 = vrot.slane %v4611, 7
      %v4702 = vsel %vm1879, %v4699, %v4701
      %v4703 = vrot.slane %v4612, 7
      %v4704 = vsel %vm1879, %v4701, %v4703
      %v4705 = vrot.slane %v4613, 7
      %v4706 = vsel %vm1879, %v4703, %v4705
      %v4707 = vrot.slane %v4614, 7
      %v4708 = vsel %vm1879, %v4705, %v4707
      %v4709 = vrot.slane %v4615, 7
      %v4710 = vsel %vm1879, %v4707, %v4709
      %v4743 = vsel %vm1879, 0.0, %v4648
      %4744 = vrot.lane.b32.xlu0 %v4201, 96
      %v4745 = vpop.permute.xlu0 %4744
      %4746 = vrot.lane.b32.xlu0 %v4206, 96
      %v4747 = vpop.permute.xlu0 %4746
      %4748 = vrot.lane.b32.xlu0 %v4211, 96
      %v4749 = vpop.permute.xlu0 %4748
      %4750 = vrot.lane.b32.xlu0 %v4216, 96
      %v4751 = vpop.permute.xlu0 %4750
      %4752 = vrot.lane.b32.xlu0 %v4221, 96
      %v4753 = vpop.permute.xlu0 %4752
      %4754 = vrot.lane.b32.xlu0 %v4226, 96
      %v4755 = vpop.permute.xlu0 %4754
      %4756 = vrot.lane.b32.xlu0 %v4231, 96
      %v4757 = vpop.permute.xlu0 %4756
      %4758 = vrot.lane.b32.xlu0 %v4236, 96
      %v4759 = vpop.permute.xlu0 %4758
      %4760 = vrot.lane.b32.xlu0 %v4241, 96
      %v4761 = vpop.permute.xlu0 %4760
      %4762 = vrot.lane.b32.xlu0 %v4246, 96
      %v4763 = vpop.permute.xlu0 %4762
      %4764 = vrot.lane.b32.xlu0 %v4251, 96
      %v4765 = vpop.permute.xlu0 %4764
      %4766 = vrot.lane.b32.xlu0 %v4256, 96
      %v4767 = vpop.permute.xlu0 %4766
      %4768 = vrot.lane.b32.xlu0 %v4261, 96
      %v4769 = vpop.permute.xlu0 %4768
      %4770 = vrot.lane.b32.xlu0 %v4266, 96
      %v4771 = vpop.permute.xlu0 %4770
      %4772 = vrot.lane.b32.xlu0 %v4271, 96
      %v4773 = vpop.permute.xlu0 %4772
      %4774 = vrot.lane.b32.xlu0 %v4276, 96
      %v4775 = vpop.permute.xlu0 %4774
      %4776 = vrot.lane.b32.xlu0 %v4281, 96
      %v4777 = vpop.permute.xlu0 %4776
      %4778 = vrot.lane.b32.xlu0 %v4286, 96
      %v4779 = vpop.permute.xlu0 %4778
      %4780 = vrot.lane.b32.xlu0 %v4291, 96
      %v4781 = vpop.permute.xlu0 %4780
      %4782 = vrot.lane.b32.xlu0 %v4296, 96
      %v4783 = vpop.permute.xlu0 %4782
      %4784 = vrot.lane.b32.xlu0 %v4301, 96
      %v4785 = vpop.permute.xlu0 %4784
      %4786 = vrot.lane.b32.xlu0 %v4306, 96
      %v4787 = vpop.permute.xlu0 %4786
      %4788 = vrot.lane.b32.xlu0 %v4311, 96
      %v4789 = vpop.permute.xlu0 %4788
      %4790 = vrot.lane.b32.xlu0 %v4316, 96
      %v4791 = vpop.permute.xlu0 %4790
      %4792 = vrot.lane.b32.xlu0 %v4321, 96
      %v4793 = vpop.permute.xlu0 %4792
      %4794 = vrot.lane.b32.xlu0 %v4326, 96
      %v4795 = vpop.permute.xlu0 %4794
      %4796 = vrot.lane.b32.xlu0 %v4331, 96
      %v4797 = vpop.permute.xlu0 %4796
      %4798 = vrot.lane.b32.xlu0 %v4336, 96
      %v4799 = vpop.permute.xlu0 %4798
      %4800 = vrot.lane.b32.xlu0 %v4341, 96
      %v4801 = vpop.permute.xlu0 %4800
      %4802 = vrot.lane.b32.xlu0 %v4346, 96
      %v4803 = vpop.permute.xlu0 %4802
      %4804 = vrot.lane.b32.xlu0 %v4351, 96
      %v4805 = vpop.permute.xlu0 %4804
      %4806 = vrot.lane.b32.xlu0 %v4356, 96
      %v4807 = vpop.permute.xlu0 %4806
      %v4840 = vadd.f32 %v4743, %v4745
      %v4841 = vadd.f32 %v4650, %v4747
      %v4842 = vadd.f32 %v4652, %v4749
      %v4843 = vadd.f32 %v4654, %v4751
      %v4844 = vadd.f32 %v4656, %v4753
      %v4845 = vadd.f32 %v4658, %v4755
      %v4846 = vadd.f32 %v4660, %v4757
      %v4847 = vadd.f32 %v4662, %v4759
      %v4848 = vadd.f32 %v4664, %v4761
      %v4849 = vadd.f32 %v4666, %v4763
      %v4850 = vadd.f32 %v4668, %v4765
      %v4851 = vadd.f32 %v4670, %v4767
      %v4852 = vadd.f32 %v4672, %v4769
      %v4853 = vadd.f32 %v4674, %v4771
      %v4854 = vadd.f32 %v4676, %v4773
      %v4855 = vadd.f32 %v4678, %v4775
      %v4856 = vadd.f32 %v4680, %v4777
      %v4857 = vadd.f32 %v4682, %v4779
      %v4858 = vadd.f32 %v4684, %v4781
      %v4859 = vadd.f32 %v4686, %v4783
      %v4860 = vadd.f32 %v4688, %v4785
      %v4861 = vadd.f32 %v4690, %v4787
      %v4862 = vadd.f32 %v4692, %v4789
      %v4863 = vadd.f32 %v4694, %v4791
      %v4864 = vadd.f32 %v4696, %v4793
      %v4865 = vadd.f32 %v4698, %v4795
      %v4866 = vadd.f32 %v4700, %v4797
      %v4867 = vadd.f32 %v4702, %v4799
      %v4868 = vadd.f32 %v4704, %v4801
      %v4869 = vadd.f32 %v4706, %v4803
      %v4870 = vadd.f32 %v4708, %v4805
      %v4871 = vadd.f32 %v4710, %v4807
      %v4904 = vrot.slane %v4840, 7
      %v4905 = vrot.slane %v4841, 7
      %v4906 = vsel %vm1879, %v4904, %v4905
      %v4907 = vrot.slane %v4842, 7
      %v4908 = vsel %vm1879, %v4905, %v4907
      %v4909 = vrot.slane %v4843, 7
      %v4910 = vsel %vm1879, %v4907, %v4909
      %v4911 = vrot.slane %v4844, 7
      %v4912 = vsel %vm1879, %v4909, %v4911
      %v4913 = vrot.slane %v4845, 7
      %v4914 = vsel %vm1879, %v4911, %v4913
      %v4915 = vrot.slane %v4846, 7
      %v4916 = vsel %vm1879, %v4913, %v4915
      %v4917 = vrot.slane %v4847, 7
      %v4918 = vsel %vm1879, %v4915, %v4917
      %v4919 = vrot.slane %v4848, 7
      %v4920 = vsel %vm1879, %v4917, %v4919
      %v4921 = vrot.slane %v4849, 7
      %v4922 = vsel %vm1879, %v4919, %v4921
      %v4923 = vrot.slane %v4850, 7
      %v4924 = vsel %vm1879, %v4921, %v4923
      %v4925 = vrot.slane %v4851, 7
      %v4926 = vsel %vm1879, %v4923, %v4925
      %v4927 = vrot.slane %v4852, 7
      %v4928 = vsel %vm1879, %v4925, %v4927
      %v4929 = vrot.slane %v4853, 7
      %v4930 = vsel %vm1879, %v4927, %v4929
      %v4931 = vrot.slane %v4854, 7
      %v4932 = vsel %vm1879, %v4929, %v4931
      %v4933 = vrot.slane %v4855, 7
      %v4934 = vsel %vm1879, %v4931, %v4933
      %v4935 = vrot.slane %v4856, 7
      %v4936 = vsel %vm1879, %v4933, %v4935
      %v4937 = vrot.slane %v4857, 7
      %v4938 = vsel %vm1879, %v4935, %v4937
      %v4939 = vrot.slane %v4858, 7
      %v4940 = vsel %vm1879, %v4937, %v4939
      %v4941 = vrot.slane %v4859, 7
      %v4942 = vsel %vm1879, %v4939, %v4941
      %v4943 = vrot.slane %v4860, 7
      %v4944 = vsel %vm1879, %v4941, %v4943
      %v4945 = vrot.slane %v4861, 7
      %v4946 = vsel %vm1879, %v4943, %v4945
      %v4947 = vrot.slane %v4862, 7
      %v4948 = vsel %vm1879, %v4945, %v4947
      %v4949 = vrot.slane %v4863, 7
      %v4950 = vsel %vm1879, %v4947, %v4949
      %v4951 = vrot.slane %v4864, 7
      %v4952 = vsel %vm1879, %v4949, %v4951
      %v4953 = vrot.slane %v4865, 7
      %v4954 = vsel %vm1879, %v4951, %v4953
      %v4955 = vrot.slane %v4866, 7
      %v4956 = vsel %vm1879, %v4953, %v4955
      %v4957 = vrot.slane %v4867, 7
      %v4958 = vsel %vm1879, %v4955, %v4957
      %v4959 = vrot.slane %v4868, 7
      %v4960 = vsel %vm1879, %v4957, %v4959
      %v4961 = vrot.slane %v4869, 7
      %v4962 = vsel %vm1879, %v4959, %v4961
      %v4963 = vrot.slane %v4870, 7
      %v4964 = vsel %vm1879, %v4961, %v4963
      %v4965 = vrot.slane %v4871, 7
      %v4966 = vsel %vm1879, %v4963, %v4965
      %v4999 = vsel %vm1879, 0.0, %v4904
      %5000 = vrot.lane.b32.xlu0 %v4201, 80
      %v5001 = vpop.permute.xlu0 %5000
      %5002 = vrot.lane.b32.xlu0 %v4206, 80
      %v5003 = vpop.permute.xlu0 %5002
      %5004 = vrot.lane.b32.xlu0 %v4211, 80
      %v5005 = vpop.permute.xlu0 %5004
      %5006 = vrot.lane.b32.xlu0 %v4216, 80
      %v5007 = vpop.permute.xlu0 %5006
      %5008 = vrot.lane.b32.xlu0 %v4221, 80
      %v5009 = vpop.permute.xlu0 %5008
      %5010 = vrot.lane.b32.xlu0 %v4226, 80
      %v5011 = vpop.permute.xlu0 %5010
      %5012 = vrot.lane.b32.xlu0 %v4231, 80
      %v5013 = vpop.permute.xlu0 %5012
      %5014 = vrot.lane.b32.xlu0 %v4236, 80
      %v5015 = vpop.permute.xlu0 %5014
      %5016 = vrot.lane.b32.xlu0 %v4241, 80
      %v5017 = vpop.permute.xlu0 %5016
      %5018 = vrot.lane.b32.xlu0 %v4246, 80
      %v5019 = vpop.permute.xlu0 %5018
      %5020 = vrot.lane.b32.xlu0 %v4251, 80
      %v5021 = vpop.permute.xlu0 %5020
      %5022 = vrot.lane.b32.xlu0 %v4256, 80
      %v5023 = vpop.permute.xlu0 %5022
      %5024 = vrot.lane.b32.xlu0 %v4261, 80
      %v5025 = vpop.permute.xlu0 %5024
      %5026 = vrot.lane.b32.xlu0 %v4266, 80
      %v5027 = vpop.permute.xlu0 %5026
      %5028 = vrot.lane.b32.xlu0 %v4271, 80
      %v5029 = vpop.permute.xlu0 %5028
      %5030 = vrot.lane.b32.xlu0 %v4276, 80
      %v5031 = vpop.permute.xlu0 %5030
      %5032 = vrot.lane.b32.xlu0 %v4281, 80
      %v5033 = vpop.permute.xlu0 %5032
      %5034 = vrot.lane.b32.xlu0 %v4286, 80
      %v5035 = vpop.permute.xlu0 %5034
      %5036 = vrot.lane.b32.xlu0 %v4291, 80
      %v5037 = vpop.permute.xlu0 %5036
      %5038 = vrot.lane.b32.xlu0 %v4296, 80
      %v5039 = vpop.permute.xlu0 %5038
      %5040 = vrot.lane.b32.xlu0 %v4301, 80
      %v5041 = vpop.permute.xlu0 %5040
      %5042 = vrot.lane.b32.xlu0 %v4306, 80
      %v5043 = vpop.permute.xlu0 %5042
      %5044 = vrot.lane.b32.xlu0 %v4311, 80
      %v5045 = vpop.permute.xlu0 %5044
      %5046 = vrot.lane.b32.xlu0 %v4316, 80
      %v5047 = vpop.permute.xlu0 %5046
      %5048 = vrot.lane.b32.xlu0 %v4321, 80
      %v5049 = vpop.permute.xlu0 %5048
      %5050 = vrot.lane.b32.xlu0 %v4326, 80
      %v5051 = vpop.permute.xlu0 %5050
      %5052 = vrot.lane.b32.xlu0 %v4331, 80
      %v5053 = vpop.permute.xlu0 %5052
      %5054 = vrot.lane.b32.xlu0 %v4336, 80
      %v5055 = vpop.permute.xlu0 %5054
      %5056 = vrot.lane.b32.xlu0 %v4341, 80
      %v5057 = vpop.permute.xlu0 %5056
      %5058 = vrot.lane.b32.xlu0 %v4346, 80
      %v5059 = vpop.permute.xlu0 %5058
      %5060 = vrot.lane.b32.xlu0 %v4351, 80
      %v5061 = vpop.permute.xlu0 %5060
      %5062 = vrot.lane.b32.xlu0 %v4356, 80
      %v5063 = vpop.permute.xlu0 %5062
      %v5096 = vadd.f32 %v4999, %v5001
      %v5097 = vadd.f32 %v4906, %v5003
      %v5098 = vadd.f32 %v4908, %v5005
      %v5099 = vadd.f32 %v4910, %v5007
      %v5100 = vadd.f32 %v4912, %v5009
      %v5101 = vadd.f32 %v4914, %v5011
      %v5102 = vadd.f32 %v4916, %v5013
      %v5103 = vadd.f32 %v4918, %v5015
      %v5104 = vadd.f32 %v4920, %v5017
      %v5105 = vadd.f32 %v4922, %v5019
      %v5106 = vadd.f32 %v4924, %v5021
      %v5107 = vadd.f32 %v4926, %v5023
      %v5108 = vadd.f32 %v4928, %v5025
      %v5109 = vadd.f32 %v4930, %v5027
      %v5110 = vadd.f32 %v4932, %v5029
      %v5111 = vadd.f32 %v4934, %v5031
      %v5112 = vadd.f32 %v4936, %v5033
      %v5113 = vadd.f32 %v4938, %v5035
      %v5114 = vadd.f32 %v4940, %v5037
      %v5115 = vadd.f32 %v4942, %v5039
      %v5116 = vadd.f32 %v4944, %v5041
      %v5117 = vadd.f32 %v4946, %v5043
      %v5118 = vadd.f32 %v4948, %v5045
      %v5119 = vadd.f32 %v4950, %v5047
      %v5120 = vadd.f32 %v4952, %v5049
      %v5121 = vadd.f32 %v4954, %v5051
      %v5122 = vadd.f32 %v4956, %v5053
      %v5123 = vadd.f32 %v4958, %v5055
      %v5124 = vadd.f32 %v4960, %v5057
      %v5125 = vadd.f32 %v4962, %v5059
      %v5126 = vadd.f32 %v4964, %v5061
      %v5127 = vadd.f32 %v4966, %v5063
      %v5160 = vrot.slane %v5096, 7
      %v5161 = vrot.slane %v5097, 7
      %v5162 = vsel %vm1879, %v5160, %v5161
      %v5163 = vrot.slane %v5098, 7
      %v5164 = vsel %vm1879, %v5161, %v5163
      %v5165 = vrot.slane %v5099, 7
      %v5166 = vsel %vm1879, %v5163, %v5165
      %v5167 = vrot.slane %v5100, 7
      %v5168 = vsel %vm1879, %v5165, %v5167
      %v5169 = vrot.slane %v5101, 7
      %v5170 = vsel %vm1879, %v5167, %v5169
      %v5171 = vrot.slane %v5102, 7
      %v5172 = vsel %vm1879, %v5169, %v5171
      %v5173 = vrot.slane %v5103, 7
      %v5174 = vsel %vm1879, %v5171, %v5173
      %v5175 = vrot.slane %v5104, 7
      %v5176 = vsel %vm1879, %v5173, %v5175
      %v5177 = vrot.slane %v5105, 7
      %v5178 = vsel %vm1879, %v5175, %v5177
      %v5179 = vrot.slane %v5106, 7
      %v5180 = vsel %vm1879, %v5177, %v5179
      %v5181 = vrot.slane %v5107, 7
      %v5182 = vsel %vm1879, %v5179, %v5181
      %v5183 = vrot.slane %v5108, 7
      %v5184 = vsel %vm1879, %v5181, %v5183
      %v5185 = vrot.slane %v5109, 7
      %v5186 = vsel %vm1879, %v5183, %v5185
      %v5187 = vrot.slane %v5110, 7
      %v5188 = vsel %vm1879, %v5185, %v5187
      %v5189 = vrot.slane %v5111, 7
      %v5190 = vsel %vm1879, %v5187, %v5189
      %v5191 = vrot.slane %v5112, 7
      %v5192 = vsel %vm1879, %v5189, %v5191
      %v5193 = vrot.slane %v5113, 7
      %v5194 = vsel %vm1879, %v5191, %v5193
      %v5195 = vrot.slane %v5114, 7
      %v5196 = vsel %vm1879, %v5193, %v5195
      %v5197 = vrot.slane %v5115, 7
      %v5198 = vsel %vm1879, %v5195, %v5197
      %v5199 = vrot.slane %v5116, 7
      %v5200 = vsel %vm1879, %v5197, %v5199
      %v5201 = vrot.slane %v5117, 7
      %v5202 = vsel %vm1879, %v5199, %v5201
      %v5203 = vrot.slane %v5118, 7
      %v5204 = vsel %vm1879, %v5201, %v5203
      %v5205 = vrot.slane %v5119, 7
      %v5206 = vsel %vm1879, %v5203, %v5205
      %v5207 = vrot.slane %v5120, 7
      %v5208 = vsel %vm1879, %v5205, %v5207
      %v5209 = vrot.slane %v5121, 7
      %v5210 = vsel %vm1879, %v5207, %v5209
      %v5211 = vrot.slane %v5122, 7
      %v5212 = vsel %vm1879, %v5209, %v5211
      %v5213 = vrot.slane %v5123, 7
      %v5214 = vsel %vm1879, %v5211, %v5213
      %v5215 = vrot.slane %v5124, 7
      %v5216 = vsel %vm1879, %v5213, %v5215
      %v5217 = vrot.slane %v5125, 7
      %v5218 = vsel %vm1879, %v5215, %v5217
      %v5219 = vrot.slane %v5126, 7
      %v5220 = vsel %vm1879, %v5217, %v5219
      %v5221 = vrot.slane %v5127, 7
      %v5222 = vsel %vm1879, %v5219, %v5221
      %v5255 = vsel %vm1879, 0.0, %v5160
      %5256 = vrot.lane.b32.xlu0 %v4201, 64
      %v5257 = vpop.permute.xlu0 %5256
      %5258 = vrot.lane.b32.xlu0 %v4206, 64
      %v5259 = vpop.permute.xlu0 %5258
      %5260 = vrot.lane.b32.xlu0 %v4211, 64
      %v5261 = vpop.permute.xlu0 %5260
      %5262 = vrot.lane.b32.xlu0 %v4216, 64
      %v5263 = vpop.permute.xlu0 %5262
      %5264 = vrot.lane.b32.xlu0 %v4221, 64
      %v5265 = vpop.permute.xlu0 %5264
      %5266 = vrot.lane.b32.xlu0 %v4226, 64
      %v5267 = vpop.permute.xlu0 %5266
      %5268 = vrot.lane.b32.xlu0 %v4231, 64
      %v5269 = vpop.permute.xlu0 %5268
      %5270 = vrot.lane.b32.xlu0 %v4236, 64
      %v5271 = vpop.permute.xlu0 %5270
      %5272 = vrot.lane.b32.xlu0 %v4241, 64
      %v5273 = vpop.permute.xlu0 %5272
      %5274 = vrot.lane.b32.xlu0 %v4246, 64
      %v5275 = vpop.permute.xlu0 %5274
      %5276 = vrot.lane.b32.xlu0 %v4251, 64
      %v5277 = vpop.permute.xlu0 %5276
      %5278 = vrot.lane.b32.xlu0 %v4256, 64
      %v5279 = vpop.permute.xlu0 %5278
      %5280 = vrot.lane.b32.xlu0 %v4261, 64
      %v5281 = vpop.permute.xlu0 %5280
      %5282 = vrot.lane.b32.xlu0 %v4266, 64
      %v5283 = vpop.permute.xlu0 %5282
      %5284 = vrot.lane.b32.xlu0 %v4271, 64
      %v5285 = vpop.permute.xlu0 %5284
      %5286 = vrot.lane.b32.xlu0 %v4276, 64
      %v5287 = vpop.permute.xlu0 %5286
      %5288 = vrot.lane.b32.xlu0 %v4281, 64
      %v5289 = vpop.permute.xlu0 %5288
      %5290 = vrot.lane.b32.xlu0 %v4286, 64
      %v5291 = vpop.permute.xlu0 %5290
      %5292 = vrot.lane.b32.xlu0 %v4291, 64
      %v5293 = vpop.permute.xlu0 %5292
      %5294 = vrot.lane.b32.xlu0 %v4296, 64
      %v5295 = vpop.permute.xlu0 %5294
      %5296 = vrot.lane.b32.xlu0 %v4301, 64
      %v5297 = vpop.permute.xlu0 %5296
      %5298 = vrot.lane.b32.xlu0 %v4306, 64
      %v5299 = vpop.permute.xlu0 %5298
      %5300 = vrot.lane.b32.xlu0 %v4311, 64
      %v5301 = vpop.permute.xlu0 %5300
      %5302 = vrot.lane.b32.xlu0 %v4316, 64
      %v5303 = vpop.permute.xlu0 %5302
      %5304 = vrot.lane.b32.xlu0 %v4321, 64
      %v5305 = vpop.permute.xlu0 %5304
      %5306 = vrot.lane.b32.xlu0 %v4326, 64
      %v5307 = vpop.permute.xlu0 %5306
      %5308 = vrot.lane.b32.xlu0 %v4331, 64
      %v5309 = vpop.permute.xlu0 %5308
      %5310 = vrot.lane.b32.xlu0 %v4336, 64
      %v5311 = vpop.permute.xlu0 %5310
      %5312 = vrot.lane.b32.xlu0 %v4341, 64
      %v5313 = vpop.permute.xlu0 %5312
      %5314 = vrot.lane.b32.xlu0 %v4346, 64
      %v5315 = vpop.permute.xlu0 %5314
      %5316 = vrot.lane.b32.xlu0 %v4351, 64
      %v5317 = vpop.permute.xlu0 %5316
      %5318 = vrot.lane.b32.xlu0 %v4356, 64
      %v5319 = vpop.permute.xlu0 %5318
      %v5352 = vadd.f32 %v5255, %v5257
      %v5353 = vadd.f32 %v5162, %v5259
      %v5354 = vadd.f32 %v5164, %v5261
      %v5355 = vadd.f32 %v5166, %v5263
      %v5356 = vadd.f32 %v5168, %v5265
      %v5357 = vadd.f32 %v5170, %v5267
      %v5358 = vadd.f32 %v5172, %v5269
      %v5359 = vadd.f32 %v5174, %v5271
      %v5360 = vadd.f32 %v5176, %v5273
      %v5361 = vadd.f32 %v5178, %v5275
      %v5362 = vadd.f32 %v5180, %v5277
      %v5363 = vadd.f32 %v5182, %v5279
      %v5364 = vadd.f32 %v5184, %v5281
      %v5365 = vadd.f32 %v5186, %v5283
      %v5366 = vadd.f32 %v5188, %v5285
      %v5367 = vadd.f32 %v5190, %v5287
      %v5368 = vadd.f32 %v5192, %v5289
      %v5369 = vadd.f32 %v5194, %v5291
      %v5370 = vadd.f32 %v5196, %v5293
      %v5371 = vadd.f32 %v5198, %v5295
      %v5372 = vadd.f32 %v5200, %v5297
      %v5373 = vadd.f32 %v5202, %v5299
      %v5374 = vadd.f32 %v5204, %v5301
      %v5375 = vadd.f32 %v5206, %v5303
      %v5376 = vadd.f32 %v5208, %v5305
      %v5377 = vadd.f32 %v5210, %v5307
      %v5378 = vadd.f32 %v5212, %v5309
      %v5379 = vadd.f32 %v5214, %v5311
      %v5380 = vadd.f32 %v5216, %v5313
      %v5381 = vadd.f32 %v5218, %v5315
      %v5382 = vadd.f32 %v5220, %v5317
      %v5383 = vadd.f32 %v5222, %v5319
      %v5385 = vlaneseq
      %v5386 = vshrl.u32 %v5385, 7
      %v5387 = vsub.s32 0, %v5386
      %v5388 = vrot.slane %v4359, %v5387
      %v5390 = vadd.f32 %v5352, %v5388
      %v5391 = vadd.f32 %v5353, %v5388
      %v5392 = vadd.f32 %v5354, %v5388
      %v5393 = vadd.f32 %v5355, %v5388
      %v5394 = vadd.f32 %v5356, %v5388
      %v5395 = vadd.f32 %v5357, %v5388
      %v5396 = vadd.f32 %v5358, %v5388
      %v5397 = vadd.f32 %v5359, %v5388
      %v5398 = vadd.f32 %v5360, %v5388
      %v5399 = vadd.f32 %v5361, %v5388
      %v5400 = vadd.f32 %v5362, %v5388
      %v5401 = vadd.f32 %v5363, %v5388
      %v5402 = vadd.f32 %v5364, %v5388
      %v5403 = vadd.f32 %v5365, %v5388
      %v5404 = vadd.f32 %v5366, %v5388
      %v5405 = vadd.f32 %v5367, %v5388
      %v5406 = vadd.f32 %v5368, %v5388
      %v5407 = vadd.f32 %v5369, %v5388
      %v5408 = vadd.f32 %v5370, %v5388
      %v5409 = vadd.f32 %v5371, %v5388
      %v5410 = vadd.f32 %v5372, %v5388
      %v5411 = vadd.f32 %v5373, %v5388
      %v5412 = vadd.f32 %v5374, %v5388
      %v5413 = vadd.f32 %v5375, %v5388
      %v5414 = vadd.f32 %v5376, %v5388
      %v5415 = vadd.f32 %v5377, %v5388
      %v5416 = vadd.f32 %v5378, %v5388
      %v5417 = vadd.f32 %v5379, %v5388
      %v5418 = vadd.f32 %v5380, %v5388
      %v5419 = vadd.f32 %v5381, %v5388
      %v5420 = vadd.f32 %v5382, %v5388
      %v5421 = vadd.f32 %v5383, %v5388
      %v5422 = vxor.u32 %v5390, 2147483648
      %v5423 = vxor.u32 %v5391, 2147483648
      %v5424 = vxor.u32 %v5392, 2147483648
      %v5425 = vxor.u32 %v5393, 2147483648
      %v5426 = vxor.u32 %v5394, 2147483648
      %v5427 = vxor.u32 %v5395, 2147483648
      %v5428 = vxor.u32 %v5396, 2147483648
      %v5429 = vxor.u32 %v5397, 2147483648
      %v5430 = vxor.u32 %v5398, 2147483648
      %v5431 = vxor.u32 %v5399, 2147483648
      %v5432 = vxor.u32 %v5400, 2147483648
      %v5433 = vxor.u32 %v5401, 2147483648
      %v5434 = vxor.u32 %v5402, 2147483648
      %v5435 = vxor.u32 %v5403, 2147483648
      %v5436 = vxor.u32 %v5404, 2147483648
      %v5437 = vxor.u32 %v5405, 2147483648
      %v5438 = vxor.u32 %v5406, 2147483648
      %v5439 = vxor.u32 %v5407, 2147483648
      %v5440 = vxor.u32 %v5408, 2147483648
      %v5441 = vxor.u32 %v5409, 2147483648
      %v5442 = vxor.u32 %v5410, 2147483648
      %v5443 = vxor.u32 %v5411, 2147483648
      %v5444 = vxor.u32 %v5412, 2147483648
      %v5445 = vxor.u32 %v5413, 2147483648
      %v5446 = vxor.u32 %v5414, 2147483648
      %v5447 = vxor.u32 %v5415, 2147483648
      %v5448 = vxor.u32 %v5416, 2147483648
      %v5449 = vxor.u32 %v5417, 2147483648
      %v5450 = vxor.u32 %v5418, 2147483648
      %v5451 = vxor.u32 %v5419, 2147483648
      %v5452 = vxor.u32 %v5420, 2147483648
      %v5453 = vxor.u32 %v5421, 2147483648
      %v5454 = vmul.f32 %v5422, 1.442695
      %v5455 = vpow.pop %v5454
      %v5456 = vmul.f32 %v5423, 1.442695
      %v5457 = vpow.pop %v5456
      %v5458 = vmul.f32 %v5424, 1.442695
      %v5459 = vpow.pop %v5458
      %v5460 = vmul.f32 %v5425, 1.442695
      %v5461 = vpow.pop %v5460
      %v5462 = vmul.f32 %v5426, 1.442695
      %v5463 = vpow.pop %v5462
      %v5464 = vmul.f32 %v5427, 1.442695
      %v5465 = vpow.pop %v5464
      %v5466 = vmul.f32 %v5428, 1.442695
      %v5467 = vpow.pop %v5466
      %v5468 = vmul.f32 %v5429, 1.442695
      %v5469 = vpow.pop %v5468
      %v5470 = vmul.f32 %v5430, 1.442695
      %v5471 = vpow.pop %v5470
      %v5472 = vmul.f32 %v5431, 1.442695
      %v5473 = vpow.pop %v5472
      %v5474 = vmul.f32 %v5432, 1.442695
      %v5475 = vpow.pop %v5474
      %v5476 = vmul.f32 %v5433, 1.442695
      %v5477 = vpow.pop %v5476
      %v5478 = vmul.f32 %v5434, 1.442695
      %v5479 = vpow.pop %v5478
      %v5480 = vmul.f32 %v5435, 1.442695
      %v5481 = vpow.pop %v5480
      %v5482 = vmul.f32 %v5436, 1.442695
      %v5483 = vpow.pop %v5482
      %v5484 = vmul.f32 %v5437, 1.442695
      %v5485 = vpow.pop %v5484
      %v5486 = vmul.f32 %v5438, 1.442695
      %v5487 = vpow.pop %v5486
      %v5488 = vmul.f32 %v5439, 1.442695
      %v5489 = vpow.pop %v5488
      %v5490 = vmul.f32 %v5440, 1.442695
      %v5491 = vpow.pop %v5490
      %v5492 = vmul.f32 %v5441, 1.442695
      %v5493 = vpow.pop %v5492
      %v5494 = vmul.f32 %v5442, 1.442695
      %v5495 = vpow.pop %v5494
      %v5496 = vmul.f32 %v5443, 1.442695
      %v5497 = vpow.pop %v5496
      %v5498 = vmul.f32 %v5444, 1.442695
      %v5499 = vpow.pop %v5498
      %v5500 = vmul.f32 %v5445, 1.442695
      %v5501 = vpow.pop %v5500
      %v5502 = vmul.f32 %v5446, 1.442695
      %v5503 = vpow.pop %v5502
      %v5504 = vmul.f32 %v5447, 1.442695
      %v5505 = vpow.pop %v5504
      %v5506 = vmul.f32 %v5448, 1.442695
      %v5507 = vpow.pop %v5506
      %v5508 = vmul.f32 %v5449, 1.442695
      %v5509 = vpow.pop %v5508
      %v5510 = vmul.f32 %v5450, 1.442695
      %v5511 = vpow.pop %v5510
      %v5512 = vmul.f32 %v5451, 1.442695
      %v5513 = vpow.pop %v5512
      %v5514 = vmul.f32 %v5452, 1.442695
      %v5515 = vpow.pop %v5514
      %v5516 = vmul.f32 %v5453, 1.442695
      %v5517 = vpow.pop %v5516
      %v5518 = vadd.f32 %v5455, 1.0
      %v5519 = vadd.f32 %v5457, 1.0
      %v5520 = vadd.f32 %v5459, 1.0
      %v5521 = vadd.f32 %v5461, 1.0
      %v5522 = vadd.f32 %v5463, 1.0
      %v5523 = vadd.f32 %v5465, 1.0
      %v5524 = vadd.f32 %v5467, 1.0
      %v5525 = vadd.f32 %v5469, 1.0
      %v5526 = vadd.f32 %v5471, 1.0
      %v5527 = vadd.f32 %v5473, 1.0
      %v5528 = vadd.f32 %v5475, 1.0
      %v5529 = vadd.f32 %v5477, 1.0
      %v5530 = vadd.f32 %v5479, 1.0
      %v5531 = vadd.f32 %v5481, 1.0
      %v5532 = vadd.f32 %v5483, 1.0
      %v5533 = vadd.f32 %v5485, 1.0
      %v5534 = vadd.f32 %v5487, 1.0
      %v5535 = vadd.f32 %v5489, 1.0
      %v5536 = vadd.f32 %v5491, 1.0
      %v5537 = vadd.f32 %v5493, 1.0
      %v5538 = vadd.f32 %v5495, 1.0
      %v5539 = vadd.f32 %v5497, 1.0
      %v5540 = vadd.f32 %v5499, 1.0
      %v5541 = vadd.f32 %v5501, 1.0
      %v5542 = vadd.f32 %v5503, 1.0
      %v5543 = vadd.f32 %v5505, 1.0
      %v5544 = vadd.f32 %v5507, 1.0
      %v5545 = vadd.f32 %v5509, 1.0
      %v5546 = vadd.f32 %v5511, 1.0
      %v5547 = vadd.f32 %v5513, 1.0
      %v5548 = vadd.f32 %v5515, 1.0
      %v5549 = vadd.f32 %v5517, 1.0
      %v5550 = vrcp.pop %v5518
      %v5551 = vmul.f32 1.0, %v5550
      %v5552 = vrcp.pop %v5519
      %v5553 = vmul.f32 1.0, %v5552
      %v5554 = vrcp.pop %v5520
      %v5555 = vmul.f32 1.0, %v5554
      %v5556 = vrcp.pop %v5521
      %v5557 = vmul.f32 1.0, %v5556
      %v5558 = vrcp.pop %v5522
      %v5559 = vmul.f32 1.0, %v5558
      %v5560 = vrcp.pop %v5523
      %v5561 = vmul.f32 1.0, %v5560
      %v5562 = vrcp.pop %v5524
      %v5563 = vmul.f32 1.0, %v5562
      %v5564 = vrcp.pop %v5525
      %v5565 = vmul.f32 1.0, %v5564
      %v5566 = vrcp.pop %v5526
      %v5567 = vmul.f32 1.0, %v5566
      %v5568 = vrcp.pop %v5527
      %v5569 = vmul.f32 1.0, %v5568
      %v5570 = vrcp.pop %v5528
      %v5571 = vmul.f32 1.0, %v5570
      %v5572 = vrcp.pop %v5529
      %v5573 = vmul.f32 1.0, %v5572
      %v5574 = vrcp.pop %v5530
      %v5575 = vmul.f32 1.0, %v5574
      %v5576 = vrcp.pop %v5531
      %v5577 = vmul.f32 1.0, %v5576
      %v5578 = vrcp.pop %v5532
      %v5579 = vmul.f32 1.0, %v5578
      %v5580 = vrcp.pop %v5533
      %v5581 = vmul.f32 1.0, %v5580
      %v5582 = vrcp.pop %v5534
      %v5583 = vmul.f32 1.0, %v5582
      %v5584 = vrcp.pop %v5535
      %v5585 = vmul.f32 1.0, %v5584
      %v5586 = vrcp.pop %v5536
      %v5587 = vmul.f32 1.0, %v5586
      %v5588 = vrcp.pop %v5537
      %v5589 = vmul.f32 1.0, %v5588
      %v5590 = vrcp.pop %v5538
      %v5591 = vmul.f32 1.0, %v5590
      %v5592 = vrcp.pop %v5539
      %v5593 = vmul.f32 1.0, %v5592
      %v5594 = vrcp.pop %v5540
      %v5595 = vmul.f32 1.0, %v5594
      %v5596 = vrcp.pop %v5541
      %v5597 = vmul.f32 1.0, %v5596
      %v5598 = vrcp.pop %v5542
      %v5599 = vmul.f32 1.0, %v5598
      %v5600 = vrcp.pop %v5543
      %v5601 = vmul.f32 1.0, %v5600
      %v5602 = vrcp.pop %v5544
      %v5603 = vmul.f32 1.0, %v5602
      %v5604 = vrcp.pop %v5545
      %v5605 = vmul.f32 1.0, %v5604
      %v5606 = vrcp.pop %v5546
      %v5607 = vmul.f32 1.0, %v5606
      %v5608 = vrcp.pop %v5547
      %v5609 = vmul.f32 1.0, %v5608
      %v5610 = vrcp.pop %v5548
      %v5611 = vmul.f32 1.0, %v5610
      %v5612 = vrcp.pop %v5549
      %v5613 = vmul.f32 1.0, %v5612
      %s5614 = scalar_lea.vmem %s7, 32
      %v5615 = vld [vmem:[%s5614] sm:$0xff]
      %v5616 = vld [vmem:[%s5614 + $0x8] sm:$0xff]
      %v5617 = vld [vmem:[%s5614 + $0x10] sm:$0xff]
      %v5618 = vld [vmem:[%s5614 + $0x18] sm:$0xff]
      %v5619 = vmul.f32 %v5551, %v5615
      %v5620 = vmul.f32 %v5553, %v5616
      %v5621 = vmul.f32 %v5555, %v5617
      %v5622 = vmul.f32 %v5557, %v5618
      %v5623 = vmul.f32 %v5559, %v5615
      %v5624 = vmul.f32 %v5561, %v5616
      %v5625 = vmul.f32 %v5563, %v5617
      %v5626 = vmul.f32 %v5565, %v5618
      %v5627 = vmul.f32 %v5567, %v5615
      %v5628 = vmul.f32 %v5569, %v5616
      %v5629 = vmul.f32 %v5571, %v5617
      %v5630 = vmul.f32 %v5573, %v5618
      %v5631 = vmul.f32 %v5575, %v5615
      %v5632 = vmul.f32 %v5577, %v5616
      %v5633 = vmul.f32 %v5579, %v5617
      %v5634 = vmul.f32 %v5581, %v5618
      %v5635 = vmul.f32 %v5583, %v5615
      %v5636 = vmul.f32 %v5585, %v5616
      %v5637 = vmul.f32 %v5587, %v5617
      %v5638 = vmul.f32 %v5589, %v5618
      %v5639 = vmul.f32 %v5591, %v5615
      %v5640 = vmul.f32 %v5593, %v5616
      %v5641 = vmul.f32 %v5595, %v5617
      %v5642 = vmul.f32 %v5597, %v5618
      %v5643 = vmul.f32 %v5599, %v5615
      %v5644 = vmul.f32 %v5601, %v5616
      %v5645 = vmul.f32 %v5603, %v5617
      %v5646 = vmul.f32 %v5605, %v5618
      %v5647 = vmul.f32 %v5607, %v5615
      %v5648 = vmul.f32 %v5609, %v5616
      %v5649 = vmul.f32 %v5611, %v5617
      %v5650 = vmul.f32 %v5613, %v5618
      %5659 = vrot.lane.b32.xlu0 %v5623, 16
      %v5660 = vpop.permute.xlu0 %5659
      %5661 = vrot.lane.b32.xlu0 %v5624, 16
      %v5662 = vpop.permute.xlu0 %5661
      %5663 = vrot.lane.b32.xlu0 %v5625, 16
      %v5664 = vpop.permute.xlu0 %5663
      %5665 = vrot.lane.b32.xlu0 %v5626, 16
      %v5666 = vpop.permute.xlu0 %5665
      %5667 = vrot.lane.b32.xlu0 %v5627, 16
      %v5668 = vpop.permute.xlu0 %5667
      %5669 = vrot.lane.b32.xlu0 %v5628, 16
      %v5670 = vpop.permute.xlu0 %5669
      %5671 = vrot.lane.b32.xlu0 %v5629, 16
      %v5672 = vpop.permute.xlu0 %5671
      %5673 = vrot.lane.b32.xlu0 %v5630, 16
      %v5674 = vpop.permute.xlu0 %5673
      %5687 = vrot.lane.b32.xlu0 %v5627, 32
      %v5688 = vpop.permute.xlu0 %5687
      %5689 = vrot.lane.b32.xlu0 %v5628, 32
      %v5690 = vpop.permute.xlu0 %5689
      %5691 = vrot.lane.b32.xlu0 %v5629, 32
      %v5692 = vpop.permute.xlu0 %5691
      %5693 = vrot.lane.b32.xlu0 %v5630, 32
      %v5694 = vpop.permute.xlu0 %5693
      %5695 = vrot.lane.b32.xlu0 %v5631, 32
      %v5696 = vpop.permute.xlu0 %5695
      %5697 = vrot.lane.b32.xlu0 %v5632, 32
      %v5698 = vpop.permute.xlu0 %5697
      %5699 = vrot.lane.b32.xlu0 %v5633, 32
      %v5700 = vpop.permute.xlu0 %5699
      %5701 = vrot.lane.b32.xlu0 %v5634, 32
      %v5702 = vpop.permute.xlu0 %5701
      %5715 = vrot.lane.b32.xlu0 %v5631, 48
      %v5716 = vpop.permute.xlu0 %5715
      %5717 = vrot.lane.b32.xlu0 %v5632, 48
      %v5718 = vpop.permute.xlu0 %5717
      %5719 = vrot.lane.b32.xlu0 %v5633, 48
      %v5720 = vpop.permute.xlu0 %5719
      %5721 = vrot.lane.b32.xlu0 %v5634, 48
      %v5722 = vpop.permute.xlu0 %5721
      %5723 = vrot.lane.b32.xlu0 %v5635, 48
      %v5724 = vpop.permute.xlu0 %5723
      %5725 = vrot.lane.b32.xlu0 %v5636, 48
      %v5726 = vpop.permute.xlu0 %5725
      %5727 = vrot.lane.b32.xlu0 %v5637, 48
      %v5728 = vpop.permute.xlu0 %5727
      %5729 = vrot.lane.b32.xlu0 %v5638, 48
      %v5730 = vpop.permute.xlu0 %5729
      %5743 = vrot.lane.b32.xlu0 %v5635, 64
      %v5744 = vpop.permute.xlu0 %5743
      %5745 = vrot.lane.b32.xlu0 %v5636, 64
      %v5746 = vpop.permute.xlu0 %5745
      %5747 = vrot.lane.b32.xlu0 %v5637, 64
      %v5748 = vpop.permute.xlu0 %5747
      %5749 = vrot.lane.b32.xlu0 %v5638, 64
      %v5750 = vpop.permute.xlu0 %5749
      %5751 = vrot.lane.b32.xlu0 %v5639, 64
      %v5752 = vpop.permute.xlu0 %5751
      %5753 = vrot.lane.b32.xlu0 %v5640, 64
      %v5754 = vpop.permute.xlu0 %5753
      %5755 = vrot.lane.b32.xlu0 %v5641, 64
      %v5756 = vpop.permute.xlu0 %5755
      %5757 = vrot.lane.b32.xlu0 %v5642, 64
      %v5758 = vpop.permute.xlu0 %5757
      %5771 = vrot.lane.b32.xlu0 %v5639, 80
      %v5772 = vpop.permute.xlu0 %5771
      %5773 = vrot.lane.b32.xlu0 %v5640, 80
      %v5774 = vpop.permute.xlu0 %5773
      %5775 = vrot.lane.b32.xlu0 %v5641, 80
      %v5776 = vpop.permute.xlu0 %5775
      %5777 = vrot.lane.b32.xlu0 %v5642, 80
      %v5778 = vpop.permute.xlu0 %5777
      %5779 = vrot.lane.b32.xlu0 %v5643, 80
      %v5780 = vpop.permute.xlu0 %5779
      %5781 = vrot.lane.b32.xlu0 %v5644, 80
      %v5782 = vpop.permute.xlu0 %5781
      %5783 = vrot.lane.b32.xlu0 %v5645, 80
      %v5784 = vpop.permute.xlu0 %5783
      %5785 = vrot.lane.b32.xlu0 %v5646, 80
      %v5786 = vpop.permute.xlu0 %5785
      %5799 = vrot.lane.b32.xlu0 %v5643, 96
      %v5800 = vpop.permute.xlu0 %5799
      %5801 = vrot.lane.b32.xlu0 %v5644, 96
      %v5802 = vpop.permute.xlu0 %5801
      %5803 = vrot.lane.b32.xlu0 %v5645, 96
      %v5804 = vpop.permute.xlu0 %5803
      %5805 = vrot.lane.b32.xlu0 %v5646, 96
      %v5806 = vpop.permute.xlu0 %5805
      %5807 = vrot.lane.b32.xlu0 %v5647, 96
      %v5808 = vpop.permute.xlu0 %5807
      %5809 = vrot.lane.b32.xlu0 %v5648, 96
      %v5810 = vpop.permute.xlu0 %5809
      %5811 = vrot.lane.b32.xlu0 %v5649, 96
      %v5812 = vpop.permute.xlu0 %5811
      %5813 = vrot.lane.b32.xlu0 %v5650, 96
      %v5814 = vpop.permute.xlu0 %5813
      %v5823 = vsel %vm1056, %v5619, %v5660
      %v5824 = vsel %vm1056, %v5620, %v5662
      %v5825 = vsel %vm1056, %v5621, %v5664
      %v5826 = vsel %vm1056, %v5622, %v5666
      %v5827 = vsel %vm1056, %v5623, %v5668
      %v5828 = vsel %vm1056, %v5624, %v5670
      %v5829 = vsel %vm1056, %v5625, %v5672
      %v5830 = vsel %vm1056, %v5626, %v5674
      %v5831 = vsel %vm1125, %v5823, %v5688
      %v5832 = vsel %vm1125, %v5824, %v5690
      %v5833 = vsel %vm1125, %v5825, %v5692
      %v5834 = vsel %vm1125, %v5826, %v5694
      %v5835 = vsel %vm1125, %v5827, %v5696
      %v5836 = vsel %vm1125, %v5828, %v5698
      %v5837 = vsel %vm1125, %v5829, %v5700
      %v5838 = vsel %vm1125, %v5830, %v5702
      %v5839 = vsel %vm1200, %v5831, %v5716
      %v5840 = vsel %vm1200, %v5832, %v5718
      %v5841 = vsel %vm1200, %v5833, %v5720
      %v5842 = vsel %vm1200, %v5834, %v5722
      %v5843 = vsel %vm1200, %v5835, %v5724
      %v5844 = vsel %vm1200, %v5836, %v5726
      %v5845 = vsel %vm1200, %v5837, %v5728
      %v5846 = vsel %vm1200, %v5838, %v5730
      %v5847 = vsel %vm3994, %v5839, %v5744
      %v5848 = vsel %vm3994, %v5840, %v5746
      %v5849 = vsel %vm3994, %v5841, %v5748
      %v5850 = vsel %vm3994, %v5842, %v5750
      %v5851 = vsel %vm3994, %v5843, %v5752
      %v5852 = vsel %vm3994, %v5844, %v5754
      %v5853 = vsel %vm3994, %v5845, %v5756
      %v5854 = vsel %vm3994, %v5846, %v5758
      %v5855 = vsel %vm4037, %v5847, %v5772
      %v5856 = vsel %vm4037, %v5848, %v5774
      %v5857 = vsel %vm4037, %v5849, %v5776
      %v5858 = vsel %vm4037, %v5850, %v5778
      %v5859 = vsel %vm4037, %v5851, %v5780
      %v5860 = vsel %vm4037, %v5852, %v5782
      %v5861 = vsel %vm4037, %v5853, %v5784
      %v5862 = vsel %vm4037, %v5854, %v5786
      %vm5863 = vcmask 785408
      %v5864 = vsel %vm5863, %v5855, %v5800
      %v5865 = vsel %vm5863, %v5856, %v5802
      %v5866 = vsel %vm5863, %v5857, %v5804
      %v5867 = vsel %vm5863, %v5858, %v5806
      %v5868 = vsel %vm5863, %v5859, %v5808
      %v5869 = vsel %vm5863, %v5860, %v5810
      %v5870 = vsel %vm5863, %v5861, %v5812
      %v5871 = vsel %vm5863, %v5862, %v5814
      %v5872 = vld [vmem:[%s5] sm:$0xff]
      %v5873 = vld [vmem:[%s5 + $0x8] sm:$0xff]
      %v5874 = vld [vmem:[%s5 + $0x10] sm:$0xff]
      %v5875 = vld [vmem:[%s5 + $0x18] sm:$0xff]
      %v5876 = vld [vmem:[%s5 + $0x20] sm:$0xff]
      %v5877 = vld [vmem:[%s5 + $0x28] sm:$0xff]
      %v5878 = vld [vmem:[%s5 + $0x30] sm:$0xff]
      %v5879 = vld [vmem:[%s5 + $0x38] sm:$0xff]
      %v5880 = vld [vmem:[%s5 + $0x40] sm:$0xff]
      %v5881 = vld [vmem:[%s5 + $0x48] sm:$0xff]
      %v5882 = vld [vmem:[%s5 + $0x50] sm:$0xff]
      %v5883 = vld [vmem:[%s5 + $0x58] sm:$0xff]
      %v5884 = vld [vmem:[%s5 + $0x60] sm:$0xff]
      %v5885 = vld [vmem:[%s5 + $0x68] sm:$0xff]
      %vm5886 = vcmask 916480
      %v5888 = vsel %vm5886, %v5864, 0
      %v5891 = vsel %vm5886, %v5865, 0
      %v5894 = vsel %vm5886, %v5866, 0
      %v5897 = vsel %vm5886, %v5867, 0
      %v5900 = vsel %vm5886, %v5868, 0
      %v5903 = vsel %vm5886, %v5869, 0
      %v5906 = vsel %vm5886, %v5870, 0
      %v5909 = vsel %vm5886, %v5871, 0
      %5911 = vmatprep.subr.mxu0 0.0
      %5912 = vmatpush1.msra.mxu0 %v5872
      %5913 = vmatprep.subr.mxu0 0.0
      %5914 = vmatpush1.msra.mxu0 %v5873
      %5915 = vmatprep.subr.mxu0 0.0
      %5916 = vmatpush1.msra.mxu0 %v5874
      %5917 = vmatprep.subr.mxu0 0.0
      %5918 = vmatpush1.msra.mxu0 %v5875
      %5919 = vmatprep.subr.mxu0 0.0
      %5920 = vmatpush1.msra.mxu0 %v5876
      %5921 = vmatprep.subr.mxu0 0.0
      %5922 = vmatpush1.msra.mxu0 %v5877
      %5923 = vmatprep.subr.mxu0 0.0
      %5924 = vmatpush1.msra.mxu0 %v5878
      %5925 = vmatprep.subr.mxu0 0.0
      %5926 = vmatpush1.msra.mxu0 %v5879
      %5927 = vmatprep.subr.mxu0 0.0
      %5928 = vmatpush1.msra.mxu0 %v5880
      %5929 = vmatprep.subr.mxu0 0.0
      %5930 = vmatpush1.msra.mxu0 %v5881
      %5931 = vmatprep.subr.mxu0 0.0
      %5932 = vmatpush1.msra.mxu0 %v5882
      %5933 = vmatprep.subr.mxu0 0.0
      %5934 = vmatpush1.msra.mxu0 %v5883
      %5935 = vmatprep.subr.mxu0 0.0
      %5936 = vmatpush1.msra.mxu0 %v5884
      %5937 = vmatprep.subr.mxu0 0.0
      %5938 = vmatpush1.msra.mxu0 %v5885
      %5939 = vmatprep.subr.mxu0 0.0
      %5940 = vmatpush1.msra.mxu0 0.0
      %5941 = vmatprep.subr.mxu0 0.0
      %5942 = vmatpush1.msra.mxu0 0.0
      %5943 = vmatprep.subr.mxu0 0.0
      %5944 = vmatpush1.msra.mxu0 0.0
      %5945 = vmatprep.subr.mxu0 0.0
      %5946 = vmatpush1.msra.mxu0 0.0
      %5947 = vmatprep.subr.mxu0 0.0
      %5948 = vmatpush1.msra.mxu0 0.0
      %5949 = vmatprep.subr.mxu0 0.0
      %5950 = vmatpush1.msra.mxu0 0.0
      %5951 = vmatprep.subr.mxu0 0.0
      %5952 = vmatpush1.msra.mxu0 0.0
      %5953 = vmatprep.subr.mxu0 0.0
      %5954 = vmatpush1.msra.mxu0 0.0
      %5955 = vmatprep.subr.mxu0 0.0
      %5956 = vmatpush1.msra.mxu0 0.0
      %5957 = vmatprep.subr.mxu0 0.0
      %5958 = vmatpush1.msra.mxu0 0.0
      %5959 = vmatprep.subr.mxu0 0.0
      %5960 = vmatpush1.msra.mxu0 0.0
      %5961 = vmatprep.subr.mxu0 0.0
      %5962 = vmatpush1.msra.mxu0 0.0
      %5963 = vmatprep.subr.mxu0 0.0
      %5964 = vmatpush1.msra.mxu0 0.0
      %5965 = vmatprep.subr.mxu0 0.0
      %5966 = vmatpush1.msra.mxu0 0.0
      %5967 = vmatprep.subr.mxu0 0.0
      %5968 = vmatpush1.msra.mxu0 0.0
      %5969 = vmatprep.subr.mxu0 0.0
      %5970 = vmatpush1.msra.mxu0 0.0
      %5971 = vmatprep.subr.mxu0 0.0
      %5972 = vmatpush1.msra.mxu0 0.0
      %5973 = vmatprep.subr.mxu0 0.0
      %5974 = vmatpush1.msra.mxu0 0.0
      %5975 = vmatprep.mubr.f32.mxu0 0.0
      %5976 = vmatmul.mubr.f32.gmra.mrb[0].mxu0 %v5888
      %v5977 = vpop.f32.mrb[0].mxu0
      %v5978 = vadd.f32 0.0, %v5977
      %v5979 = vpop.f32.mrb[0].mxu0
      %5980 = vmatprep.mubr.f32.mxu0 0.0
      %5981 = vmatmul.mubr.f32.gmra.mrb[0].mxu0 %v5891
      %v5982 = vpop.f32.mrb[0].mxu0
      %v5983 = vadd.f32 0.0, %v5982
      %v5984 = vpop.f32.mrb[0].mxu0
      %5985 = vmatprep.mubr.f32.mxu0 0.0
      %5986 = vmatmul.mubr.f32.gmra.mrb[0].mxu0 %v5894
      %v5987 = vpop.f32.mrb[0].mxu0
      %v5988 = vadd.f32 0.0, %v5987
      %v5989 = vpop.f32.mrb[0].mxu0
      %5990 = vmatprep.mubr.f32.mxu0 0.0
      %5991 = vmatmul.mubr.f32.gmra.mrb[0].mxu0 %v5897
      %v5992 = vpop.f32.mrb[0].mxu0
      %v5993 = vadd.f32 0.0, %v5992
      %v5994 = vpop.f32.mrb[0].mxu0
      %5995 = vmatprep.mubr.f32.mxu0 0.0
      %5996 = vmatmul.mubr.f32.gmra.mrb[0].mxu0 %v5900
      %v5997 = vpop.f32.mrb[0].mxu0
      %v5998 = vadd.f32 0.0, %v5997
      %v5999 = vpop.f32.mrb[0].mxu0
      %6000 = vmatprep.mubr.f32.mxu0 0.0
      %6001 = vmatmul.mubr.f32.gmra.mrb[0].mxu0 %v5903
      %v6002 = vpop.f32.mrb[0].mxu0
      %v6003 = vadd.f32 0.0, %v6002
      %v6004 = vpop.f32.mrb[0].mxu0
      %6005 = vmatprep.mubr.f32.mxu0 0.0
      %6006 = vmatmul.mubr.f32.gmra.mrb[0].mxu0 %v5906
      %v6007 = vpop.f32.mrb[0].mxu0
      %v6008 = vadd.f32 0.0, %v6007
      %v6009 = vpop.f32.mrb[0].mxu0
      %6010 = vmatprep.mubr.f32.mxu0 0.0
      %6011 = vmatmul.mubr.f32.gmra.mrb[0].mxu0 %v5909
      %v6012 = vpop.f32.mrb[0].mxu0
      %v6013 = vadd.f32 0.0, %v6012
      %v6014 = vpop.f32.mrb[0].mxu0
      %6015 = vdwg.mxu0
      %v6016 = vld [vmem:[%s6] sm:$0x1]
      %v6025 = vrot.slane %v5978, 7
      %v6026 = vrot.slane %v5983, 7
      %v6027 = vsel %vm1879, %v6025, %v6026
      %v6028 = vrot.slane %v5988, 7
      %v6029 = vsel %vm1879, %v6026, %v6028
      %v6030 = vrot.slane %v5993, 7
      %v6031 = vsel %vm1879, %v6028, %v6030
      %v6032 = vrot.slane %v5998, 7
      %v6033 = vsel %vm1879, %v6030, %v6032
      %v6034 = vrot.slane %v6003, 7
      %v6035 = vsel %vm1879, %v6032, %v6034
      %v6036 = vrot.slane %v6008, 7
      %v6037 = vsel %vm1879, %v6034, %v6036
      %v6038 = vrot.slane %v6013, 7
      %v6039 = vsel %vm1879, %v6036, %v6038
      %v6048 = vsel %vm1879, 0.0, %v6025
      %6049 = vrot.lane.b32.xlu0 %v5978, 112
      %v6050 = vpop.permute.xlu0 %6049
      %6051 = vrot.lane.b32.xlu0 %v5983, 112
      %v6052 = vpop.permute.xlu0 %6051
      %6053 = vrot.lane.b32.xlu0 %v5988, 112
      %v6054 = vpop.permute.xlu0 %6053
      %6055 = vrot.lane.b32.xlu0 %v5993, 112
      %v6056 = vpop.permute.xlu0 %6055
      %6057 = vrot.lane.b32.xlu0 %v5998, 112
      %v6058 = vpop.permute.xlu0 %6057
      %6059 = vrot.lane.b32.xlu0 %v6003, 112
      %v6060 = vpop.permute.xlu0 %6059
      %6061 = vrot.lane.b32.xlu0 %v6008, 112
      %v6062 = vpop.permute.xlu0 %6061
      %6063 = vrot.lane.b32.xlu0 %v6013, 112
      %v6064 = vpop.permute.xlu0 %6063
      %v6073 = vadd.f32 %v6048, %v6050
      %v6074 = vadd.f32 %v6027, %v6052
      %v6075 = vadd.f32 %v6029, %v6054
      %v6076 = vadd.f32 %v6031, %v6056
      %v6077 = vadd.f32 %v6033, %v6058
      %v6078 = vadd.f32 %v6035, %v6060
      %v6079 = vadd.f32 %v6037, %v6062
      %v6080 = vadd.f32 %v6039, %v6064
      %v6089 = vrot.slane %v6073, 7
      %v6090 = vrot.slane %v6074, 7
      %v6091 = vsel %vm1879, %v6089, %v6090
      %v6092 = vrot.slane %v6075, 7
      %v6093 = vsel %vm1879, %v6090, %v6092
      %v6094 = vrot.slane %v6076, 7
      %v6095 = vsel %vm1879, %v6092, %v6094
      %v6096 = vrot.slane %v6077, 7
      %v6097 = vsel %vm1879, %v6094, %v6096
      %v6098 = vrot.slane %v6078, 7
      %v6099 = vsel %vm1879, %v6096, %v6098
      %v6100 = vrot.slane %v6079, 7
      %v6101 = vsel %vm1879, %v6098, %v6100
      %v6102 = vrot.slane %v6080, 7
      %v6103 = vsel %vm1879, %v6100, %v6102
      %v6112 = vsel %vm1879, 0.0, %v6089
      %6113 = vrot.lane.b32.xlu0 %v5978, 96
      %v6114 = vpop.permute.xlu0 %6113
      %6115 = vrot.lane.b32.xlu0 %v5983, 96
      %v6116 = vpop.permute.xlu0 %6115
      %6117 = vrot.lane.b32.xlu0 %v5988, 96
      %v6118 = vpop.permute.xlu0 %6117
      %6119 = vrot.lane.b32.xlu0 %v5993, 96
      %v6120 = vpop.permute.xlu0 %6119
      %6121 = vrot.lane.b32.xlu0 %v5998, 96
      %v6122 = vpop.permute.xlu0 %6121
      %6123 = vrot.lane.b32.xlu0 %v6003, 96
      %v6124 = vpop.permute.xlu0 %6123
      %6125 = vrot.lane.b32.xlu0 %v6008, 96
      %v6126 = vpop.permute.xlu0 %6125
      %6127 = vrot.lane.b32.xlu0 %v6013, 96
      %v6128 = vpop.permute.xlu0 %6127
      %v6137 = vadd.f32 %v6112, %v6114
      %v6138 = vadd.f32 %v6091, %v6116
      %v6139 = vadd.f32 %v6093, %v6118
      %v6140 = vadd.f32 %v6095, %v6120
      %v6141 = vadd.f32 %v6097, %v6122
      %v6142 = vadd.f32 %v6099, %v6124
      %v6143 = vadd.f32 %v6101, %v6126
      %v6144 = vadd.f32 %v6103, %v6128
      %v6153 = vrot.slane %v6137, 7
      %v6154 = vrot.slane %v6138, 7
      %v6155 = vsel %vm1879, %v6153, %v6154
      %v6156 = vrot.slane %v6139, 7
      %v6157 = vsel %vm1879, %v6154, %v6156
      %v6158 = vrot.slane %v6140, 7
      %v6159 = vsel %vm1879, %v6156, %v6158
      %v6160 = vrot.slane %v6141, 7
      %v6161 = vsel %vm1879, %v6158, %v6160
      %v6162 = vrot.slane %v6142, 7
      %v6163 = vsel %vm1879, %v6160, %v6162
      %v6164 = vrot.slane %v6143, 7
      %v6165 = vsel %vm1879, %v6162, %v6164
      %v6166 = vrot.slane %v6144, 7
      %v6167 = vsel %vm1879, %v6164, %v6166
      %v6176 = vsel %vm1879, 0.0, %v6153
      %6177 = vrot.lane.b32.xlu0 %v5978, 80
      %v6178 = vpop.permute.xlu0 %6177
      %6179 = vrot.lane.b32.xlu0 %v5983, 80
      %v6180 = vpop.permute.xlu0 %6179
      %6181 = vrot.lane.b32.xlu0 %v5988, 80
      %v6182 = vpop.permute.xlu0 %6181
      %6183 = vrot.lane.b32.xlu0 %v5993, 80
      %v6184 = vpop.permute.xlu0 %6183
      %6185 = vrot.lane.b32.xlu0 %v5998, 80
      %v6186 = vpop.permute.xlu0 %6185
      %6187 = vrot.lane.b32.xlu0 %v6003, 80
      %v6188 = vpop.permute.xlu0 %6187
      %6189 = vrot.lane.b32.xlu0 %v6008, 80
      %v6190 = vpop.permute.xlu0 %6189
      %6191 = vrot.lane.b32.xlu0 %v6013, 80
      %v6192 = vpop.permute.xlu0 %6191
      %v6201 = vadd.f32 %v6176, %v6178
      %v6202 = vadd.f32 %v6155, %v6180
      %v6203 = vadd.f32 %v6157, %v6182
      %v6204 = vadd.f32 %v6159, %v6184
      %v6205 = vadd.f32 %v6161, %v6186
      %v6206 = vadd.f32 %v6163, %v6188
      %v6207 = vadd.f32 %v6165, %v6190
      %v6208 = vadd.f32 %v6167, %v6192
      %v6217 = vrot.slane %v6201, 7
      %v6218 = vrot.slane %v6202, 7
      %v6219 = vsel %vm1879, %v6217, %v6218
      %v6220 = vrot.slane %v6203, 7
      %v6221 = vsel %vm1879, %v6218, %v6220
      %v6222 = vrot.slane %v6204, 7
      %v6223 = vsel %vm1879, %v6220, %v6222
      %v6224 = vrot.slane %v6205, 7
      %v6225 = vsel %vm1879, %v6222, %v6224
      %v6226 = vrot.slane %v6206, 7
      %v6227 = vsel %vm1879, %v6224, %v6226
      %v6228 = vrot.slane %v6207, 7
      %v6229 = vsel %vm1879, %v6226, %v6228
      %v6230 = vrot.slane %v6208, 7
      %v6231 = vsel %vm1879, %v6228, %v6230
      %v6240 = vsel %vm1879, 0.0, %v6217
      %6241 = vrot.lane.b32.xlu0 %v5978, 64
      %v6242 = vpop.permute.xlu0 %6241
      %6243 = vrot.lane.b32.xlu0 %v5983, 64
      %v6244 = vpop.permute.xlu0 %6243
      %6245 = vrot.lane.b32.xlu0 %v5988, 64
      %v6246 = vpop.permute.xlu0 %6245
      %6247 = vrot.lane.b32.xlu0 %v5993, 64
      %v6248 = vpop.permute.xlu0 %6247
      %6249 = vrot.lane.b32.xlu0 %v5998, 64
      %v6250 = vpop.permute.xlu0 %6249
      %6251 = vrot.lane.b32.xlu0 %v6003, 64
      %v6252 = vpop.permute.xlu0 %6251
      %6253 = vrot.lane.b32.xlu0 %v6008, 64
      %v6254 = vpop.permute.xlu0 %6253
      %6255 = vrot.lane.b32.xlu0 %v6013, 64
      %v6256 = vpop.permute.xlu0 %6255
      %v6265 = vadd.f32 %v6240, %v6242
      %v6266 = vadd.f32 %v6219, %v6244
      %v6267 = vadd.f32 %v6221, %v6246
      %v6268 = vadd.f32 %v6223, %v6248
      %v6269 = vadd.f32 %v6225, %v6250
      %v6270 = vadd.f32 %v6227, %v6252
      %v6271 = vadd.f32 %v6229, %v6254
      %v6272 = vadd.f32 %v6231, %v6256
      %v6281 = vrot.slane %v6265, 7
      %v6282 = vrot.slane %v6266, 7
      %v6283 = vsel %vm1879, %v6281, %v6282
      %v6284 = vrot.slane %v6267, 7
      %v6285 = vsel %vm1879, %v6282, %v6284
      %v6286 = vrot.slane %v6268, 7
      %v6287 = vsel %vm1879, %v6284, %v6286
      %v6288 = vrot.slane %v6269, 7
      %v6289 = vsel %vm1879, %v6286, %v6288
      %v6290 = vrot.slane %v6270, 7
      %v6291 = vsel %vm1879, %v6288, %v6290
      %v6292 = vrot.slane %v6271, 7
      %v6293 = vsel %vm1879, %v6290, %v6292
      %v6294 = vrot.slane %v6272, 7
      %v6295 = vsel %vm1879, %v6292, %v6294
      %v6304 = vsel %vm1879, 0.0, %v6281
      %6305 = vrot.lane.b32.xlu0 %v5978, 48
      %v6306 = vpop.permute.xlu0 %6305
      %6307 = vrot.lane.b32.xlu0 %v5983, 48
      %v6308 = vpop.permute.xlu0 %6307
      %6309 = vrot.lane.b32.xlu0 %v5988, 48
      %v6310 = vpop.permute.xlu0 %6309
      %6311 = vrot.lane.b32.xlu0 %v5993, 48
      %v6312 = vpop.permute.xlu0 %6311
      %6313 = vrot.lane.b32.xlu0 %v5998, 48
      %v6314 = vpop.permute.xlu0 %6313
      %6315 = vrot.lane.b32.xlu0 %v6003, 48
      %v6316 = vpop.permute.xlu0 %6315
      %6317 = vrot.lane.b32.xlu0 %v6008, 48
      %v6318 = vpop.permute.xlu0 %6317
      %6319 = vrot.lane.b32.xlu0 %v6013, 48
      %v6320 = vpop.permute.xlu0 %6319
      %v6329 = vadd.f32 %v6304, %v6306
      %v6330 = vadd.f32 %v6283, %v6308
      %v6331 = vadd.f32 %v6285, %v6310
      %v6332 = vadd.f32 %v6287, %v6312
      %v6333 = vadd.f32 %v6289, %v6314
      %v6334 = vadd.f32 %v6291, %v6316
      %v6335 = vadd.f32 %v6293, %v6318
      %v6336 = vadd.f32 %v6295, %v6320
      %v6345 = vrot.slane %v6329, 7
      %v6346 = vrot.slane %v6330, 7
      %v6347 = vsel %vm1879, %v6345, %v6346
      %v6348 = vrot.slane %v6331, 7
      %v6349 = vsel %vm1879, %v6346, %v6348
      %v6350 = vrot.slane %v6332, 7
      %v6351 = vsel %vm1879, %v6348, %v6350
      %v6352 = vrot.slane %v6333, 7
      %v6353 = vsel %vm1879, %v6350, %v6352
      %v6354 = vrot.slane %v6334, 7
      %v6355 = vsel %vm1879, %v6352, %v6354
      %v6356 = vrot.slane %v6335, 7
      %v6357 = vsel %vm1879, %v6354, %v6356
      %v6358 = vrot.slane %v6336, 7
      %v6359 = vsel %vm1879, %v6356, %v6358
      %v6368 = vsel %vm1879, 0.0, %v6345
      %6369 = vrot.lane.b32.xlu0 %v5978, 32
      %v6370 = vpop.permute.xlu0 %6369
      %6371 = vrot.lane.b32.xlu0 %v5983, 32
      %v6372 = vpop.permute.xlu0 %6371
      %6373 = vrot.lane.b32.xlu0 %v5988, 32
      %v6374 = vpop.permute.xlu0 %6373
      %6375 = vrot.lane.b32.xlu0 %v5993, 32
      %v6376 = vpop.permute.xlu0 %6375
      %6377 = vrot.lane.b32.xlu0 %v5998, 32
      %v6378 = vpop.permute.xlu0 %6377
      %6379 = vrot.lane.b32.xlu0 %v6003, 32
      %v6380 = vpop.permute.xlu0 %6379
      %6381 = vrot.lane.b32.xlu0 %v6008, 32
      %v6382 = vpop.permute.xlu0 %6381
      %6383 = vrot.lane.b32.xlu0 %v6013, 32
      %v6384 = vpop.permute.xlu0 %6383
      %v6393 = vadd.f32 %v6368, %v6370
      %v6394 = vadd.f32 %v6347, %v6372
      %v6395 = vadd.f32 %v6349, %v6374
      %v6396 = vadd.f32 %v6351, %v6376
      %v6397 = vadd.f32 %v6353, %v6378
      %v6398 = vadd.f32 %v6355, %v6380
      %v6399 = vadd.f32 %v6357, %v6382
      %v6400 = vadd.f32 %v6359, %v6384
      %v6402 = vlaneseq
      %v6403 = vshrl.u32 %v6402, 7
      %v6404 = vsub.s32 0, %v6403
      %v6405 = vrot.slane %v6016, %v6404
      %v6407 = vadd.f32 %v6393, %v6405
      %v6408 = vadd.f32 %v6394, %v6405
      %v6409 = vadd.f32 %v6395, %v6405
      %v6410 = vadd.f32 %v6396, %v6405
      %v6411 = vadd.f32 %v6397, %v6405
      %v6412 = vadd.f32 %v6398, %v6405
      %v6413 = vadd.f32 %v6399, %v6405
      %v6414 = vadd.f32 %v6400, %v6405
      %6415 = vst.msk [vmem:[%s305] sm:$0xff] %vm1056, %v6407
      %6416 = vst.msk [vmem:[%s305 + $0x8] sm:$0xff] %vm1056, %v6408
      %6417 = vst.msk [vmem:[%s305 + $0x10] sm:$0xff] %vm1056, %v6409
      %6418 = vst.msk [vmem:[%s305 + $0x18] sm:$0xff] %vm1056, %v6410
      %6419 = vst.msk [vmem:[%s305 + $0x20] sm:$0xff] %vm1056, %v6411
      %6420 = vst.msk [vmem:[%s305 + $0x28] sm:$0xff] %vm1056, %v6412
      %6421 = vst.msk [vmem:[%s305 + $0x30] sm:$0xff] %vm1056, %v6413
      %6422 = vst.msk [vmem:[%s305 + $0x38] sm:$0xff] %vm1056, %v6414
      %p6423 = scmp.lt.s32.totalorder %s19, 1
      %s6424 = scalar_select %p6423, %s19, 1
      %s6425 = smul.addr %s6424, 8
      %s6426 = smul.addr %s6425, 8
      %s6427 = scalar_lea.vmem %s8, %s6426
      // Predicated region
      $region53: #{model_forward.1} parent=51 // pred_check
        %p6428 = pneg %p210
      $region54: #{model_forward.1} parent=51 // pred_check_branch
        %6430 = sbr.rel (%p6428) target = $region56
      $region55: #{model_forward.1} parent=51 // pred_region
        _
      $region56: #{model_forward.1} parent=51 // pred_fallthru
        _
    $region52: #{model_forward.1} parent=5 // pred_fallthru
      _
    %p6431 = scmp.le.s32.totalorder 2, %s14
    // Predicated region
    $region57: #{model_forward.1} parent=5 // pred_check
      %p6432 = pneg %p6431
    $region58: #{model_forward.1} parent=5 // pred_check_branch
      %6434 = sbr.rel (%p6432) target = $region60
    $region59: #{model_forward.1} parent=5 // pred_region
      %s6435 = ssub.s32 %s14, 2
      // Predicated region
      $region61: #{model_forward.1} parent=59 // pred_check
        %p6436 = pneg %p216
      $region62: #{model_forward.1} parent=59 // pred_check_branch
        %6438 = sbr.rel (%p6436) target = $region64
      $region63: #{model_forward.1} parent=59 // pred_region
        %p6439 = scmp.lt.s32.totalorder %s20, 1
        %s6440 = scalar_select %p6439, %s20, 1
        %s6441 = smul.addr %s6440, 8
        %s6442 = smul.addr %s6441, 8
        %s6443 = scalar_lea.vmem %s8, %s6442
      $region64: #{model_forward.1} parent=59 // pred_fallthru
        _
    $region60: #{model_forward.1} parent=5 // pred_fallthru
      _
  $region6: #{model_forward.1} parent=0 // loop_footer
    %s18 = sadd.s32 1, %s14
  $region7: #{model_forward.1} parent=0 // loop_footer_branch
    %13 = sbr.rel target = $region3
  $region8: #{model_forward.1} parent=0 // loop_exit
    _

</llo_original>
